<compile_context>
chip_gen: v6e
topology: v6e:2x2x1
jax: 0.10.0
libtpu: 0.0.40
codegen_flags: <defaults>
</compile_context>

<pallas_src>
import functools

import jax
import jax.numpy as jnp
from jax.experimental import pallas as pl
from jax.experimental.pallas import tpu as pltpu


def _round_up(v, m):
    return (v + m - 1) // m * m


def _pick_tile(total, cap):
    """Largest multiple of 128 that divides `total` and is <= cap."""
    t = min(total, max(128, cap))
    t -= t % 128
    while total % t:
        t -= 128
    return max(t, 128)


def _row_l1_normalize(x):
    # Matches F.normalize(x, p=1, dim=1) (eps=1e-12 clamp) + zeroing inf entries.
    denom = jnp.maximum(jnp.sum(jnp.abs(x), axis=1, keepdims=True), 1e-12)
    y = x / denom
    return jnp.where(jnp.isinf(y), 0.0, y)


def resblock_kernel(a_ref, xn_ref, xres_ref, wt_ref, b_ref, ts_ref, o_ref):
    k = pl.program_id(1)
    nk = pl.num_programs(1)
    tile_k = a_ref.shape[1]
    np_full = xn_ref.shape[0]

    @pl.when(k == 0)
    def _init():
        o_ref[...] = jnp.zeros_like(o_ref)

    # xn is fully VMEM-resident; take the k-slab in-kernel (no per-(i,k) DMA).
    if tile_k == np_full:
        xn_blk = xn_ref[...]
    else:
        start = pl.multiple_of(k * tile_k, 128)
        xn_blk = xn_ref[pl.ds(start, tile_k), :]

    # Partial graph propagation, accumulated directly into the f32 output block
    # (its block index (i, 0) is constant across k, so it stays resident).
    o_ref[...] += jnp.dot(a_ref[...], xn_blk, preferred_element_type=jnp.float32)

    @pl.when(k == nk - 1)
    def _epilogue():
        f = o_ref[...]
        # time_varying Linear on the bf16 MXU path; accumulate in f32.
        f = jnp.dot(f.astype(jnp.bfloat16), wt_ref[...],
                    preferred_element_type=jnp.float32) + b_ref[...]
        # dropout(p=0) -> identity
        # TODO(synk): stochastic dropout for p>0 would use pltpu.prng_* in-kernel.
        # row_normalization(f): per-row L1 norm, eps clamp, zero any infs.
        denom = jnp.maximum(jnp.sum(jnp.abs(f), axis=1, keepdims=True), 1e-12)
        f = f * pl.reciprocal(denom, approx=True)
        f = jnp.where(jnp.isinf(f), 0.0, f)
        # relu, then Euler residual with the SMEM scalar time step.
        f = jnp.maximum(f, 0.0)
        o_ref[...] = xres_ref[...] + f * ts_ref[0]


def prepare_adjacency(A):
    """Pad + cast the static adjacency ONCE, outside the per-step jit.

    A is 0/1 so it is exact in bf16; padding N to a multiple of 128 keeps all
    MXU tiles / DMAs lane-dense without tying the pad to the row tile size.
    """
    N = A.shape[0]
    Np = _round_up(N, 128)
    return jnp.zeros((Np, Np), jnp.bfloat16).at[:N, :N].set(A.astype(jnp.bfloat16))


@functools.partial(jax.jit, static_argnames=("row_tile_cap", "k_tile_cap"))
def resblock_forward(x, a_p, W, b, time_step, *, row_tile_cap=512, k_tile_cap=4096):
    N, H = x.shape
    Np = a_p.shape[0]
    assert Np % 128 == 0 and Np >= N, "use prepare_adjacency() to build a_p"
    Hp = max(128, _round_up(H, 128))            # lane-dense feature axis

    # Tile choice: both tiles divide Np exactly (no pad inflation).  Caps keep
    # 2x A buffers + resident xn well under the 48 MiB scoped-VMEM budget set
    # below (v7x-safe); raise caps + vmem_limit_bytes on v5e/v6e (128 MiB VMEM).
    tile_i = _pick_tile(Np, row_tile_cap)       # output-row tile ("parallel")
    tile_k = _pick_tile(Np, k_tile_cap)         # reduction tile ("arbitrary")

    # Hoisted first row_normalization: one fused XLA pass over x.
    xn = _row_l1_normalize(x)

    # Small per-step pads (O(N*H), negligible next to A).  xn goes to bf16 for
    # the MXU; shortcut / bias stay f32; W^T is pre-transposed + bf16.
    xn_p = jnp.zeros((Np, Hp), jnp.bfloat16).at[:N, :H].set(xn.astype(jnp.bfloat16))
    x_p = jnp.zeros((Np, Hp), jnp.float32).at[:N, :H].set(x.astype(jnp.float32))
    wt_p = jnp.zeros((Hp, Hp), jnp.bfloat16).at[:H, :H].set(W.astype(jnp.bfloat16).T)
    b_p = jnp.zeros((1, Hp), jnp.float32).at[0, :H].set(b.astype(jnp.float32))
    ts = time_step.reshape((1,)).astype(jnp.float32)

    grid = (Np // tile_i, Np // tile_k)   # (i: output-row tiles, k: reduction last)

    out = pl.pallas_call(
        resblock_kernel,
        out_shape=jax.ShapeDtypeStruct((Np, Hp), jnp.float32),
        grid=grid,
        in_specs=[
            pl.BlockSpec((tile_i, tile_k), lambda i, k: (i, k)),   # A tile (bf16)
            pl.BlockSpec((Np, Hp), lambda i, k: (0, 0)),           # xn, VMEM-resident
            pl.BlockSpec((tile_i, Hp), lambda i, k: (i, 0)),       # shortcut, i-tile
            pl.BlockSpec((Hp, Hp), lambda i, k: (0, 0)),           # W^T (bf16, resident)
            pl.BlockSpec((1, Hp), lambda i, k: (0, 0)),            # bias row
            pl.BlockSpec(memory_space=pltpu.MemorySpace.SMEM),     # time_step scalar
        ],
        out_specs=pl.BlockSpec((tile_i, Hp), lambda i, k: (i, 0)), # also accumulator
        compiler_params=pltpu.CompilerParams(
            dimension_semantics=("parallel", "arbitrary"),
            # <= ~48 MiB so the config also fits v7x (64 MiB physical VMEM);
            # on v5e/v6e (128 MiB) raise this together with the tile caps.
            vmem_limit_bytes=48 * 1024 * 1024,
        ),
    )(a_p, xn_p, x_p, wt_p, b_p, ts)

    return out[:N, :H]


def _reference(x, A, W, b, time_step):
    # Pure-JAX reference of the PyTorch forward
    # (normalize=True, time_varying=True, dropout=0, Euler=True).
    def rn(v):
        d = jnp.maximum(jnp.sum(jnp.abs(v), axis=1, keepdims=True), 1e-12)
        y = v / d
        return jnp.where(jnp.isinf(y), 0.0, y)

    shortcut = x
    xn = rn(x)
    f = A @ xn
    f = f @ W.T + b
    f = rn(f)
    f = jnp.maximum(f, 0.0)
    return shortcut + f * time_step[0]


if __name__ == "__main__":
    N = 500   # graph nodes  (adjacency padded to 512 once, up front)
    H = 32    # hidden_size  (padded to 128 lanes inside the wrapper)

    key = jax.random.PRNGKey(0)
    kx, ka, kw, kb, kt = jax.random.split(key, 5)

    # node features
    x = jax.random.normal(kx, (N, H), dtype=jnp.float32)

    # dense 0/1 adjacency standing in for the sparse matrix A
    A = (jax.random.uniform(ka, (N, N)) > 0.95).astype(jnp.float32)

    # nn.Linear(hidden, hidden) params (PyTorch default uniform range)
    bound = 1.0 / jnp.sqrt(H)
    W = jax.random.uniform(kw, (H, H), minval=-bound, maxval=bound, dtype=jnp.float32)
    b = jax.random.uniform(kb, (H,), minval=-bound, maxval=bound, dtype=jnp.float32)

    # Euler time_step ~ U(0, 1)
    time_step = jax.random.uniform(kt, (1,), dtype=jnp.float32)

    # A is static across the ODE loop: pad + cast it exactly once.
    a_p = jax.block_until_ready(prepare_adjacency(A))

    out = resblock_forward(x, a_p, W, b, time_step)
    out = jax.block_until_ready(out)

    ref = _reference(x, A, W, b, time_step)
    assert out.shape == (N, H)
    # Tolerance covers bf16 matmul operands (xn and the epilogue Linear) plus
    # the EUP approx reciprocal vs the exact-f32 reference (observed ~1e-3).
    assert jnp.allclose(out, ref, atol=2e-2, rtol=2e-2), "mismatch vs reference"

    print("KERNEL_OK")
</pallas_src>

<mosaic_0001>
module attributes {stable_mosaic.version = 11 : i64} {
  func.func @resblock_kernel(%arg0: i32, %arg1: i32, %arg2: memref<512x512xbf16, #tpu.memory_space<vmem>>, %arg3: memref<512x128xbf16, #tpu.memory_space<vmem>>, %arg4: memref<512x128xf32, #tpu.memory_space<vmem>>, %arg5: memref<128x128xbf16, #tpu.memory_space<vmem>>, %arg6: memref<1x128xf32, #tpu.memory_space<vmem>>, %arg7: memref<1xf32, #tpu.memory_space<smem>>, %arg8: memref<512x128xf32, #tpu.memory_space<vmem>>) attributes {dimension_semantics = [#tpu.dimension_semantics<parallel>, #tpu.dimension_semantics<arbitrary>], iteration_bounds = array<i64: 1, 1>, scalar_prefetch = 0 : i64, scratch_operands = 0 : i64, tpu.core_type = #tpu.core_type<tc>, window_params = [{transform_indices = @transform_0, window_bounds = array<i64: 512, 512>}, {pipeline_mode = #tpu.pipeline_mode<synchronous>, transform_indices = @transform_1, window_bounds = array<i64: 512, 128>}, {transform_indices = @transform_2, window_bounds = array<i64: 512, 128>}, {pipeline_mode = #tpu.pipeline_mode<synchronous>, transform_indices = @transform_3, window_bounds = array<i64: 128, 128>}, {pipeline_mode = #tpu.pipeline_mode<synchronous>, transform_indices = @transform_4, window_bounds = array<i64: 1, 128>}, {transform_indices = @transform_5, window_bounds = array<i64: 1>}, {transform_indices = @transform_6, window_bounds = array<i64: 512, 128>}]} {
    %c0_i32 = arith.constant 0 : i32
    %0 = arith.cmpi eq, %arg1, %c0_i32 : i32
    %1 = arith.extui %0 : i1 to i32
    %c0_i32_0 = arith.constant 0 : i32
    %2 = arith.cmpi ne, %1, %c0_i32_0 : i32
    scf.if %2 {
      %cst_10 = arith.constant 0.000000e+00 : f32
      %12 = vector.broadcast %cst_10 : f32 to vector<512x128xf32>
      %c0_11 = arith.constant 0 : index
      %c0_12 = arith.constant 0 : index
      %13 = vector.load %arg8[%c0_11, %c0_12] : memref<512x128xf32, #tpu.memory_space<vmem>>, vector<512x128xf32>
      tpu.vector_store %arg8[%c0_11, %c0_12], %12 {strides = array<i32>} : memref<512x128xf32, #tpu.memory_space<vmem>>, vector<512x128xf32>,
    } else {
    }
    %c0 = arith.constant 0 : index
    %c0_1 = arith.constant 0 : index
    %3 = vector.load %arg3[%c0, %c0_1] : memref<512x128xbf16, #tpu.memory_space<vmem>>, vector<512x128xbf16>
    %c0_2 = arith.constant 0 : index
    %c0_3 = arith.constant 0 : index
    %4 = vector.load %arg8[%c0_2, %c0_3] : memref<512x128xf32, #tpu.memory_space<vmem>>, vector<512x128xf32>
    %c0_4 = arith.constant 0 : index
    %c0_5 = arith.constant 0 : index
    %5 = vector.load %arg2[%c0_4, %c0_5] : memref<512x512xbf16, #tpu.memory_space<vmem>>, vector<512x512xbf16>
    %cst = arith.constant dense<0.000000e+00> : vector<512x128xf32>
    %6 = tpu.matmul %5, %3, %cst {dimension_numbers = #tpu.dot_dimension_numbers<[1], [0], [0], [1], [0, 0, 1, 1], [], []>} : vector<512x512xbf16>, vector<512x128xbf16>, vector<512x128xf32> -> vector<512x128xf32>
    %7 = arith.addf %4, %6 : vector<512x128xf32>
    %c0_6 = arith.constant 0 : index
    %c0_7 = arith.constant 0 : index
    %8 = vector.load %arg8[%c0_6, %c0_7] : memref<512x128xf32, #tpu.memory_space<vmem>>, vector<512x128xf32>
    tpu.vector_store %arg8[%c0_6, %c0_7], %7 {strides = array<i32>} : memref<512x128xf32, #tpu.memory_space<vmem>>, vector<512x128xf32>,
    %c0_i32_8 = arith.constant 0 : i32
    %9 = arith.cmpi eq, %arg1, %c0_i32_8 : i32
    %10 = arith.extui %9 : i1 to i32
    %c0_i32_9 = arith.constant 0 : i32
    %11 = arith.cmpi ne, %10, %c0_i32_9 : i32
    scf.if %11 {
      %c0_10 = arith.constant 0 : index
      %c0_11 = arith.constant 0 : index
      %12 = vector.load %arg8[%c0_10, %c0_11] : memref<512x128xf32, #tpu.memory_space<vmem>>, vector<512x128xf32>
      %13 = arith.truncf %12 : vector<512x128xf32> to vector<512x128xbf16>
      %c0_12 = arith.constant 0 : index
      %c0_13 = arith.constant 0 : index
      %14 = vector.load %arg5[%c0_12, %c0_13] : memref<128x128xbf16, #tpu.memory_space<vmem>>, vector<128x128xbf16>
      %cst_14 = arith.constant dense<0.000000e+00> : vector<512x128xf32>
      %15 = tpu.matmul %13, %14, %cst_14 {dimension_numbers = #tpu.dot_dimension_numbers<[1], [0], [0], [1], [0, 0, 1, 1], [], []>} : vector<512x128xbf16>, vector<128x128xbf16>, vector<512x128xf32> -> vector<512x128xf32>
      %c0_15 = arith.constant 0 : index
      %c0_16 = arith.constant 0 : index
      %16 = vector.load %arg6[%c0_15, %c0_16] : memref<1x128xf32, #tpu.memory_space<vmem>>, vector<1x128xf32>
      %17 = vector.broadcast %16 : vector<1x128xf32> to vector<512x128xf32>
      %18 = arith.addf %15, %17 : vector<512x128xf32>
      %19 = math.absf %18 : vector<512x128xf32>
      %cst_17 = arith.constant dense<0.000000e+00> : vector<512xf32>
      %20 = vector.multi_reduction <add>, %19, %cst_17 [1] : vector<512x128xf32> to vector<512xf32>
      %21 = vector.shape_cast %20 : vector<512xf32> to vector<512x1xf32>
      %cst_18 = arith.constant 9.99999996E-13 : f32
      %22 = vector.broadcast %cst_18 : f32 to vector<512x1xf32>
      %23 = arith.maximumf %21, %22 : vector<512x1xf32>
      %24 = tpu.reciprocal %23 {approx = true} : vector<512x1xf32> -> vector<512x1xf32>
      %25 = vector.broadcast %24 : vector<512x1xf32> to vector<512x128xf32>
      %26 = arith.mulf %18, %25 : vector<512x128xf32>
      %27 = math.absf %26 : vector<512x128xf32>
      %cst_19 = arith.constant 0x7F800000 : f32
      %28 = vector.broadcast %cst_19 : f32 to vector<512x128xf32>
      %29 = arith.cmpf oeq, %27, %28 : vector<512x128xf32>
      %cst_20 = arith.constant 0.000000e+00 : f32
      %30 = vector.broadcast %cst_20 : f32 to vector<512x128xf32>
      %31 = arith.select %29, %30, %26 : vector<512x128xi1>, vector<512x128xf32>
      %cst_21 = arith.constant 0.000000e+00 : f32
      %32 = vector.broadcast %cst_21 : f32 to vector<512x128xf32>
      %33 = arith.maximumf %31, %32 : vector<512x128xf32>
      %c0_22 = arith.constant 0 : index
      %c0_23 = arith.constant 0 : index
      %34 = vector.load %arg4[%c0_22, %c0_23] : memref<512x128xf32, #tpu.memory_space<vmem>>, vector<512x128xf32>
      %c0_24 = arith.constant 0 : index
      %35 = memref.load %arg7[%c0_24] : memref<1xf32, #tpu.memory_space<smem>>
      %36 = vector.broadcast %35 : f32 to vector<512x128xf32>
      %37 = arith.mulf %33, %36 : vector<512x128xf32>
      %38 = arith.addf %34, %37 : vector<512x128xf32>
      %c0_25 = arith.constant 0 : index
      %c0_26 = arith.constant 0 : index
      %39 = vector.load %arg8[%c0_25, %c0_26] : memref<512x128xf32, #tpu.memory_space<vmem>>, vector<512x128xf32>
      tpu.vector_store %arg8[%c0_25, %c0_26], %38 {strides = array<i32>} : memref<512x128xf32, #tpu.memory_space<vmem>>, vector<512x128xf32>,
    } else {
    }
    return
  }
  func.func @transform_0(%arg0: i32, %arg1: i32) -> (i32, i32) {
    %c0_i32 = arith.constant 0 : i32
    return %arg0, %arg1 : i32, i32
  }
  func.func @transform_1(%arg0: i32, %arg1: i32) -> (i32, i32) {
    %c0_i32 = arith.constant 0 : i32
    %c0_i32_0 = arith.constant 0 : i32
    %c0_i32_1 = arith.constant 0 : i32
    return %c0_i32, %c0_i32_0 : i32, i32
  }
  func.func @transform_2(%arg0: i32, %arg1: i32) -> (i32, i32) {
    %c0_i32 = arith.constant 0 : i32
    %c0_i32_0 = arith.constant 0 : i32
    return %arg0, %c0_i32 : i32, i32
  }
  func.func @transform_3(%arg0: i32, %arg1: i32) -> (i32, i32) {
    %c0_i32 = arith.constant 0 : i32
    %c0_i32_0 = arith.constant 0 : i32
    %c0_i32_1 = arith.constant 0 : i32
    return %c0_i32, %c0_i32_0 : i32, i32
  }
  func.func @transform_4(%arg0: i32, %arg1: i32) -> (i32, i32) {
    %c0_i32 = arith.constant 0 : i32
    %c0_i32_0 = arith.constant 0 : i32
    %c0_i32_1 = arith.constant 0 : i32
    return %c0_i32, %c0_i32_0 : i32, i32
  }
  func.func @transform_5(%arg0: i32, %arg1: i32) -> i32 {
    %c0_i32 = arith.constant 0 : i32
    %c0_i32_0 = arith.constant 0 : i32
    return %c0_i32 : i32
  }
  func.func @transform_6(%arg0: i32, %arg1: i32) -> (i32, i32) {
    %c0_i32 = arith.constant 0 : i32
    %c0_i32_0 = arith.constant 0 : i32
    return %arg0, %c0_i32 : i32, i32
  }
}

</mosaic_0001>

<llo_original>
// kernel: resblock_forward.1
$region0: #{resblock_forward.1}
  #allocation0 [shape = 'u32[]', space=smem, size = 0x4, offset = 0x4, fixed_abs, tag = 'smem constant byte address 0x4 - core index']
  #allocation1 [shape = 'u32[144,128]{1,0:T(1,128)}', space=vmem, size = 0x12000, scoped, tag = 'internal scratch']
  #allocation2 [shape = 'f32[1]{0:T(128)S(6)}', space=smem, size = 0x200, scoped, tag = 'scoped memory for resblock_forward.1']
  %s0 = inlined_call_operand.vmem [shape: bf16[512,512], index: 0, kind: input, shape index: {}]
  %s1 = inlined_call_operand.vmem [shape: bf16[512,128], index: 1, kind: input, shape index: {}]
  %s2 = inlined_call_operand.vmem [shape: f32[512,128], index: 2, kind: input, shape index: {}]
  %s3 = inlined_call_operand.vmem [shape: bf16[128,128], index: 3, kind: input, shape index: {}]
  %s4 = inlined_call_operand.vmem [shape: f32[1,128], index: 4, kind: input, shape index: {}]
  %s5 = inlined_call_operand.<no memory space> [shape: f32[1], index: 5, kind: input, shape index: {}]
  %s6 = inlined_call_operand.vmem [shape: f32[512,128], index: 6, kind: output, shape index: {}]
  %s7 = sld [smem:[#allocation0]]
  $region42: #{resblock_forward.1} parent=0
    _
  %s9 = ssub.s32 1, %s7
  %s10 = scalar_select 0, %s9, %s7
  %11 = sst [smem:[#allocation2]] %s5
  // Predicated region
  $region2: #{resblock_forward.1} parent=0 // pred_check
    _
  $region3: #{resblock_forward.1} parent=0 // pred_check_branch
    %13 = sbr.rel (0) target = $region5
  $region4: #{resblock_forward.1} parent=0 // pred_region
    _
  $region5: #{resblock_forward.1} parent=0 // pred_fallthru
    _
  // Predicated region
  $region6: #{resblock_forward.1} parent=0 // pred_check
    _
  $region7: #{resblock_forward.1} parent=0 // pred_check_branch
    %15 = sbr.rel (0) target = $region9
  $region8: #{resblock_forward.1} parent=0 // pred_region
    _
  $region9: #{resblock_forward.1} parent=0 // pred_fallthru
    _
  // Predicated region
  $region10: #{resblock_forward.1} parent=0 // pred_check
    _
  $region11: #{resblock_forward.1} parent=0 // pred_check_branch
    %17 = sbr.rel (0) target = $region13
  $region12: #{resblock_forward.1} parent=0 // pred_region
    _
  $region13: #{resblock_forward.1} parent=0 // pred_fallthru
    _
  // Predicated region
  $region14: #{resblock_forward.1} parent=0 // pred_check
    _
  $region15: #{resblock_forward.1} parent=0 // pred_check_branch
    %19 = sbr.rel (0) target = $region17
  $region16: #{resblock_forward.1} parent=0 // pred_region
    _
  $region17: #{resblock_forward.1} parent=0 // pred_fallthru
    _
  // Predicated region
  $region18: #{resblock_forward.1} parent=0 // pred_check
    _
  $region19: #{resblock_forward.1} parent=0 // pred_check_branch
    %21 = sbr.rel (0) target = $region21
  $region20: #{resblock_forward.1} parent=0 // pred_region
    _
  $region21: #{resblock_forward.1} parent=0 // pred_fallthru
    _
  // Predicated region
  $region22: #{resblock_forward.1} parent=0 // pred_check
    _
  $region23: #{resblock_forward.1} parent=0 // pred_check_branch
    %23 = sbr.rel (0) target = $region25
  $region24: #{resblock_forward.1} parent=0 // pred_region
    _
  $region25: #{resblock_forward.1} parent=0 // pred_fallthru
    _
  %p25 = scmp.eq.s32.totalorder 0, 0
  // Predicated region
  $region26: #{resblock_forward.1} parent=0 // pred_check
    %p26 = pneg %p25
  $region27: #{resblock_forward.1} parent=0 // pred_check_branch
    %28 = sbr.rel (%p26) target = $region29
  $region28: #{resblock_forward.1} parent=0 // pred_region
    %29 = vst [vmem:[%s6] sm:$0xff] 0.0
    %30 = vst [vmem:[%s6 + $0x8] sm:$0xff] 0.0
    %31 = vst [vmem:[%s6 + $0x10] sm:$0xff] 0.0
    %32 = vst [vmem:[%s6 + $0x18] sm:$0xff] 0.0
    %33 = vst [vmem:[%s6 + $0x20] sm:$0xff] 0.0
    %34 = vst [vmem:[%s6 + $0x28] sm:$0xff] 0.0
    %35 = vst [vmem:[%s6 + $0x30] sm:$0xff] 0.0
    %36 = vst [vmem:[%s6 + $0x38] sm:$0xff] 0.0
    %37 = vst [vmem:[%s6 + $0x40] sm:$0xff] 0.0
    %38 = vst [vmem:[%s6 + $0x48] sm:$0xff] 0.0
    %39 = vst [vmem:[%s6 + $0x50] sm:$0xff] 0.0
    %40 = vst [vmem:[%s6 + $0x58] sm:$0xff] 0.0
    %41 = vst [vmem:[%s6 + $0x60] sm:$0xff] 0.0
    %42 = vst [vmem:[%s6 + $0x68] sm:$0xff] 0.0
    %43 = vst [vmem:[%s6 + $0x70] sm:$0xff] 0.0
    %44 = vst [vmem:[%s6 + $0x78] sm:$0xff] 0.0
    %45 = vst [vmem:[%s6 + $0x80] sm:$0xff] 0.0
    %46 = vst [vmem:[%s6 + $0x88] sm:$0xff] 0.0
    %47 = vst [vmem:[%s6 + $0x90] sm:$0xff] 0.0
    %48 = vst [vmem:[%s6 + $0x98] sm:$0xff] 0.0
    %49 = vst [vmem:[%s6 + $0xa0] sm:$0xff] 0.0
    %50 = vst [vmem:[%s6 + $0xa8] sm:$0xff] 0.0
    %51 = vst [vmem:[%s6 + $0xb0] sm:$0xff] 0.0
    %52 = vst [vmem:[%s6 + $0xb8] sm:$0xff] 0.0
    %53 = vst [vmem:[%s6 + $0xc0] sm:$0xff] 0.0
    %54 = vst [vmem:[%s6 + $0xc8] sm:$0xff] 0.0
    %55 = vst [vmem:[%s6 + $0xd0] sm:$0xff] 0.0
    %56 = vst [vmem:[%s6 + $0xd8] sm:$0xff] 0.0
    %57 = vst [vmem:[%s6 + $0xe0] sm:$0xff] 0.0
    %58 = vst [vmem:[%s6 + $0xe8] sm:$0xff] 0.0
    %59 = vst [vmem:[%s6 + $0xf0] sm:$0xff] 0.0
    %60 = vst [vmem:[%s6 + $0xf8] sm:$0xff] 0.0
    %61 = vst [vmem:[%s6 + $0x100] sm:$0xff] 0.0
    %62 = vst [vmem:[%s6 + $0x108] sm:$0xff] 0.0
    %63 = vst [vmem:[%s6 + $0x110] sm:$0xff] 0.0
    %64 = vst [vmem:[%s6 + $0x118] sm:$0xff] 0.0
    %65 = vst [vmem:[%s6 + $0x120] sm:$0xff] 0.0
    %66 = vst [vmem:[%s6 + $0x128] sm:$0xff] 0.0
    %67 = vst [vmem:[%s6 + $0x130] sm:$0xff] 0.0
    %68 = vst [vmem:[%s6 + $0x138] sm:$0xff] 0.0
    %69 = vst [vmem:[%s6 + $0x140] sm:$0xff] 0.0
    %70 = vst [vmem:[%s6 + $0x148] sm:$0xff] 0.0
    %71 = vst [vmem:[%s6 + $0x150] sm:$0xff] 0.0
    %72 = vst [vmem:[%s6 + $0x158] sm:$0xff] 0.0
    %73 = vst [vmem:[%s6 + $0x160] sm:$0xff] 0.0
    %74 = vst [vmem:[%s6 + $0x168] sm:$0xff] 0.0
    %75 = vst [vmem:[%s6 + $0x170] sm:$0xff] 0.0
    %76 = vst [vmem:[%s6 + $0x178] sm:$0xff] 0.0
    %77 = vst [vmem:[%s6 + $0x180] sm:$0xff] 0.0
    %78 = vst [vmem:[%s6 + $0x188] sm:$0xff] 0.0
    %79 = vst [vmem:[%s6 + $0x190] sm:$0xff] 0.0
    %80 = vst [vmem:[%s6 + $0x198] sm:$0xff] 0.0
    %81 = vst [vmem:[%s6 + $0x1a0] sm:$0xff] 0.0
    %82 = vst [vmem:[%s6 + $0x1a8] sm:$0xff] 0.0
    %83 = vst [vmem:[%s6 + $0x1b0] sm:$0xff] 0.0
    %84 = vst [vmem:[%s6 + $0x1b8] sm:$0xff] 0.0
    %85 = vst [vmem:[%s6 + $0x1c0] sm:$0xff] 0.0
    %86 = vst [vmem:[%s6 + $0x1c8] sm:$0xff] 0.0
    %87 = vst [vmem:[%s6 + $0x1d0] sm:$0xff] 0.0
    %88 = vst [vmem:[%s6 + $0x1d8] sm:$0xff] 0.0
    %89 = vst [vmem:[%s6 + $0x1e0] sm:$0xff] 0.0
    %90 = vst [vmem:[%s6 + $0x1e8] sm:$0xff] 0.0
    %91 = vst [vmem:[%s6 + $0x1f0] sm:$0xff] 0.0
    %92 = vst [vmem:[%s6 + $0x1f8] sm:$0xff] 0.0
  $region29: #{resblock_forward.1} parent=0 // pred_fallthru
    _
  %v93 = vld [vmem:[%s1] sm:$0xf]
  %v94 = vld [vmem:[%s1 + $0x4] sm:$0xf]
  %v95 = vld [vmem:[%s1 + $0x8] sm:$0xf]
  %v96 = vld [vmem:[%s1 + $0xc] sm:$0xf]
  %v97 = vld [vmem:[%s1 + $0x10] sm:$0xf]
  %v98 = vld [vmem:[%s1 + $0x14] sm:$0xf]
  %v99 = vld [vmem:[%s1 + $0x18] sm:$0xf]
  %v100 = vld [vmem:[%s1 + $0x1c] sm:$0xf]
  %v101 = vld [vmem:[%s1 + $0x20] sm:$0xf]
  %v102 = vld [vmem:[%s1 + $0x24] sm:$0xf]
  %v103 = vld [vmem:[%s1 + $0x28] sm:$0xf]
  %v104 = vld [vmem:[%s1 + $0x2c] sm:$0xf]
  %v105 = vld [vmem:[%s1 + $0x30] sm:$0xf]
  %v106 = vld [vmem:[%s1 + $0x34] sm:$0xf]
  %v107 = vld [vmem:[%s1 + $0x38] sm:$0xf]
  %v108 = vld [vmem:[%s1 + $0x3c] sm:$0xf]
  %v109 = vld [vmem:[%s1 + $0x40] sm:$0xf]
  %v110 = vld [vmem:[%s1 + $0x44] sm:$0xf]
  %v111 = vld [vmem:[%s1 + $0x48] sm:$0xf]
  %v112 = vld [vmem:[%s1 + $0x4c] sm:$0xf]
  %v113 = vld [vmem:[%s1 + $0x50] sm:$0xf]
  %v114 = vld [vmem:[%s1 + $0x54] sm:$0xf]
  %v115 = vld [vmem:[%s1 + $0x58] sm:$0xf]
  %v116 = vld [vmem:[%s1 + $0x5c] sm:$0xf]
  %v117 = vld [vmem:[%s1 + $0x60] sm:$0xf]
  %v118 = vld [vmem:[%s1 + $0x64] sm:$0xf]
  %v119 = vld [vmem:[%s1 + $0x68] sm:$0xf]
  %v120 = vld [vmem:[%s1 + $0x6c] sm:$0xf]
  %v121 = vld [vmem:[%s1 + $0x70] sm:$0xf]
  %v122 = vld [vmem:[%s1 + $0x74] sm:$0xf]
  %v123 = vld [vmem:[%s1 + $0x78] sm:$0xf]
  %v124 = vld [vmem:[%s1 + $0x7c] sm:$0xf]
  %v125 = vld [vmem:[%s1 + $0x80] sm:$0xf]
  %v126 = vld [vmem:[%s1 + $0x84] sm:$0xf]
  %v127 = vld [vmem:[%s1 + $0x88] sm:$0xf]
  %v128 = vld [vmem:[%s1 + $0x8c] sm:$0xf]
  %v129 = vld [vmem:[%s1 + $0x90] sm:$0xf]
  %v130 = vld [vmem:[%s1 + $0x94] sm:$0xf]
  %v131 = vld [vmem:[%s1 + $0x98] sm:$0xf]
  %v132 = vld [vmem:[%s1 + $0x9c] sm:$0xf]
  %v133 = vld [vmem:[%s1 + $0xa0] sm:$0xf]
  %v134 = vld [vmem:[%s1 + $0xa4] sm:$0xf]
  %v135 = vld [vmem:[%s1 + $0xa8] sm:$0xf]
  %v136 = vld [vmem:[%s1 + $0xac] sm:$0xf]
  %v137 = vld [vmem:[%s1 + $0xb0] sm:$0xf]
  %v138 = vld [vmem:[%s1 + $0xb4] sm:$0xf]
  %v139 = vld [vmem:[%s1 + $0xb8] sm:$0xf]
  %v140 = vld [vmem:[%s1 + $0xbc] sm:$0xf]
  %v141 = vld [vmem:[%s1 + $0xc0] sm:$0xf]
  %v142 = vld [vmem:[%s1 + $0xc4] sm:$0xf]
  %v143 = vld [vmem:[%s1 + $0xc8] sm:$0xf]
  %v144 = vld [vmem:[%s1 + $0xcc] sm:$0xf]
  %v145 = vld [vmem:[%s1 + $0xd0] sm:$0xf]
  %v146 = vld [vmem:[%s1 + $0xd4] sm:$0xf]
  %v147 = vld [vmem:[%s1 + $0xd8] sm:$0xf]
  %v148 = vld [vmem:[%s1 + $0xdc] sm:$0xf]
  %v149 = vld [vmem:[%s1 + $0xe0] sm:$0xf]
  %v150 = vld [vmem:[%s1 + $0xe4] sm:$0xf]
  %v151 = vld [vmem:[%s1 + $0xe8] sm:$0xf]
  %v152 = vld [vmem:[%s1 + $0xec] sm:$0xf]
  %v153 = vld [vmem:[%s1 + $0xf0] sm:$0xf]
  %v154 = vld [vmem:[%s1 + $0xf4] sm:$0xf]
  %v155 = vld [vmem:[%s1 + $0xf8] sm:$0xf]
  %v156 = vld [vmem:[%s1 + $0xfc] sm:$0xf]
  %v157 = vld [vmem:[%s6] sm:$0xff]
  %v158 = vld [vmem:[%s6 + $0x8] sm:$0xff]
  %v159 = vld [vmem:[%s6 + $0x10] sm:$0xff]
  %v160 = vld [vmem:[%s6 + $0x18] sm:$0xff]
  %v161 = vld [vmem:[%s6 + $0x20] sm:$0xff]
  %v162 = vld [vmem:[%s6 + $0x28] sm:$0xff]
  %v163 = vld [vmem:[%s6 + $0x30] sm:$0xff]
  %v164 = vld [vmem:[%s6 + $0x38] sm:$0xff]
  %v165 = vld [vmem:[%s6 + $0x40] sm:$0xff]
  %v166 = vld [vmem:[%s6 + $0x48] sm:$0xff]
  %v167 = vld [vmem:[%s6 + $0x50] sm:$0xff]
  %v168 = vld [vmem:[%s6 + $0x58] sm:$0xff]
  %v169 = vld [vmem:[%s6 + $0x60] sm:$0xff]
  %v170 = vld [vmem:[%s6 + $0x68] sm:$0xff]
  %v171 = vld [vmem:[%s6 + $0x70] sm:$0xff]
  %v172 = vld [vmem:[%s6 + $0x78] sm:$0xff]
  %v173 = vld [vmem:[%s6 + $0x80] sm:$0xff]
  %v174 = vld [vmem:[%s6 + $0x88] sm:$0xff]
  %v175 = vld [vmem:[%s6 + $0x90] sm:$0xff]
  %v176 = vld [vmem:[%s6 + $0x98] sm:$0xff]
  %v177 = vld [vmem:[%s6 + $0xa0] sm:$0xff]
  %v178 = vld [vmem:[%s6 + $0xa8] sm:$0xff]
  %v179 = vld [vmem:[%s6 + $0xb0] sm:$0xff]
  %v180 = vld [vmem:[%s6 + $0xb8] sm:$0xff]
  %v181 = vld [vmem:[%s6 + $0xc0] sm:$0xff]
  %v182 = vld [vmem:[%s6 + $0xc8] sm:$0xff]
  %v183 = vld [vmem:[%s6 + $0xd0] sm:$0xff]
  %v184 = vld [vmem:[%s6 + $0xd8] sm:$0xff]
  %v185 = vld [vmem:[%s6 + $0xe0] sm:$0xff]
  %v186 = vld [vmem:[%s6 + $0xe8] sm:$0xff]
  %v187 = vld [vmem:[%s6 + $0xf0] sm:$0xff]
  %v188 = vld [vmem:[%s6 + $0xf8] sm:$0xff]
  %v189 = vld [vmem:[%s6 + $0x100] sm:$0xff]
  %v190 = vld [vmem:[%s6 + $0x108] sm:$0xff]
  %v191 = vld [vmem:[%s6 + $0x110] sm:$0xff]
  %v192 = vld [vmem:[%s6 + $0x118] sm:$0xff]
  %v193 = vld [vmem:[%s6 + $0x120] sm:$0xff]
  %v194 = vld [vmem:[%s6 + $0x128] sm:$0xff]
  %v195 = vld [vmem:[%s6 + $0x130] sm:$0xff]
  %v196 = vld [vmem:[%s6 + $0x138] sm:$0xff]
  %v197 = vld [vmem:[%s6 + $0x140] sm:$0xff]
  %v198 = vld [vmem:[%s6 + $0x148] sm:$0xff]
  %v199 = vld [vmem:[%s6 + $0x150] sm:$0xff]
  %v200 = vld [vmem:[%s6 + $0x158] sm:$0xff]
  %v201 = vld [vmem:[%s6 + $0x160] sm:$0xff]
  %v202 = vld [vmem:[%s6 + $0x168] sm:$0xff]
  %v203 = vld [vmem:[%s6 + $0x170] sm:$0xff]
  %v204 = vld [vmem:[%s6 + $0x178] sm:$0xff]
  %v205 = vld [vmem:[%s6 + $0x180] sm:$0xff]
  %v206 = vld [vmem:[%s6 + $0x188] sm:$0xff]
  %v207 = vld [vmem:[%s6 + $0x190] sm:$0xff]
  %v208 = vld [vmem:[%s6 + $0x198] sm:$0xff]
  %v209 = vld [vmem:[%s6 + $0x1a0] sm:$0xff]
  %v210 = vld [vmem:[%s6 + $0x1a8] sm:$0xff]
  %v211 = vld [vmem:[%s6 + $0x1b0] sm:$0xff]
  %v212 = vld [vmem:[%s6 + $0x1b8] sm:$0xff]
  %v213 = vld [vmem:[%s6 + $0x1c0] sm:$0xff]
  %v214 = vld [vmem:[%s6 + $0x1c8] sm:$0xff]
  %v215 = vld [vmem:[%s6 + $0x1d0] sm:$0xff]
  %v216 = vld [vmem:[%s6 + $0x1d8] sm:$0xff]
  %v217 = vld [vmem:[%s6 + $0x1e0] sm:$0xff]
  %v218 = vld [vmem:[%s6 + $0x1e8] sm:$0xff]
  %v219 = vld [vmem:[%s6 + $0x1f0] sm:$0xff]
  %v220 = vld [vmem:[%s6 + $0x1f8] sm:$0xff]
  %v221 = vld [vmem:[%s0] sm:$0xff]
  %v222 = vld [vmem:[%s0 + $0x8] sm:$0xff]
  %v223 = vld [vmem:[%s0 + $0x10] sm:$0xff]
  %v224 = vld [vmem:[%s0 + $0x18] sm:$0xff]
  %v225 = vld [vmem:[%s0 + $0x20] sm:$0xff]
  %v226 = vld [vmem:[%s0 + $0x28] sm:$0xff]
  %v227 = vld [vmem:[%s0 + $0x30] sm:$0xff]
  %v228 = vld [vmem:[%s0 + $0x38] sm:$0xff]
  %v229 = vld [vmem:[%s0 + $0x40] sm:$0xff]
  %v230 = vld [vmem:[%s0 + $0x48] sm:$0xff]
  %v231 = vld [vmem:[%s0 + $0x50] sm:$0xff]
  %v232 = vld [vmem:[%s0 + $0x58] sm:$0xff]
  %v233 = vld [vmem:[%s0 + $0x60] sm:$0xff]
  %v234 = vld [vmem:[%s0 + $0x68] sm:$0xff]
  %v235 = vld [vmem:[%s0 + $0x70] sm:$0xff]
  %v236 = vld [vmem:[%s0 + $0x78] sm:$0xff]
  %v237 = vld [vmem:[%s0 + $0x80] sm:$0xff]
  %v238 = vld [vmem:[%s0 + $0x88] sm:$0xff]
  %v239 = vld [vmem:[%s0 + $0x90] sm:$0xff]
  %v240 = vld [vmem:[%s0 + $0x98] sm:$0xff]
  %v241 = vld [vmem:[%s0 + $0xa0] sm:$0xff]
  %v242 = vld [vmem:[%s0 + $0xa8] sm:$0xff]
  %v243 = vld [vmem:[%s0 + $0xb0] sm:$0xff]
  %v244 = vld [vmem:[%s0 + $0xb8] sm:$0xff]
  %v245 = vld [vmem:[%s0 + $0xc0] sm:$0xff]
  %v246 = vld [vmem:[%s0 + $0xc8] sm:$0xff]
  %v247 = vld [vmem:[%s0 + $0xd0] sm:$0xff]
  %v248 = vld [vmem:[%s0 + $0xd8] sm:$0xff]
  %v249 = vld [vmem:[%s0 + $0xe0] sm:$0xff]
  %v250 = vld [vmem:[%s0 + $0xe8] sm:$0xff]
  %v251 = vld [vmem:[%s0 + $0xf0] sm:$0xff]
  %v252 = vld [vmem:[%s0 + $0xf8] sm:$0xff]
  %v253 = vld [vmem:[%s0 + $0x100] sm:$0xff]
  %v254 = vld [vmem:[%s0 + $0x108] sm:$0xff]
  %v255 = vld [vmem:[%s0 + $0x110] sm:$0xff]
  %v256 = vld [vmem:[%s0 + $0x118] sm:$0xff]
  %v257 = vld [vmem:[%s0 + $0x120] sm:$0xff]
  %v258 = vld [vmem:[%s0 + $0x128] sm:$0xff]
  %v259 = vld [vmem:[%s0 + $0x130] sm:$0xff]
  %v260 = vld [vmem:[%s0 + $0x138] sm:$0xff]
  %v261 = vld [vmem:[%s0 + $0x140] sm:$0xff]
  %v262 = vld [vmem:[%s0 + $0x148] sm:$0xff]
  %v263 = vld [vmem:[%s0 + $0x150] sm:$0xff]
  %v264 = vld [vmem:[%s0 + $0x158] sm:$0xff]
  %v265 = vld [vmem:[%s0 + $0x160] sm:$0xff]
  %v266 = vld [vmem:[%s0 + $0x168] sm:$0xff]
  %v267 = vld [vmem:[%s0 + $0x170] sm:$0xff]
  %v268 = vld [vmem:[%s0 + $0x178] sm:$0xff]
  %v269 = vld [vmem:[%s0 + $0x180] sm:$0xff]
  %v270 = vld [vmem:[%s0 + $0x188] sm:$0xff]
  %v271 = vld [vmem:[%s0 + $0x190] sm:$0xff]
  %v272 = vld [vmem:[%s0 + $0x198] sm:$0xff]
  %v273 = vld [vmem:[%s0 + $0x1a0] sm:$0xff]
  %v274 = vld [vmem:[%s0 + $0x1a8] sm:$0xff]
  %v275 = vld [vmem:[%s0 + $0x1b0] sm:$0xff]
  %v276 = vld [vmem:[%s0 + $0x1b8] sm:$0xff]
  %v277 = vld [vmem:[%s0 + $0x1c0] sm:$0xff]
  %v278 = vld [vmem:[%s0 + $0x1c8] sm:$0xff]
  %v279 = vld [vmem:[%s0 + $0x1d0] sm:$0xff]
  %v280 = vld [vmem:[%s0 + $0x1d8] sm:$0xff]
  %v281 = vld [vmem:[%s0 + $0x1e0] sm:$0xff]
  %v282 = vld [vmem:[%s0 + $0x1e8] sm:$0xff]
  %v283 = vld [vmem:[%s0 + $0x1f0] sm:$0xff]
  %v284 = vld [vmem:[%s0 + $0x1f8] sm:$0xff]
  %v285 = vld [vmem:[%s0 + $0x200] sm:$0xff]
  %v286 = vld [vmem:[%s0 + $0x208] sm:$0xff]
  %v287 = vld [vmem:[%s0 + $0x210] sm:$0xff]
  %v288 = vld [vmem:[%s0 + $0x218] sm:$0xff]
  %v289 = vld [vmem:[%s0 + $0x220] sm:$0xff]
  %v290 = vld [vmem:[%s0 + $0x228] sm:$0xff]
  %v291 = vld [vmem:[%s0 + $0x230] sm:$0xff]
  %v292 = vld [vmem:[%s0 + $0x238] sm:$0xff]
  %v293 = vld [vmem:[%s0 + $0x240] sm:$0xff]
  %v294 = vld [vmem:[%s0 + $0x248] sm:$0xff]
  %v295 = vld [vmem:[%s0 + $0x250] sm:$0xff]
  %v296 = vld [vmem:[%s0 + $0x258] sm:$0xff]
  %v297 = vld [vmem:[%s0 + $0x260] sm:$0xff]
  %v298 = vld [vmem:[%s0 + $0x268] sm:$0xff]
  %v299 = vld [vmem:[%s0 + $0x270] sm:$0xff]
  %v300 = vld [vmem:[%s0 + $0x278] sm:$0xff]
  %v301 = vld [vmem:[%s0 + $0x280] sm:$0xff]
  %v302 = vld [vmem:[%s0 + $0x288] sm:$0xff]
  %v303 = vld [vmem:[%s0 + $0x290] sm:$0xff]
  %v304 = vld [vmem:[%s0 + $0x298] sm:$0xff]
  %v305 = vld [vmem:[%s0 + $0x2a0] sm:$0xff]
  %v306 = vld [vmem:[%s0 + $0x2a8] sm:$0xff]
  %v307 = vld [vmem:[%s0 + $0x2b0] sm:$0xff]
  %v308 = vld [vmem:[%s0 + $0x2b8] sm:$0xff]
  %v309 = vld [vmem:[%s0 + $0x2c0] sm:$0xff]
  %v310 = vld [vmem:[%s0 + $0x2c8] sm:$0xff]
  %v311 = vld [vmem:[%s0 + $0x2d0] sm:$0xff]
  %v312 = vld [vmem:[%s0 + $0x2d8] sm:$0xff]
  %v313 = vld [vmem:[%s0 + $0x2e0] sm:$0xff]
  %v314 = vld [vmem:[%s0 + $0x2e8] sm:$0xff]
  %v315 = vld [vmem:[%s0 + $0x2f0] sm:$0xff]
  %v316 = vld [vmem:[%s0 + $0x2f8] sm:$0xff]
  %v317 = vld [vmem:[%s0 + $0x300] sm:$0xff]
  %v318 = vld [vmem:[%s0 + $0x308] sm:$0xff]
  %v319 = vld [vmem:[%s0 + $0x310] sm:$0xff]
  %v320 = vld [vmem:[%s0 + $0x318] sm:$0xff]
  %v321 = vld [vmem:[%s0 + $0x320] sm:$0xff]
  %v322 = vld [vmem:[%s0 + $0x328] sm:$0xff]
  %v323 = vld [vmem:[%s0 + $0x330] sm:$0xff]
  %v324 = vld [vmem:[%s0 + $0x338] sm:$0xff]
  %v325 = vld [vmem:[%s0 + $0x340] sm:$0xff]
  %v326 = vld [vmem:[%s0 + $0x348] sm:$0xff]
  %v327 = vld [vmem:[%s0 + $0x350] sm:$0xff]
  %v328 = vld [vmem:[%s0 + $0x358] sm:$0xff]
  %v329 = vld [vmem:[%s0 + $0x360] sm:$0xff]
  %v330 = vld [vmem:[%s0 + $0x368] sm:$0xff]
  %v331 = vld [vmem:[%s0 + $0x370] sm:$0xff]
  %v332 = vld [vmem:[%s0 + $0x378] sm:$0xff]
  %v333 = vld [vmem:[%s0 + $0x380] sm:$0xff]
  %v334 = vld [vmem:[%s0 + $0x388] sm:$0xff]
  %v335 = vld [vmem:[%s0 + $0x390] sm:$0xff]
  %v336 = vld [vmem:[%s0 + $0x398] sm:$0xff]
  %v337 = vld [vmem:[%s0 + $0x3a0] sm:$0xff]
  %v338 = vld [vmem:[%s0 + $0x3a8] sm:$0xff]
  %v339 = vld [vmem:[%s0 + $0x3b0] sm:$0xff]
  %v340 = vld [vmem:[%s0 + $0x3b8] sm:$0xff]
  %v341 = vld [vmem:[%s0 + $0x3c0] sm:$0xff]
  %v342 = vld [vmem:[%s0 + $0x3c8] sm:$0xff]
  %v343 = vld [vmem:[%s0 + $0x3d0] sm:$0xff]
  %v344 = vld [vmem:[%s0 + $0x3d8] sm:$0xff]
  %v345 = vld [vmem:[%s0 + $0x3e0] sm:$0xff]
  %v346 = vld [vmem:[%s0 + $0x3e8] sm:$0xff]
  %v347 = vld [vmem:[%s0 + $0x3f0] sm:$0xff]
  %v348 = vld [vmem:[%s0 + $0x3f8] sm:$0xff]
  %v477 = vunpack.c.l.b16 %v221
  %v478 = vunpack.c.h.b16 %v221
  %v479 = vunpack.c.l.b16 %v222
  %v480 = vunpack.c.h.b16 %v222
  %v481 = vunpack.c.l.b16 %v223
  %v482 = vunpack.c.h.b16 %v223
  %v483 = vunpack.c.l.b16 %v224
  %v484 = vunpack.c.h.b16 %v224
  %v485 = vunpack.c.l.b16 %v225
  %v486 = vunpack.c.h.b16 %v225
  %v487 = vunpack.c.l.b16 %v226
  %v488 = vunpack.c.h.b16 %v226
  %v489 = vunpack.c.l.b16 %v227
  %v490 = vunpack.c.h.b16 %v227
  %v491 = vunpack.c.l.b16 %v228
  %v492 = vunpack.c.h.b16 %v228
  %v493 = vunpack.c.l.b16 %v229
  %v494 = vunpack.c.h.b16 %v229
  %v495 = vunpack.c.l.b16 %v230
  %v496 = vunpack.c.h.b16 %v230
  %v497 = vunpack.c.l.b16 %v231
  %v498 = vunpack.c.h.b16 %v231
  %v499 = vunpack.c.l.b16 %v232
  %v500 = vunpack.c.h.b16 %v232
  %v501 = vunpack.c.l.b16 %v233
  %v502 = vunpack.c.h.b16 %v233
  %v503 = vunpack.c.l.b16 %v234
  %v504 = vunpack.c.h.b16 %v234
  %v505 = vunpack.c.l.b16 %v235
  %v506 = vunpack.c.h.b16 %v235
  %v507 = vunpack.c.l.b16 %v236
  %v508 = vunpack.c.h.b16 %v236
  %v509 = vunpack.c.l.b16 %v237
  %v510 = vunpack.c.h.b16 %v237
  %v511 = vunpack.c.l.b16 %v238
  %v512 = vunpack.c.h.b16 %v238
  %v513 = vunpack.c.l.b16 %v239
  %v514 = vunpack.c.h.b16 %v239
  %v515 = vunpack.c.l.b16 %v240
  %v516 = vunpack.c.h.b16 %v240
  %v517 = vunpack.c.l.b16 %v241
  %v518 = vunpack.c.h.b16 %v241
  %v519 = vunpack.c.l.b16 %v242
  %v520 = vunpack.c.h.b16 %v242
  %v521 = vunpack.c.l.b16 %v243
  %v522 = vunpack.c.h.b16 %v243
  %v523 = vunpack.c.l.b16 %v244
  %v524 = vunpack.c.h.b16 %v244
  %v525 = vunpack.c.l.b16 %v245
  %v526 = vunpack.c.h.b16 %v245
  %v527 = vunpack.c.l.b16 %v246
  %v528 = vunpack.c.h.b16 %v246
  %v529 = vunpack.c.l.b16 %v247
  %v530 = vunpack.c.h.b16 %v247
  %v531 = vunpack.c.l.b16 %v248
  %v532 = vunpack.c.h.b16 %v248
  %v533 = vunpack.c.l.b16 %v249
  %v534 = vunpack.c.h.b16 %v249
  %v535 = vunpack.c.l.b16 %v250
  %v536 = vunpack.c.h.b16 %v250
  %v537 = vunpack.c.l.b16 %v251
  %v538 = vunpack.c.h.b16 %v251
  %v539 = vunpack.c.l.b16 %v252
  %v540 = vunpack.c.h.b16 %v252
  %v541 = vunpack.c.l.b16 %v253
  %v542 = vunpack.c.h.b16 %v253
  %v543 = vunpack.c.l.b16 %v254
  %v544 = vunpack.c.h.b16 %v254
  %v545 = vunpack.c.l.b16 %v255
  %v546 = vunpack.c.h.b16 %v255
  %v547 = vunpack.c.l.b16 %v256
  %v548 = vunpack.c.h.b16 %v256
  %v549 = vunpack.c.l.b16 %v257
  %v550 = vunpack.c.h.b16 %v257
  %v551 = vunpack.c.l.b16 %v258
  %v552 = vunpack.c.h.b16 %v258
  %v553 = vunpack.c.l.b16 %v259
  %v554 = vunpack.c.h.b16 %v259
  %v555 = vunpack.c.l.b16 %v260
  %v556 = vunpack.c.h.b16 %v260
  %v557 = vunpack.c.l.b16 %v261
  %v558 = vunpack.c.h.b16 %v261
  %v559 = vunpack.c.l.b16 %v262
  %v560 = vunpack.c.h.b16 %v262
  %v561 = vunpack.c.l.b16 %v263
  %v562 = vunpack.c.h.b16 %v263
  %v563 = vunpack.c.l.b16 %v264
  %v564 = vunpack.c.h.b16 %v264
  %v565 = vunpack.c.l.b16 %v265
  %v566 = vunpack.c.h.b16 %v265
  %v567 = vunpack.c.l.b16 %v266
  %v568 = vunpack.c.h.b16 %v266
  %v569 = vunpack.c.l.b16 %v267
  %v570 = vunpack.c.h.b16 %v267
  %v571 = vunpack.c.l.b16 %v268
  %v572 = vunpack.c.h.b16 %v268
  %v573 = vunpack.c.l.b16 %v269
  %v574 = vunpack.c.h.b16 %v269
  %v575 = vunpack.c.l.b16 %v270
  %v576 = vunpack.c.h.b16 %v270
  %v577 = vunpack.c.l.b16 %v271
  %v578 = vunpack.c.h.b16 %v271
  %v579 = vunpack.c.l.b16 %v272
  %v580 = vunpack.c.h.b16 %v272
  %v581 = vunpack.c.l.b16 %v273
  %v582 = vunpack.c.h.b16 %v273
  %v583 = vunpack.c.l.b16 %v274
  %v584 = vunpack.c.h.b16 %v274
  %v585 = vunpack.c.l.b16 %v275
  %v586 = vunpack.c.h.b16 %v275
  %v587 = vunpack.c.l.b16 %v276
  %v588 = vunpack.c.h.b16 %v276
  %v589 = vunpack.c.l.b16 %v277
  %v590 = vunpack.c.h.b16 %v277
  %v591 = vunpack.c.l.b16 %v278
  %v592 = vunpack.c.h.b16 %v278
  %v593 = vunpack.c.l.b16 %v279
  %v594 = vunpack.c.h.b16 %v279
  %v595 = vunpack.c.l.b16 %v280
  %v596 = vunpack.c.h.b16 %v280
  %v597 = vunpack.c.l.b16 %v281
  %v598 = vunpack.c.h.b16 %v281
  %v599 = vunpack.c.l.b16 %v282
  %v600 = vunpack.c.h.b16 %v282
  %v601 = vunpack.c.l.b16 %v283
  %v602 = vunpack.c.h.b16 %v283
  %v603 = vunpack.c.l.b16 %v284
  %v604 = vunpack.c.h.b16 %v284
  %v605 = vunpack.c.l.b16 %v285
  %v606 = vunpack.c.h.b16 %v285
  %v607 = vunpack.c.l.b16 %v286
  %v608 = vunpack.c.h.b16 %v286
  %v609 = vunpack.c.l.b16 %v287
  %v610 = vunpack.c.h.b16 %v287
  %v611 = vunpack.c.l.b16 %v288
  %v612 = vunpack.c.h.b16 %v288
  %v613 = vunpack.c.l.b16 %v289
  %v614 = vunpack.c.h.b16 %v289
  %v615 = vunpack.c.l.b16 %v290
  %v616 = vunpack.c.h.b16 %v290
  %v617 = vunpack.c.l.b16 %v291
  %v618 = vunpack.c.h.b16 %v291
  %v619 = vunpack.c.l.b16 %v292
  %v620 = vunpack.c.h.b16 %v292
  %v621 = vunpack.c.l.b16 %v293
  %v622 = vunpack.c.h.b16 %v293
  %v623 = vunpack.c.l.b16 %v294
  %v624 = vunpack.c.h.b16 %v294
  %v625 = vunpack.c.l.b16 %v295
  %v626 = vunpack.c.h.b16 %v295
  %v627 = vunpack.c.l.b16 %v296
  %v628 = vunpack.c.h.b16 %v296
  %v629 = vunpack.c.l.b16 %v297
  %v630 = vunpack.c.h.b16 %v297
  %v631 = vunpack.c.l.b16 %v298
  %v632 = vunpack.c.h.b16 %v298
  %v633 = vunpack.c.l.b16 %v299
  %v634 = vunpack.c.h.b16 %v299
  %v635 = vunpack.c.l.b16 %v300
  %v636 = vunpack.c.h.b16 %v300
  %v637 = vunpack.c.l.b16 %v301
  %v638 = vunpack.c.h.b16 %v301
  %v639 = vunpack.c.l.b16 %v302
  %v640 = vunpack.c.h.b16 %v302
  %v641 = vunpack.c.l.b16 %v303
  %v642 = vunpack.c.h.b16 %v303
  %v643 = vunpack.c.l.b16 %v304
  %v644 = vunpack.c.h.b16 %v304
  %v645 = vunpack.c.l.b16 %v305
  %v646 = vunpack.c.h.b16 %v305
  %v647 = vunpack.c.l.b16 %v306
  %v648 = vunpack.c.h.b16 %v306
  %v649 = vunpack.c.l.b16 %v307
  %v650 = vunpack.c.h.b16 %v307
  %v651 = vunpack.c.l.b16 %v308
  %v652 = vunpack.c.h.b16 %v308
  %v653 = vunpack.c.l.b16 %v309
  %v654 = vunpack.c.h.b16 %v309
  %v655 = vunpack.c.l.b16 %v310
  %v656 = vunpack.c.h.b16 %v310
  %v657 = vunpack.c.l.b16 %v311
  %v658 = vunpack.c.h.b16 %v311
  %v659 = vunpack.c.l.b16 %v312
  %v660 = vunpack.c.h.b16 %v312
  %v661 = vunpack.c.l.b16 %v313
  %v662 = vunpack.c.h.b16 %v313
  %v663 = vunpack.c.l.b16 %v314
  %v664 = vunpack.c.h.b16 %v314
  %v665 = vunpack.c.l.b16 %v315
  %v666 = vunpack.c.h.b16 %v315
  %v667 = vunpack.c.l.b16 %v316
  %v668 = vunpack.c.h.b16 %v316
  %v669 = vunpack.c.l.b16 %v317
  %v670 = vunpack.c.h.b16 %v317
  %v671 = vunpack.c.l.b16 %v318
  %v672 = vunpack.c.h.b16 %v318
  %v673 = vunpack.c.l.b16 %v319
  %v674 = vunpack.c.h.b16 %v319
  %v675 = vunpack.c.l.b16 %v320
  %v676 = vunpack.c.h.b16 %v320
  %v677 = vunpack.c.l.b16 %v321
  %v678 = vunpack.c.h.b16 %v321
  %v679 = vunpack.c.l.b16 %v322
  %v680 = vunpack.c.h.b16 %v322
  %v681 = vunpack.c.l.b16 %v323
  %v682 = vunpack.c.h.b16 %v323
  %v683 = vunpack.c.l.b16 %v324
  %v684 = vunpack.c.h.b16 %v324
  %v685 = vunpack.c.l.b16 %v325
  %v686 = vunpack.c.h.b16 %v325
  %v687 = vunpack.c.l.b16 %v326
  %v688 = vunpack.c.h.b16 %v326
  %v689 = vunpack.c.l.b16 %v327
  %v690 = vunpack.c.h.b16 %v327
  %v691 = vunpack.c.l.b16 %v328
  %v692 = vunpack.c.h.b16 %v328
  %v693 = vunpack.c.l.b16 %v329
  %v694 = vunpack.c.h.b16 %v329
  %v695 = vunpack.c.l.b16 %v330
  %v696 = vunpack.c.h.b16 %v330
  %v697 = vunpack.c.l.b16 %v331
  %v698 = vunpack.c.h.b16 %v331
  %v699 = vunpack.c.l.b16 %v332
  %v700 = vunpack.c.h.b16 %v332
  %v701 = vunpack.c.l.b16 %v333
  %v702 = vunpack.c.h.b16 %v333
  %v703 = vunpack.c.l.b16 %v334
  %v704 = vunpack.c.h.b16 %v334
  %v705 = vunpack.c.l.b16 %v335
  %v706 = vunpack.c.h.b16 %v335
  %v707 = vunpack.c.l.b16 %v336
  %v708 = vunpack.c.h.b16 %v336
  %v709 = vunpack.c.l.b16 %v337
  %v710 = vunpack.c.h.b16 %v337
  %v711 = vunpack.c.l.b16 %v338
  %v712 = vunpack.c.h.b16 %v338
  %v713 = vunpack.c.l.b16 %v339
  %v714 = vunpack.c.h.b16 %v339
  %v715 = vunpack.c.l.b16 %v340
  %v716 = vunpack.c.h.b16 %v340
  %v717 = vunpack.c.l.b16 %v341
  %v718 = vunpack.c.h.b16 %v341
  %v719 = vunpack.c.l.b16 %v342
  %v720 = vunpack.c.h.b16 %v342
  %v721 = vunpack.c.l.b16 %v343
  %v722 = vunpack.c.h.b16 %v343
  %v723 = vunpack.c.l.b16 %v344
  %v724 = vunpack.c.h.b16 %v344
  %v725 = vunpack.c.l.b16 %v345
  %v726 = vunpack.c.h.b16 %v345
  %v727 = vunpack.c.l.b16 %v346
  %v728 = vunpack.c.h.b16 %v346
  %v729 = vunpack.c.l.b16 %v347
  %v730 = vunpack.c.h.b16 %v347
  %v731 = vunpack.c.l.b16 %v348
  %v732 = vunpack.c.h.b16 %v348
  %v733 = vpack.c.b16 %v481, %v477
  %v734 = vpack.c.b16 %v482, %v478
  %v735 = vpack.c.b16 %v483, %v479
  %v736 = vpack.c.b16 %v484, %v480
  %v737 = vpack.c.b16 %v489, %v485
  %v738 = vpack.c.b16 %v490, %v486
  %v739 = vpack.c.b16 %v491, %v487
  %v740 = vpack.c.b16 %v492, %v488
  %v741 = vpack.c.b16 %v497, %v493
  %v742 = vpack.c.b16 %v498, %v494
  %v743 = vpack.c.b16 %v499, %v495
  %v744 = vpack.c.b16 %v500, %v496
  %v745 = vpack.c.b16 %v505, %v501
  %v746 = vpack.c.b16 %v506, %v502
  %v747 = vpack.c.b16 %v507, %v503
  %v748 = vpack.c.b16 %v508, %v504
  %v749 = vpack.c.b16 %v513, %v509
  %v750 = vpack.c.b16 %v514, %v510
  %v751 = vpack.c.b16 %v515, %v511
  %v752 = vpack.c.b16 %v516, %v512
  %v753 = vpack.c.b16 %v521, %v517
  %v754 = vpack.c.b16 %v522, %v518
  %v755 = vpack.c.b16 %v523, %v519
  %v756 = vpack.c.b16 %v524, %v520
  %v757 = vpack.c.b16 %v529, %v525
  %v758 = vpack.c.b16 %v530, %v526
  %v759 = vpack.c.b16 %v531, %v527
  %v760 = vpack.c.b16 %v532, %v528
  %v761 = vpack.c.b16 %v537, %v533
  %v762 = vpack.c.b16 %v538, %v534
  %v763 = vpack.c.b16 %v539, %v535
  %v764 = vpack.c.b16 %v540, %v536
  %v765 = vpack.c.b16 %v545, %v541
  %v766 = vpack.c.b16 %v546, %v542
  %v767 = vpack.c.b16 %v547, %v543
  %v768 = vpack.c.b16 %v548, %v544
  %v769 = vpack.c.b16 %v553, %v549
  %v770 = vpack.c.b16 %v554, %v550
  %v771 = vpack.c.b16 %v555, %v551
  %v772 = vpack.c.b16 %v556, %v552
  %v773 = vpack.c.b16 %v561, %v557
  %v774 = vpack.c.b16 %v562, %v558
  %v775 = vpack.c.b16 %v563, %v559
  %v776 = vpack.c.b16 %v564, %v560
  %v777 = vpack.c.b16 %v569, %v565
  %v778 = vpack.c.b16 %v570, %v566
  %v779 = vpack.c.b16 %v571, %v567
  %v780 = vpack.c.b16 %v572, %v568
  %v781 = vpack.c.b16 %v577, %v573
  %v782 = vpack.c.b16 %v578, %v574
  %v783 = vpack.c.b16 %v579, %v575
  %v784 = vpack.c.b16 %v580, %v576
  %v785 = vpack.c.b16 %v585, %v581
  %v786 = vpack.c.b16 %v586, %v582
  %v787 = vpack.c.b16 %v587, %v583
  %v788 = vpack.c.b16 %v588, %v584
  %v789 = vpack.c.b16 %v593, %v589
  %v790 = vpack.c.b16 %v594, %v590
  %v791 = vpack.c.b16 %v595, %v591
  %v792 = vpack.c.b16 %v596, %v592
  %v793 = vpack.c.b16 %v601, %v597
  %v794 = vpack.c.b16 %v602, %v598
  %v795 = vpack.c.b16 %v603, %v599
  %v796 = vpack.c.b16 %v604, %v600
  %v797 = vpack.c.b16 %v609, %v605
  %v798 = vpack.c.b16 %v610, %v606
  %v799 = vpack.c.b16 %v611, %v607
  %v800 = vpack.c.b16 %v612, %v608
  %v801 = vpack.c.b16 %v617, %v613
  %v802 = vpack.c.b16 %v618, %v614
  %v803 = vpack.c.b16 %v619, %v615
  %v804 = vpack.c.b16 %v620, %v616
  %v805 = vpack.c.b16 %v625, %v621
  %v806 = vpack.c.b16 %v626, %v622
  %v807 = vpack.c.b16 %v627, %v623
  %v808 = vpack.c.b16 %v628, %v624
  %v809 = vpack.c.b16 %v633, %v629
  %v810 = vpack.c.b16 %v634, %v630
  %v811 = vpack.c.b16 %v635, %v631
  %v812 = vpack.c.b16 %v636, %v632
  %v813 = vpack.c.b16 %v641, %v637
  %v814 = vpack.c.b16 %v642, %v638
  %v815 = vpack.c.b16 %v643, %v639
  %v816 = vpack.c.b16 %v644, %v640
  %v817 = vpack.c.b16 %v649, %v645
  %v818 = vpack.c.b16 %v650, %v646
  %v819 = vpack.c.b16 %v651, %v647
  %v820 = vpack.c.b16 %v652, %v648
  %v821 = vpack.c.b16 %v657, %v653
  %v822 = vpack.c.b16 %v658, %v654
  %v823 = vpack.c.b16 %v659, %v655
  %v824 = vpack.c.b16 %v660, %v656
  %v825 = vpack.c.b16 %v665, %v661
  %v826 = vpack.c.b16 %v666, %v662
  %v827 = vpack.c.b16 %v667, %v663
  %v828 = vpack.c.b16 %v668, %v664
  %v829 = vpack.c.b16 %v673, %v669
  %v830 = vpack.c.b16 %v674, %v670
  %v831 = vpack.c.b16 %v675, %v671
  %v832 = vpack.c.b16 %v676, %v672
  %v833 = vpack.c.b16 %v681, %v677
  %v834 = vpack.c.b16 %v682, %v678
  %v835 = vpack.c.b16 %v683, %v679
  %v836 = vpack.c.b16 %v684, %v680
  %v837 = vpack.c.b16 %v689, %v685
  %v838 = vpack.c.b16 %v690, %v686
  %v839 = vpack.c.b16 %v691, %v687
  %v840 = vpack.c.b16 %v692, %v688
  %v841 = vpack.c.b16 %v697, %v693
  %v842 = vpack.c.b16 %v698, %v694
  %v843 = vpack.c.b16 %v699, %v695
  %v844 = vpack.c.b16 %v700, %v696
  %v845 = vpack.c.b16 %v705, %v701
  %v846 = vpack.c.b16 %v706, %v702
  %v847 = vpack.c.b16 %v707, %v703
  %v848 = vpack.c.b16 %v708, %v704
  %v849 = vpack.c.b16 %v713, %v709
  %v850 = vpack.c.b16 %v714, %v710
  %v851 = vpack.c.b16 %v715, %v711
  %v852 = vpack.c.b16 %v716, %v712
  %v853 = vpack.c.b16 %v721, %v717
  %v854 = vpack.c.b16 %v722, %v718
  %v855 = vpack.c.b16 %v723, %v719
  %v856 = vpack.c.b16 %v724, %v720
  %v857 = vpack.c.b16 %v729, %v725
  %v858 = vpack.c.b16 %v730, %v726
  %v859 = vpack.c.b16 %v731, %v727
  %v860 = vpack.c.b16 %v732, %v728
  %v1053 = vunpack.c.l.b16 %v93
  %v1054 = vunpack.c.l.b16 %v94
  %v1055 = vunpack.c.l.b16 %v95
  %v1056 = vunpack.c.l.b16 %v96
  %v1057 = vunpack.c.l.b16 %v97
  %v1058 = vunpack.c.l.b16 %v98
  %v1059 = vunpack.c.l.b16 %v99
  %v1060 = vunpack.c.l.b16 %v100
  %v1061 = vunpack.c.l.b16 %v101
  %v1062 = vunpack.c.l.b16 %v102
  %v1063 = vunpack.c.l.b16 %v103
  %v1064 = vunpack.c.l.b16 %v104
  %v1065 = vunpack.c.l.b16 %v105
  %v1066 = vunpack.c.l.b16 %v106
  %v1067 = vunpack.c.l.b16 %v107
  %v1068 = vunpack.c.l.b16 %v108
  %v1069 = vunpack.c.l.b16 %v109
  %v1070 = vunpack.c.l.b16 %v110
  %v1071 = vunpack.c.l.b16 %v111
  %v1072 = vunpack.c.l.b16 %v112
  %v1073 = vunpack.c.l.b16 %v113
  %v1074 = vunpack.c.l.b16 %v114
  %v1075 = vunpack.c.l.b16 %v115
  %v1076 = vunpack.c.l.b16 %v116
  %v1077 = vunpack.c.l.b16 %v117
  %v1078 = vunpack.c.l.b16 %v118
  %v1079 = vunpack.c.l.b16 %v119
  %v1080 = vunpack.c.l.b16 %v120
  %v1081 = vunpack.c.l.b16 %v121
  %v1082 = vunpack.c.l.b16 %v122
  %v1083 = vunpack.c.l.b16 %v123
  %v1084 = vunpack.c.l.b16 %v124
  %v1085 = vunpack.c.l.b16 %v125
  %v1086 = vunpack.c.l.b16 %v126
  %v1087 = vunpack.c.l.b16 %v127
  %v1088 = vunpack.c.l.b16 %v128
  %v1089 = vunpack.c.l.b16 %v129
  %v1090 = vunpack.c.l.b16 %v130
  %v1091 = vunpack.c.l.b16 %v131
  %v1092 = vunpack.c.l.b16 %v132
  %v1093 = vunpack.c.l.b16 %v133
  %v1094 = vunpack.c.l.b16 %v134
  %v1095 = vunpack.c.l.b16 %v135
  %v1096 = vunpack.c.l.b16 %v136
  %v1097 = vunpack.c.l.b16 %v137
  %v1098 = vunpack.c.l.b16 %v138
  %v1099 = vunpack.c.l.b16 %v139
  %v1100 = vunpack.c.l.b16 %v140
  %v1101 = vunpack.c.l.b16 %v141
  %v1102 = vunpack.c.l.b16 %v142
  %v1103 = vunpack.c.l.b16 %v143
  %v1104 = vunpack.c.l.b16 %v144
  %v1105 = vunpack.c.l.b16 %v145
  %v1106 = vunpack.c.l.b16 %v146
  %v1107 = vunpack.c.l.b16 %v147
  %v1108 = vunpack.c.l.b16 %v148
  %v1109 = vunpack.c.l.b16 %v149
  %v1110 = vunpack.c.l.b16 %v150
  %v1111 = vunpack.c.l.b16 %v151
  %v1112 = vunpack.c.l.b16 %v152
  %v1113 = vunpack.c.l.b16 %v153
  %v1114 = vunpack.c.l.b16 %v154
  %v1115 = vunpack.c.l.b16 %v155
  %v1116 = vunpack.c.l.b16 %v156
  %v1117 = vpack.c.b16 %v1054, %v1053
  %v1118 = vpack.c.b16 %v1056, %v1055
  %v1119 = vpack.c.b16 %v1058, %v1057
  %v1120 = vpack.c.b16 %v1060, %v1059
  %v1121 = vpack.c.b16 %v1062, %v1061
  %v1122 = vpack.c.b16 %v1064, %v1063
  %v1123 = vpack.c.b16 %v1066, %v1065
  %v1124 = vpack.c.b16 %v1068, %v1067
  %v1125 = vpack.c.b16 %v1070, %v1069
  %v1126 = vpack.c.b16 %v1072, %v1071
  %v1127 = vpack.c.b16 %v1074, %v1073
  %v1128 = vpack.c.b16 %v1076, %v1075
  %v1129 = vpack.c.b16 %v1078, %v1077
  %v1130 = vpack.c.b16 %v1080, %v1079
  %v1131 = vpack.c.b16 %v1082, %v1081
  %v1132 = vpack.c.b16 %v1084, %v1083
  %v1133 = vpack.c.b16 %v1086, %v1085
  %v1134 = vpack.c.b16 %v1088, %v1087
  %v1135 = vpack.c.b16 %v1090, %v1089
  %v1136 = vpack.c.b16 %v1092, %v1091
  %v1137 = vpack.c.b16 %v1094, %v1093
  %v1138 = vpack.c.b16 %v1096, %v1095
  %v1139 = vpack.c.b16 %v1098, %v1097
  %v1140 = vpack.c.b16 %v1100, %v1099
  %v1141 = vpack.c.b16 %v1102, %v1101
  %v1142 = vpack.c.b16 %v1104, %v1103
  %v1143 = vpack.c.b16 %v1106, %v1105
  %v1144 = vpack.c.b16 %v1108, %v1107
  %v1145 = vpack.c.b16 %v1110, %v1109
  %v1146 = vpack.c.b16 %v1112, %v1111
  %v1147 = vpack.c.b16 %v1114, %v1113
  %v1148 = vpack.c.b16 %v1116, %v1115
  %1181 = vmatprep.subr.bf16.mxu0 0
  %1182 = vmatpush1.bf16.msra.mxu0 %v1124
  %1183 = vmatprep.subr.bf16.mxu0 0
  %1184 = vmatpush1.bf16.msra.mxu0 %v1123
  %1185 = vmatprep.subr.bf16.mxu0 0
  %1186 = vmatpush1.bf16.msra.mxu0 %v1122
  %1187 = vmatprep.subr.bf16.mxu0 0
  %1188 = vmatpush1.bf16.msra.mxu0 %v1121
  %1189 = vmatprep.subr.bf16.mxu0 0
  %1190 = vmatpush1.bf16.msra.mxu0 %v1120
  %1191 = vmatprep.subr.bf16.mxu0 0
  %1192 = vmatpush1.bf16.msra.mxu0 %v1119
  %1193 = vmatprep.subr.bf16.mxu0 0
  %1194 = vmatpush1.bf16.msra.mxu0 %v1118
  %1195 = vmatprep.subr.bf16.mxu0 0
  %1196 = vmatpush1.bf16.msra.mxu0 %v1117
  %1197 = vmatprep.subr.bf16.mxu0 0
  %1198 = vmatpush2.bf16.msra.mxu0 %v1132
  %1199 = vmatprep.subr.bf16.mxu0 0
  %1200 = vmatpush2.bf16.msra.mxu0 %v1131
  %1201 = vmatprep.subr.bf16.mxu0 0
  %1202 = vmatpush2.bf16.msra.mxu0 %v1130
  %1203 = vmatprep.subr.bf16.mxu0 0
  %1204 = vmatpush2.bf16.msra.mxu0 %v1129
  %1205 = vmatprep.subr.bf16.mxu0 0
  %1206 = vmatpush2.bf16.msra.mxu0 %v1128
  %1207 = vmatprep.subr.bf16.mxu0 0
  %1208 = vmatpush2.bf16.msra.mxu0 %v1127
  %1209 = vmatprep.subr.bf16.mxu0 0
  %1210 = vmatpush2.bf16.msra.mxu0 %v1126
  %1211 = vmatprep.subr.bf16.mxu0 0
  %1212 = vmatpush2.bf16.msra.mxu0 %v1125
  %1213 = vmatprep.mubr.bf16.mxu0 %v734
  %1214 = vmatmul.mubr.bf16.gmra.mxu0 %v733
  %v1215 = vpop.f32.mrf.mxu0
  %v1216 = vadd.f32 0.0, %v1215
  %v1217 = vpop.f32.mrf.mxu0
  %v1218 = vpop.f32.mrf.mxu0
  %v1219 = vadd.f32 0.0, %v1218
  %v1220 = vpop.f32.mrf.mxu0
  %1221 = vmatprep.mubr.bf16.mxu0 %v738
  %1222 = vmatmul.mubr.bf16.gmra.mxu0 %v737
  %v1223 = vpop.f32.mrf.mxu0
  %v1224 = vadd.f32 0.0, %v1223
  %v1225 = vpop.f32.mrf.mxu0
  %v1226 = vpop.f32.mrf.mxu0
  %v1227 = vadd.f32 0.0, %v1226
  %v1228 = vpop.f32.mrf.mxu0
  %1229 = vmatprep.mubr.bf16.mxu0 %v742
  %1230 = vmatmul.mubr.bf16.gmra.mxu0 %v741
  %v1231 = vpop.f32.mrf.mxu0
  %v1232 = vadd.f32 0.0, %v1231
  %v1233 = vpop.f32.mrf.mxu0
  %v1234 = vpop.f32.mrf.mxu0
  %v1235 = vadd.f32 0.0, %v1234
  %v1236 = vpop.f32.mrf.mxu0
  %1237 = vmatprep.mubr.bf16.mxu0 %v746
  %1238 = vmatmul.mubr.bf16.gmra.mxu0 %v745
  %v1239 = vpop.f32.mrf.mxu0
  %v1240 = vadd.f32 0.0, %v1239
  %v1241 = vpop.f32.mrf.mxu0
  %v1242 = vpop.f32.mrf.mxu0
  %v1243 = vadd.f32 0.0, %v1242
  %v1244 = vpop.f32.mrf.mxu0
  %1245 = vmatprep.mubr.bf16.mxu0 %v750
  %1246 = vmatmul.mubr.bf16.gmra.mxu0 %v749
  %v1247 = vpop.f32.mrf.mxu0
  %v1248 = vadd.f32 0.0, %v1247
  %v1249 = vpop.f32.mrf.mxu0
  %v1250 = vpop.f32.mrf.mxu0
  %v1251 = vadd.f32 0.0, %v1250
  %v1252 = vpop.f32.mrf.mxu0
  %1253 = vmatprep.mubr.bf16.mxu0 %v754
  %1254 = vmatmul.mubr.bf16.gmra.mxu0 %v753
  %v1255 = vpop.f32.mrf.mxu0
  %v1256 = vadd.f32 0.0, %v1255
  %v1257 = vpop.f32.mrf.mxu0
  %v1258 = vpop.f32.mrf.mxu0
  %v1259 = vadd.f32 0.0, %v1258
  %v1260 = vpop.f32.mrf.mxu0
  %1261 = vmatprep.mubr.bf16.mxu0 %v758
  %1262 = vmatmul.mubr.bf16.gmra.mxu0 %v757
  %v1263 = vpop.f32.mrf.mxu0
  %v1264 = vadd.f32 0.0, %v1263
  %v1265 = vpop.f32.mrf.mxu0
  %v1266 = vpop.f32.mrf.mxu0
  %v1267 = vadd.f32 0.0, %v1266
  %v1268 = vpop.f32.mrf.mxu0
  %1269 = vmatprep.mubr.bf16.mxu0 %v762
  %1270 = vmatmul.mubr.bf16.gmra.mxu0 %v761
  %v1271 = vpop.f32.mrf.mxu0
  %v1272 = vadd.f32 0.0, %v1271
  %v1273 = vpop.f32.mrf.mxu0
  %v1274 = vpop.f32.mrf.mxu0
  %v1275 = vadd.f32 0.0, %v1274
  %v1276 = vpop.f32.mrf.mxu0
  %1277 = vmatprep.mubr.bf16.mxu0 %v766
  %1278 = vmatmul.mubr.bf16.gmra.mxu0 %v765
  %v1279 = vpop.f32.mrf.mxu0
  %v1280 = vadd.f32 0.0, %v1279
  %v1281 = vpop.f32.mrf.mxu0
  %v1282 = vpop.f32.mrf.mxu0
  %v1283 = vadd.f32 0.0, %v1282
  %v1284 = vpop.f32.mrf.mxu0
  %1285 = vmatprep.mubr.bf16.mxu0 %v770
  %1286 = vmatmul.mubr.bf16.gmra.mxu0 %v769
  %v1287 = vpop.f32.mrf.mxu0
  %v1288 = vadd.f32 0.0, %v1287
  %v1289 = vpop.f32.mrf.mxu0
  %v1290 = vpop.f32.mrf.mxu0
  %v1291 = vadd.f32 0.0, %v1290
  %v1292 = vpop.f32.mrf.mxu0
  %1293 = vmatprep.mubr.bf16.mxu0 %v774
  %1294 = vmatmul.mubr.bf16.gmra.mxu0 %v773
  %v1295 = vpop.f32.mrf.mxu0
  %v1296 = vadd.f32 0.0, %v1295
  %v1297 = vpop.f32.mrf.mxu0
  %v1298 = vpop.f32.mrf.mxu0
  %v1299 = vadd.f32 0.0, %v1298
  %v1300 = vpop.f32.mrf.mxu0
  %1301 = vmatprep.mubr.bf16.mxu0 %v778
  %1302 = vmatmul.mubr.bf16.gmra.mxu0 %v777
  %v1303 = vpop.f32.mrf.mxu0
  %v1304 = vadd.f32 0.0, %v1303
  %v1305 = vpop.f32.mrf.mxu0
  %v1306 = vpop.f32.mrf.mxu0
  %v1307 = vadd.f32 0.0, %v1306
  %v1308 = vpop.f32.mrf.mxu0
  %1309 = vmatprep.mubr.bf16.mxu0 %v782
  %1310 = vmatmul.mubr.bf16.gmra.mxu0 %v781
  %v1311 = vpop.f32.mrf.mxu0
  %v1312 = vadd.f32 0.0, %v1311
  %v1313 = vpop.f32.mrf.mxu0
  %v1314 = vpop.f32.mrf.mxu0
  %v1315 = vadd.f32 0.0, %v1314
  %v1316 = vpop.f32.mrf.mxu0
  %1317 = vmatprep.mubr.bf16.mxu0 %v786
  %1318 = vmatmul.mubr.bf16.gmra.mxu0 %v785
  %v1319 = vpop.f32.mrf.mxu0
  %v1320 = vadd.f32 0.0, %v1319
  %v1321 = vpop.f32.mrf.mxu0
  %v1322 = vpop.f32.mrf.mxu0
  %v1323 = vadd.f32 0.0, %v1322
  %v1324 = vpop.f32.mrf.mxu0
  %1325 = vmatprep.mubr.bf16.mxu0 %v790
  %1326 = vmatmul.mubr.bf16.gmra.mxu0 %v789
  %v1327 = vpop.f32.mrf.mxu0
  %v1328 = vadd.f32 0.0, %v1327
  %v1329 = vpop.f32.mrf.mxu0
  %v1330 = vpop.f32.mrf.mxu0
  %v1331 = vadd.f32 0.0, %v1330
  %v1332 = vpop.f32.mrf.mxu0
  %1333 = vmatprep.mubr.bf16.mxu0 %v794
  %1334 = vmatmul.mubr.bf16.gmra.mxu0 %v793
  %v1335 = vpop.f32.mrf.mxu0
  %v1336 = vadd.f32 0.0, %v1335
  %v1337 = vpop.f32.mrf.mxu0
  %v1338 = vpop.f32.mrf.mxu0
  %v1339 = vadd.f32 0.0, %v1338
  %v1340 = vpop.f32.mrf.mxu0
  %1341 = vmatprep.mubr.bf16.mxu0 %v798
  %1342 = vmatmul.mubr.bf16.gmra.mxu0 %v797
  %v1343 = vpop.f32.mrf.mxu0
  %v1344 = vadd.f32 0.0, %v1343
  %v1345 = vpop.f32.mrf.mxu0
  %v1346 = vpop.f32.mrf.mxu0
  %v1347 = vadd.f32 0.0, %v1346
  %v1348 = vpop.f32.mrf.mxu0
  %1349 = vmatprep.mubr.bf16.mxu0 %v802
  %1350 = vmatmul.mubr.bf16.gmra.mxu0 %v801
  %v1351 = vpop.f32.mrf.mxu0
  %v1352 = vadd.f32 0.0, %v1351
  %v1353 = vpop.f32.mrf.mxu0
  %v1354 = vpop.f32.mrf.mxu0
  %v1355 = vadd.f32 0.0, %v1354
  %v1356 = vpop.f32.mrf.mxu0
  %1357 = vmatprep.mubr.bf16.mxu0 %v806
  %1358 = vmatmul.mubr.bf16.gmra.mxu0 %v805
  %v1359 = vpop.f32.mrf.mxu0
  %v1360 = vadd.f32 0.0, %v1359
  %v1361 = vpop.f32.mrf.mxu0
  %v1362 = vpop.f32.mrf.mxu0
  %v1363 = vadd.f32 0.0, %v1362
  %v1364 = vpop.f32.mrf.mxu0
  %1365 = vmatprep.mubr.bf16.mxu0 %v810
  %1366 = vmatmul.mubr.bf16.gmra.mxu0 %v809
  %v1367 = vpop.f32.mrf.mxu0
  %v1368 = vadd.f32 0.0, %v1367
  %v1369 = vpop.f32.mrf.mxu0
  %v1370 = vpop.f32.mrf.mxu0
  %v1371 = vadd.f32 0.0, %v1370
  %v1372 = vpop.f32.mrf.mxu0
  %1373 = vmatprep.mubr.bf16.mxu0 %v814
  %1374 = vmatmul.mubr.bf16.gmra.mxu0 %v813
  %v1375 = vpop.f32.mrf.mxu0
  %v1376 = vadd.f32 0.0, %v1375
  %v1377 = vpop.f32.mrf.mxu0
  %v1378 = vpop.f32.mrf.mxu0
  %v1379 = vadd.f32 0.0, %v1378
  %v1380 = vpop.f32.mrf.mxu0
  %1381 = vmatprep.mubr.bf16.mxu0 %v818
  %1382 = vmatmul.mubr.bf16.gmra.mxu0 %v817
  %v1383 = vpop.f32.mrf.mxu0
  %v1384 = vadd.f32 0.0, %v1383
  %v1385 = vpop.f32.mrf.mxu0
  %v1386 = vpop.f32.mrf.mxu0
  %v1387 = vadd.f32 0.0, %v1386
  %v1388 = vpop.f32.mrf.mxu0
  %1389 = vmatprep.mubr.bf16.mxu0 %v822
  %1390 = vmatmul.mubr.bf16.gmra.mxu0 %v821
  %v1391 = vpop.f32.mrf.mxu0
  %v1392 = vadd.f32 0.0, %v1391
  %v1393 = vpop.f32.mrf.mxu0
  %v1394 = vpop.f32.mrf.mxu0
  %v1395 = vadd.f32 0.0, %v1394
  %v1396 = vpop.f32.mrf.mxu0
  %1397 = vmatprep.mubr.bf16.mxu0 %v826
  %1398 = vmatmul.mubr.bf16.gmra.mxu0 %v825
  %v1399 = vpop.f32.mrf.mxu0
  %v1400 = vadd.f32 0.0, %v1399
  %v1401 = vpop.f32.mrf.mxu0
  %v1402 = vpop.f32.mrf.mxu0
  %v1403 = vadd.f32 0.0, %v1402
  %v1404 = vpop.f32.mrf.mxu0
  %1405 = vmatprep.mubr.bf16.mxu0 %v830
  %1406 = vmatmul.mubr.bf16.gmra.mxu0 %v829
  %v1407 = vpop.f32.mrf.mxu0
  %v1408 = vadd.f32 0.0, %v1407
  %v1409 = vpop.f32.mrf.mxu0
  %v1410 = vpop.f32.mrf.mxu0
  %v1411 = vadd.f32 0.0, %v1410
  %v1412 = vpop.f32.mrf.mxu0
  %1413 = vmatprep.mubr.bf16.mxu0 %v834
  %1414 = vmatmul.mubr.bf16.gmra.mxu0 %v833
  %v1415 = vpop.f32.mrf.mxu0
  %v1416 = vadd.f32 0.0, %v1415
  %v1417 = vpop.f32.mrf.mxu0
  %v1418 = vpop.f32.mrf.mxu0
  %v1419 = vadd.f32 0.0, %v1418
  %v1420 = vpop.f32.mrf.mxu0
  %1421 = vmatprep.mubr.bf16.mxu0 %v838
  %1422 = vmatmul.mubr.bf16.gmra.mxu0 %v837
  %v1423 = vpop.f32.mrf.mxu0
  %v1424 = vadd.f32 0.0, %v1423
  %v1425 = vpop.f32.mrf.mxu0
  %v1426 = vpop.f32.mrf.mxu0
  %v1427 = vadd.f32 0.0, %v1426
  %v1428 = vpop.f32.mrf.mxu0
  %1429 = vmatprep.mubr.bf16.mxu0 %v842
  %1430 = vmatmul.mubr.bf16.gmra.mxu0 %v841
  %v1431 = vpop.f32.mrf.mxu0
  %v1432 = vadd.f32 0.0, %v1431
  %v1433 = vpop.f32.mrf.mxu0
  %v1434 = vpop.f32.mrf.mxu0
  %v1435 = vadd.f32 0.0, %v1434
  %v1436 = vpop.f32.mrf.mxu0
  %1437 = vmatprep.mubr.bf16.mxu0 %v846
  %1438 = vmatmul.mubr.bf16.gmra.mxu0 %v845
  %v1439 = vpop.f32.mrf.mxu0
  %v1440 = vadd.f32 0.0, %v1439
  %v1441 = vpop.f32.mrf.mxu0
  %v1442 = vpop.f32.mrf.mxu0
  %v1443 = vadd.f32 0.0, %v1442
  %v1444 = vpop.f32.mrf.mxu0
  %1445 = vmatprep.mubr.bf16.mxu0 %v850
  %1446 = vmatmul.mubr.bf16.gmra.mxu0 %v849
  %v1447 = vpop.f32.mrf.mxu0
  %v1448 = vadd.f32 0.0, %v1447
  %v1449 = vpop.f32.mrf.mxu0
  %v1450 = vpop.f32.mrf.mxu0
  %v1451 = vadd.f32 0.0, %v1450
  %v1452 = vpop.f32.mrf.mxu0
  %1453 = vmatprep.mubr.bf16.mxu0 %v854
  %1454 = vmatmul.mubr.bf16.gmra.mxu0 %v853
  %v1455 = vpop.f32.mrf.mxu0
  %v1456 = vadd.f32 0.0, %v1455
  %v1457 = vpop.f32.mrf.mxu0
  %v1458 = vpop.f32.mrf.mxu0
  %v1459 = vadd.f32 0.0, %v1458
  %v1460 = vpop.f32.mrf.mxu0
  %1461 = vmatprep.mubr.bf16.mxu0 %v858
  %1462 = vmatmul.mubr.bf16.gmra.mxu0 %v857
  %v1463 = vpop.f32.mrf.mxu0
  %v1464 = vadd.f32 0.0, %v1463
  %v1465 = vpop.f32.mrf.mxu0
  %v1466 = vpop.f32.mrf.mxu0
  %v1467 = vadd.f32 0.0, %v1466
  %v1468 = vpop.f32.mrf.mxu0
  %1469 = vdwg.mxu0
  %1470 = vmatprep.subr.bf16.mxu0 0
  %1471 = vmatpush1.bf16.msra.mxu0 %v1140
  %1472 = vmatprep.subr.bf16.mxu0 0
  %1473 = vmatpush1.bf16.msra.mxu0 %v1139
  %1474 = vmatprep.subr.bf16.mxu0 0
  %1475 = vmatpush1.bf16.msra.mxu0 %v1138
  %1476 = vmatprep.subr.bf16.mxu0 0
  %1477 = vmatpush1.bf16.msra.mxu0 %v1137
  %1478 = vmatprep.subr.bf16.mxu0 0
  %1479 = vmatpush1.bf16.msra.mxu0 %v1136
  %1480 = vmatprep.subr.bf16.mxu0 0
  %1481 = vmatpush1.bf16.msra.mxu0 %v1135
  %1482 = vmatprep.subr.bf16.mxu0 0
  %1483 = vmatpush1.bf16.msra.mxu0 %v1134
  %1484 = vmatprep.subr.bf16.mxu0 0
  %1485 = vmatpush1.bf16.msra.mxu0 %v1133
  %1486 = vmatprep.subr.bf16.mxu0 0
  %1487 = vmatpush2.bf16.msra.mxu0 %v1148
  %1488 = vmatprep.subr.bf16.mxu0 0
  %1489 = vmatpush2.bf16.msra.mxu0 %v1147
  %1490 = vmatprep.subr.bf16.mxu0 0
  %1491 = vmatpush2.bf16.msra.mxu0 %v1146
  %1492 = vmatprep.subr.bf16.mxu0 0
  %1493 = vmatpush2.bf16.msra.mxu0 %v1145
  %1494 = vmatprep.subr.bf16.mxu0 0
  %1495 = vmatpush2.bf16.msra.mxu0 %v1144
  %1496 = vmatprep.subr.bf16.mxu0 0
  %1497 = vmatpush2.bf16.msra.mxu0 %v1143
  %1498 = vmatprep.subr.bf16.mxu0 0
  %1499 = vmatpush2.bf16.msra.mxu0 %v1142
  %1500 = vmatprep.subr.bf16.mxu0 0
  %1501 = vmatpush2.bf16.msra.mxu0 %v1141
  %1502 = vmatprep.mubr.bf16.mxu0 %v736
  %1503 = vmatmul.mubr.bf16.gmra.mxu0 %v735
  %v1504 = vpop.f32.mrf.mxu0
  %v1505 = vadd.f32 %v1216, %v1504
  %v1506 = vpop.f32.mrf.mxu0
  %v1507 = vpop.f32.mrf.mxu0
  %v1508 = vadd.f32 %v1219, %v1507
  %v1509 = vpop.f32.mrf.mxu0
  %1510 = vmatprep.mubr.bf16.mxu0 %v740
  %1511 = vmatmul.mubr.bf16.gmra.mxu0 %v739
  %v1512 = vpop.f32.mrf.mxu0
  %v1513 = vadd.f32 %v1224, %v1512
  %v1514 = vpop.f32.mrf.mxu0
  %v1515 = vpop.f32.mrf.mxu0
  %v1516 = vadd.f32 %v1227, %v1515
  %v1517 = vpop.f32.mrf.mxu0
  %1518 = vmatprep.mubr.bf16.mxu0 %v744
  %1519 = vmatmul.mubr.bf16.gmra.mxu0 %v743
  %v1520 = vpop.f32.mrf.mxu0
  %v1521 = vadd.f32 %v1232, %v1520
  %v1522 = vpop.f32.mrf.mxu0
  %v1523 = vpop.f32.mrf.mxu0
  %v1524 = vadd.f32 %v1235, %v1523
  %v1525 = vpop.f32.mrf.mxu0
  %1526 = vmatprep.mubr.bf16.mxu0 %v748
  %1527 = vmatmul.mubr.bf16.gmra.mxu0 %v747
  %v1528 = vpop.f32.mrf.mxu0
  %v1529 = vadd.f32 %v1240, %v1528
  %v1530 = vpop.f32.mrf.mxu0
  %v1531 = vpop.f32.mrf.mxu0
  %v1532 = vadd.f32 %v1243, %v1531
  %v1533 = vpop.f32.mrf.mxu0
  %1534 = vmatprep.mubr.bf16.mxu0 %v752
  %1535 = vmatmul.mubr.bf16.gmra.mxu0 %v751
  %v1536 = vpop.f32.mrf.mxu0
  %v1537 = vadd.f32 %v1248, %v1536
  %v1538 = vpop.f32.mrf.mxu0
  %v1539 = vpop.f32.mrf.mxu0
  %v1540 = vadd.f32 %v1251, %v1539
  %v1541 = vpop.f32.mrf.mxu0
  %1542 = vmatprep.mubr.bf16.mxu0 %v756
  %1543 = vmatmul.mubr.bf16.gmra.mxu0 %v755
  %v1544 = vpop.f32.mrf.mxu0
  %v1545 = vadd.f32 %v1256, %v1544
  %v1546 = vpop.f32.mrf.mxu0
  %v1547 = vpop.f32.mrf.mxu0
  %v1548 = vadd.f32 %v1259, %v1547
  %v1549 = vpop.f32.mrf.mxu0
  %1550 = vmatprep.mubr.bf16.mxu0 %v760
  %1551 = vmatmul.mubr.bf16.gmra.mxu0 %v759
  %v1552 = vpop.f32.mrf.mxu0
  %v1553 = vadd.f32 %v1264, %v1552
  %v1554 = vpop.f32.mrf.mxu0
  %v1555 = vpop.f32.mrf.mxu0
  %v1556 = vadd.f32 %v1267, %v1555
  %v1557 = vpop.f32.mrf.mxu0
  %1558 = vmatprep.mubr.bf16.mxu0 %v764
  %1559 = vmatmul.mubr.bf16.gmra.mxu0 %v763
  %v1560 = vpop.f32.mrf.mxu0
  %v1561 = vadd.f32 %v1272, %v1560
  %v1562 = vpop.f32.mrf.mxu0
  %v1563 = vpop.f32.mrf.mxu0
  %v1564 = vadd.f32 %v1275, %v1563
  %v1565 = vpop.f32.mrf.mxu0
  %1566 = vmatprep.mubr.bf16.mxu0 %v768
  %1567 = vmatmul.mubr.bf16.gmra.mxu0 %v767
  %v1568 = vpop.f32.mrf.mxu0
  %v1569 = vadd.f32 %v1280, %v1568
  %v1570 = vpop.f32.mrf.mxu0
  %v1571 = vpop.f32.mrf.mxu0
  %v1572 = vadd.f32 %v1283, %v1571
  %v1573 = vpop.f32.mrf.mxu0
  %1574 = vmatprep.mubr.bf16.mxu0 %v772
  %1575 = vmatmul.mubr.bf16.gmra.mxu0 %v771
  %v1576 = vpop.f32.mrf.mxu0
  %v1577 = vadd.f32 %v1288, %v1576
  %v1578 = vpop.f32.mrf.mxu0
  %v1579 = vpop.f32.mrf.mxu0
  %v1580 = vadd.f32 %v1291, %v1579
  %v1581 = vpop.f32.mrf.mxu0
  %1582 = vmatprep.mubr.bf16.mxu0 %v776
  %1583 = vmatmul.mubr.bf16.gmra.mxu0 %v775
  %v1584 = vpop.f32.mrf.mxu0
  %v1585 = vadd.f32 %v1296, %v1584
  %v1586 = vpop.f32.mrf.mxu0
  %v1587 = vpop.f32.mrf.mxu0
  %v1588 = vadd.f32 %v1299, %v1587
  %v1589 = vpop.f32.mrf.mxu0
  %1590 = vmatprep.mubr.bf16.mxu0 %v780
  %1591 = vmatmul.mubr.bf16.gmra.mxu0 %v779
  %v1592 = vpop.f32.mrf.mxu0
  %v1593 = vadd.f32 %v1304, %v1592
  %v1594 = vpop.f32.mrf.mxu0
  %v1595 = vpop.f32.mrf.mxu0
  %v1596 = vadd.f32 %v1307, %v1595
  %v1597 = vpop.f32.mrf.mxu0
  %1598 = vmatprep.mubr.bf16.mxu0 %v784
  %1599 = vmatmul.mubr.bf16.gmra.mxu0 %v783
  %v1600 = vpop.f32.mrf.mxu0
  %v1601 = vadd.f32 %v1312, %v1600
  %v1602 = vpop.f32.mrf.mxu0
  %v1603 = vpop.f32.mrf.mxu0
  %v1604 = vadd.f32 %v1315, %v1603
  %v1605 = vpop.f32.mrf.mxu0
  %1606 = vmatprep.mubr.bf16.mxu0 %v788
  %1607 = vmatmul.mubr.bf16.gmra.mxu0 %v787
  %v1608 = vpop.f32.mrf.mxu0
  %v1609 = vadd.f32 %v1320, %v1608
  %v1610 = vpop.f32.mrf.mxu0
  %v1611 = vpop.f32.mrf.mxu0
  %v1612 = vadd.f32 %v1323, %v1611
  %v1613 = vpop.f32.mrf.mxu0
  %1614 = vmatprep.mubr.bf16.mxu0 %v792
  %1615 = vmatmul.mubr.bf16.gmra.mxu0 %v791
  %v1616 = vpop.f32.mrf.mxu0
  %v1617 = vadd.f32 %v1328, %v1616
  %v1618 = vpop.f32.mrf.mxu0
  %v1619 = vpop.f32.mrf.mxu0
  %v1620 = vadd.f32 %v1331, %v1619
  %v1621 = vpop.f32.mrf.mxu0
  %1622 = vmatprep.mubr.bf16.mxu0 %v796
  %1623 = vmatmul.mubr.bf16.gmra.mxu0 %v795
  %v1624 = vpop.f32.mrf.mxu0
  %v1625 = vadd.f32 %v1336, %v1624
  %v1626 = vpop.f32.mrf.mxu0
  %v1627 = vpop.f32.mrf.mxu0
  %v1628 = vadd.f32 %v1339, %v1627
  %v1629 = vpop.f32.mrf.mxu0
  %1630 = vmatprep.mubr.bf16.mxu0 %v800
  %1631 = vmatmul.mubr.bf16.gmra.mxu0 %v799
  %v1632 = vpop.f32.mrf.mxu0
  %v1633 = vadd.f32 %v1344, %v1632
  %v1634 = vpop.f32.mrf.mxu0
  %v1635 = vpop.f32.mrf.mxu0
  %v1636 = vadd.f32 %v1347, %v1635
  %v1637 = vpop.f32.mrf.mxu0
  %1638 = vmatprep.mubr.bf16.mxu0 %v804
  %1639 = vmatmul.mubr.bf16.gmra.mxu0 %v803
  %v1640 = vpop.f32.mrf.mxu0
  %v1641 = vadd.f32 %v1352, %v1640
  %v1642 = vpop.f32.mrf.mxu0
  %v1643 = vpop.f32.mrf.mxu0
  %v1644 = vadd.f32 %v1355, %v1643
  %v1645 = vpop.f32.mrf.mxu0
  %1646 = vmatprep.mubr.bf16.mxu0 %v808
  %1647 = vmatmul.mubr.bf16.gmra.mxu0 %v807
  %v1648 = vpop.f32.mrf.mxu0
  %v1649 = vadd.f32 %v1360, %v1648
  %v1650 = vpop.f32.mrf.mxu0
  %v1651 = vpop.f32.mrf.mxu0
  %v1652 = vadd.f32 %v1363, %v1651
  %v1653 = vpop.f32.mrf.mxu0
  %1654 = vmatprep.mubr.bf16.mxu0 %v812
  %1655 = vmatmul.mubr.bf16.gmra.mxu0 %v811
  %v1656 = vpop.f32.mrf.mxu0
  %v1657 = vadd.f32 %v1368, %v1656
  %v1658 = vpop.f32.mrf.mxu0
  %v1659 = vpop.f32.mrf.mxu0
  %v1660 = vadd.f32 %v1371, %v1659
  %v1661 = vpop.f32.mrf.mxu0
  %1662 = vmatprep.mubr.bf16.mxu0 %v816
  %1663 = vmatmul.mubr.bf16.gmra.mxu0 %v815
  %v1664 = vpop.f32.mrf.mxu0
  %v1665 = vadd.f32 %v1376, %v1664
  %v1666 = vpop.f32.mrf.mxu0
  %v1667 = vpop.f32.mrf.mxu0
  %v1668 = vadd.f32 %v1379, %v1667
  %v1669 = vpop.f32.mrf.mxu0
  %1670 = vmatprep.mubr.bf16.mxu0 %v820
  %1671 = vmatmul.mubr.bf16.gmra.mxu0 %v819
  %v1672 = vpop.f32.mrf.mxu0
  %v1673 = vadd.f32 %v1384, %v1672
  %v1674 = vpop.f32.mrf.mxu0
  %v1675 = vpop.f32.mrf.mxu0
  %v1676 = vadd.f32 %v1387, %v1675
  %v1677 = vpop.f32.mrf.mxu0
  %1678 = vmatprep.mubr.bf16.mxu0 %v824
  %1679 = vmatmul.mubr.bf16.gmra.mxu0 %v823
  %v1680 = vpop.f32.mrf.mxu0
  %v1681 = vadd.f32 %v1392, %v1680
  %v1682 = vpop.f32.mrf.mxu0
  %v1683 = vpop.f32.mrf.mxu0
  %v1684 = vadd.f32 %v1395, %v1683
  %v1685 = vpop.f32.mrf.mxu0
  %1686 = vmatprep.mubr.bf16.mxu0 %v828
  %1687 = vmatmul.mubr.bf16.gmra.mxu0 %v827
  %v1688 = vpop.f32.mrf.mxu0
  %v1689 = vadd.f32 %v1400, %v1688
  %v1690 = vpop.f32.mrf.mxu0
  %v1691 = vpop.f32.mrf.mxu0
  %v1692 = vadd.f32 %v1403, %v1691
  %v1693 = vpop.f32.mrf.mxu0
  %1694 = vmatprep.mubr.bf16.mxu0 %v832
  %1695 = vmatmul.mubr.bf16.gmra.mxu0 %v831
  %v1696 = vpop.f32.mrf.mxu0
  %v1697 = vadd.f32 %v1408, %v1696
  %v1698 = vpop.f32.mrf.mxu0
  %v1699 = vpop.f32.mrf.mxu0
  %v1700 = vadd.f32 %v1411, %v1699
  %v1701 = vpop.f32.mrf.mxu0
  %1702 = vmatprep.mubr.bf16.mxu0 %v836
  %1703 = vmatmul.mubr.bf16.gmra.mxu0 %v835
  %v1704 = vpop.f32.mrf.mxu0
  %v1705 = vadd.f32 %v1416, %v1704
  %v1706 = vpop.f32.mrf.mxu0
  %v1707 = vpop.f32.mrf.mxu0
  %v1708 = vadd.f32 %v1419, %v1707
  %v1709 = vpop.f32.mrf.mxu0
  %1710 = vmatprep.mubr.bf16.mxu0 %v840
  %1711 = vmatmul.mubr.bf16.gmra.mxu0 %v839
  %v1712 = vpop.f32.mrf.mxu0
  %v1713 = vadd.f32 %v1424, %v1712
  %v1714 = vpop.f32.mrf.mxu0
  %v1715 = vpop.f32.mrf.mxu0
  %v1716 = vadd.f32 %v1427, %v1715
  %v1717 = vpop.f32.mrf.mxu0
  %1718 = vmatprep.mubr.bf16.mxu0 %v844
  %1719 = vmatmul.mubr.bf16.gmra.mxu0 %v843
  %v1720 = vpop.f32.mrf.mxu0
  %v1721 = vadd.f32 %v1432, %v1720
  %v1722 = vpop.f32.mrf.mxu0
  %v1723 = vpop.f32.mrf.mxu0
  %v1724 = vadd.f32 %v1435, %v1723
  %v1725 = vpop.f32.mrf.mxu0
  %1726 = vmatprep.mubr.bf16.mxu0 %v848
  %1727 = vmatmul.mubr.bf16.gmra.mxu0 %v847
  %v1728 = vpop.f32.mrf.mxu0
  %v1729 = vadd.f32 %v1440, %v1728
  %v1730 = vpop.f32.mrf.mxu0
  %v1731 = vpop.f32.mrf.mxu0
  %v1732 = vadd.f32 %v1443, %v1731
  %v1733 = vpop.f32.mrf.mxu0
  %1734 = vmatprep.mubr.bf16.mxu0 %v852
  %1735 = vmatmul.mubr.bf16.gmra.mxu0 %v851
  %v1736 = vpop.f32.mrf.mxu0
  %v1737 = vadd.f32 %v1448, %v1736
  %v1738 = vpop.f32.mrf.mxu0
  %v1739 = vpop.f32.mrf.mxu0
  %v1740 = vadd.f32 %v1451, %v1739
  %v1741 = vpop.f32.mrf.mxu0
  %1742 = vmatprep.mubr.bf16.mxu0 %v856
  %1743 = vmatmul.mubr.bf16.gmra.mxu0 %v855
  %v1744 = vpop.f32.mrf.mxu0
  %v1745 = vadd.f32 %v1456, %v1744
  %v1746 = vpop.f32.mrf.mxu0
  %v1747 = vpop.f32.mrf.mxu0
  %v1748 = vadd.f32 %v1459, %v1747
  %v1749 = vpop.f32.mrf.mxu0
  %1750 = vmatprep.mubr.bf16.mxu0 %v860
  %1751 = vmatmul.mubr.bf16.gmra.mxu0 %v859
  %v1752 = vpop.f32.mrf.mxu0
  %v1753 = vadd.f32 %v1464, %v1752
  %v1754 = vpop.f32.mrf.mxu0
  %v1755 = vpop.f32.mrf.mxu0
  %v1756 = vadd.f32 %v1467, %v1755
  %v1757 = vpop.f32.mrf.mxu0
  %1758 = vdwg.mxu0
  %v1759 = vadd.f32 %v157, %v1505
  %v1760 = vadd.f32 %v158, %v1508
  %v1761 = vadd.f32 %v159, %v1513
  %v1762 = vadd.f32 %v160, %v1516
  %v1763 = vadd.f32 %v161, %v1521
  %v1764 = vadd.f32 %v162, %v1524
  %v1765 = vadd.f32 %v163, %v1529
  %v1766 = vadd.f32 %v164, %v1532
  %v1767 = vadd.f32 %v165, %v1537
  %v1768 = vadd.f32 %v166, %v1540
  %v1769 = vadd.f32 %v167, %v1545
  %v1770 = vadd.f32 %v168, %v1548
  %v1771 = vadd.f32 %v169, %v1553
  %v1772 = vadd.f32 %v170, %v1556
  %v1773 = vadd.f32 %v171, %v1561
  %v1774 = vadd.f32 %v172, %v1564
  %v1775 = vadd.f32 %v173, %v1569
  %v1776 = vadd.f32 %v174, %v1572
  %v1777 = vadd.f32 %v175, %v1577
  %v1778 = vadd.f32 %v176, %v1580
  %v1779 = vadd.f32 %v177, %v1585
  %v1780 = vadd.f32 %v178, %v1588
  %v1781 = vadd.f32 %v179, %v1593
  %v1782 = vadd.f32 %v180, %v1596
  %v1783 = vadd.f32 %v181, %v1601
  %v1784 = vadd.f32 %v182, %v1604
  %v1785 = vadd.f32 %v183, %v1609
  %v1786 = vadd.f32 %v184, %v1612
  %v1787 = vadd.f32 %v185, %v1617
  %v1788 = vadd.f32 %v186, %v1620
  %v1789 = vadd.f32 %v187, %v1625
  %v1790 = vadd.f32 %v188, %v1628
  %v1791 = vadd.f32 %v189, %v1633
  %v1792 = vadd.f32 %v190, %v1636
  %v1793 = vadd.f32 %v191, %v1641
  %v1794 = vadd.f32 %v192, %v1644
  %v1795 = vadd.f32 %v193, %v1649
  %v1796 = vadd.f32 %v194, %v1652
  %v1797 = vadd.f32 %v195, %v1657
  %v1798 = vadd.f32 %v196, %v1660
  %v1799 = vadd.f32 %v197, %v1665
  %v1800 = vadd.f32 %v198, %v1668
  %v1801 = vadd.f32 %v199, %v1673
  %v1802 = vadd.f32 %v200, %v1676
  %v1803 = vadd.f32 %v201, %v1681
  %v1804 = vadd.f32 %v202, %v1684
  %v1805 = vadd.f32 %v203, %v1689
  %v1806 = vadd.f32 %v204, %v1692
  %v1807 = vadd.f32 %v205, %v1697
  %v1808 = vadd.f32 %v206, %v1700
  %v1809 = vadd.f32 %v207, %v1705
  %v1810 = vadd.f32 %v208, %v1708
  %v1811 = vadd.f32 %v209, %v1713
  %v1812 = vadd.f32 %v210, %v1716
  %v1813 = vadd.f32 %v211, %v1721
  %v1814 = vadd.f32 %v212, %v1724
  %v1815 = vadd.f32 %v213, %v1729
  %v1816 = vadd.f32 %v214, %v1732
  %v1817 = vadd.f32 %v215, %v1737
  %v1818 = vadd.f32 %v216, %v1740
  %v1819 = vadd.f32 %v217, %v1745
  %v1820 = vadd.f32 %v218, %v1748
  %v1821 = vadd.f32 %v219, %v1753
  %v1822 = vadd.f32 %v220, %v1756
  %1823 = vst [vmem:[%s6] sm:$0xff] %v1759
  %1824 = vst [vmem:[%s6 + $0x8] sm:$0xff] %v1760
  %1825 = vst [vmem:[%s6 + $0x10] sm:$0xff] %v1761
  %1826 = vst [vmem:[%s6 + $0x18] sm:$0xff] %v1762
  %1827 = vst [vmem:[%s6 + $0x20] sm:$0xff] %v1763
  %1828 = vst [vmem:[%s6 + $0x28] sm:$0xff] %v1764
  %1829 = vst [vmem:[%s6 + $0x30] sm:$0xff] %v1765
  %1830 = vst [vmem:[%s6 + $0x38] sm:$0xff] %v1766
  %1831 = vst [vmem:[%s6 + $0x40] sm:$0xff] %v1767
  %1832 = vst [vmem:[%s6 + $0x48] sm:$0xff] %v1768
  %1833 = vst [vmem:[%s6 + $0x50] sm:$0xff] %v1769
  %1834 = vst [vmem:[%s6 + $0x58] sm:$0xff] %v1770
  %1835 = vst [vmem:[%s6 + $0x60] sm:$0xff] %v1771
  %1836 = vst [vmem:[%s6 + $0x68] sm:$0xff] %v1772
  %1837 = vst [vmem:[%s6 + $0x70] sm:$0xff] %v1773
  %1838 = vst [vmem:[%s6 + $0x78] sm:$0xff] %v1774
  %1839 = vst [vmem:[%s6 + $0x80] sm:$0xff] %v1775
  %1840 = vst [vmem:[%s6 + $0x88] sm:$0xff] %v1776
  %1841 = vst [vmem:[%s6 + $0x90] sm:$0xff] %v1777
  %1842 = vst [vmem:[%s6 + $0x98] sm:$0xff] %v1778
  %1843 = vst [vmem:[%s6 + $0xa0] sm:$0xff] %v1779
  %1844 = vst [vmem:[%s6 + $0xa8] sm:$0xff] %v1780
  %1845 = vst [vmem:[%s6 + $0xb0] sm:$0xff] %v1781
  %1846 = vst [vmem:[%s6 + $0xb8] sm:$0xff] %v1782
  %1847 = vst [vmem:[%s6 + $0xc0] sm:$0xff] %v1783
  %1848 = vst [vmem:[%s6 + $0xc8] sm:$0xff] %v1784
  %1849 = vst [vmem:[%s6 + $0xd0] sm:$0xff] %v1785
  %1850 = vst [vmem:[%s6 + $0xd8] sm:$0xff] %v1786
  %1851 = vst [vmem:[%s6 + $0xe0] sm:$0xff] %v1787
  %1852 = vst [vmem:[%s6 + $0xe8] sm:$0xff] %v1788
  %1853 = vst [vmem:[%s6 + $0xf0] sm:$0xff] %v1789
  %1854 = vst [vmem:[%s6 + $0xf8] sm:$0xff] %v1790
  %1855 = vst [vmem:[%s6 + $0x100] sm:$0xff] %v1791
  %1856 = vst [vmem:[%s6 + $0x108] sm:$0xff] %v1792
  %1857 = vst [vmem:[%s6 + $0x110] sm:$0xff] %v1793
  %1858 = vst [vmem:[%s6 + $0x118] sm:$0xff] %v1794
  %1859 = vst [vmem:[%s6 + $0x120] sm:$0xff] %v1795
  %1860 = vst [vmem:[%s6 + $0x128] sm:$0xff] %v1796
  %1861 = vst [vmem:[%s6 + $0x130] sm:$0xff] %v1797
  %1862 = vst [vmem:[%s6 + $0x138] sm:$0xff] %v1798
  %1863 = vst [vmem:[%s6 + $0x140] sm:$0xff] %v1799
  %1864 = vst [vmem:[%s6 + $0x148] sm:$0xff] %v1800
  %1865 = vst [vmem:[%s6 + $0x150] sm:$0xff] %v1801
  %1866 = vst [vmem:[%s6 + $0x158] sm:$0xff] %v1802
  %1867 = vst [vmem:[%s6 + $0x160] sm:$0xff] %v1803
  %1868 = vst [vmem:[%s6 + $0x168] sm:$0xff] %v1804
  %1869 = vst [vmem:[%s6 + $0x170] sm:$0xff] %v1805
  %1870 = vst [vmem:[%s6 + $0x178] sm:$0xff] %v1806
  %1871 = vst [vmem:[%s6 + $0x180] sm:$0xff] %v1807
  %1872 = vst [vmem:[%s6 + $0x188] sm:$0xff] %v1808
  %1873 = vst [vmem:[%s6 + $0x190] sm:$0xff] %v1809
  %1874 = vst [vmem:[%s6 + $0x198] sm:$0xff] %v1810
  %1875 = vst [vmem:[%s6 + $0x1a0] sm:$0xff] %v1811
  %1876 = vst [vmem:[%s6 + $0x1a8] sm:$0xff] %v1812
  %1877 = vst [vmem:[%s6 + $0x1b0] sm:$0xff] %v1813
  %1878 = vst [vmem:[%s6 + $0x1b8] sm:$0xff] %v1814
  %1879 = vst [vmem:[%s6 + $0x1c0] sm:$0xff] %v1815
  %1880 = vst [vmem:[%s6 + $0x1c8] sm:$0xff] %v1816
  %1881 = vst [vmem:[%s6 + $0x1d0] sm:$0xff] %v1817
  %1882 = vst [vmem:[%s6 + $0x1d8] sm:$0xff] %v1818
  %1883 = vst [vmem:[%s6 + $0x1e0] sm:$0xff] %v1819
  %1884 = vst [vmem:[%s6 + $0x1e8] sm:$0xff] %v1820
  %1885 = vst [vmem:[%s6 + $0x1f0] sm:$0xff] %v1821
  %1886 = vst [vmem:[%s6 + $0x1f8] sm:$0xff] %v1822
  // Predicated region
  $region30: #{resblock_forward.1} parent=0 // pred_check
    %p1887 = pneg %p25
  $region31: #{resblock_forward.1} parent=0 // pred_check_branch
    %1889 = sbr.rel (%p1887) target = $region33
  $region32: #{resblock_forward.1} parent=0 // pred_region
    %v1890 = vld [vmem:[%s6] sm:$0xff]
    %v1891 = vld [vmem:[%s6 + $0x8] sm:$0xff]
    %v1892 = vld [vmem:[%s6 + $0x10] sm:$0xff]
    %v1893 = vld [vmem:[%s6 + $0x18] sm:$0xff]
    %v1894 = vld [vmem:[%s6 + $0x20] sm:$0xff]
    %v1895 = vld [vmem:[%s6 + $0x28] sm:$0xff]
    %v1896 = vld [vmem:[%s6 + $0x30] sm:$0xff]
    %v1897 = vld [vmem:[%s6 + $0x38] sm:$0xff]
    %v1898 = vld [vmem:[%s6 + $0x40] sm:$0xff]
    %v1899 = vld [vmem:[%s6 + $0x48] sm:$0xff]
    %v1900 = vld [vmem:[%s6 + $0x50] sm:$0xff]
    %v1901 = vld [vmem:[%s6 + $0x58] sm:$0xff]
    %v1902 = vld [vmem:[%s6 + $0x60] sm:$0xff]
    %v1903 = vld [vmem:[%s6 + $0x68] sm:$0xff]
    %v1904 = vld [vmem:[%s6 + $0x70] sm:$0xff]
    %v1905 = vld [vmem:[%s6 + $0x78] sm:$0xff]
    %v1906 = vld [vmem:[%s6 + $0x80] sm:$0xff]
    %v1907 = vld [vmem:[%s6 + $0x88] sm:$0xff]
    %v1908 = vld [vmem:[%s6 + $0x90] sm:$0xff]
    %v1909 = vld [vmem:[%s6 + $0x98] sm:$0xff]
    %v1910 = vld [vmem:[%s6 + $0xa0] sm:$0xff]
    %v1911 = vld [vmem:[%s6 + $0xa8] sm:$0xff]
    %v1912 = vld [vmem:[%s6 + $0xb0] sm:$0xff]
    %v1913 = vld [vmem:[%s6 + $0xb8] sm:$0xff]
    %v1914 = vld [vmem:[%s6 + $0xc0] sm:$0xff]
    %v1915 = vld [vmem:[%s6 + $0xc8] sm:$0xff]
    %v1916 = vld [vmem:[%s6 + $0xd0] sm:$0xff]
    %v1917 = vld [vmem:[%s6 + $0xd8] sm:$0xff]
    %v1918 = vld [vmem:[%s6 + $0xe0] sm:$0xff]
    %v1919 = vld [vmem:[%s6 + $0xe8] sm:$0xff]
    %v1920 = vld [vmem:[%s6 + $0xf0] sm:$0xff]
    %v1921 = vld [vmem:[%s6 + $0xf8] sm:$0xff]
    %v1922 = vld [vmem:[%s6 + $0x100] sm:$0xff]
    %v1923 = vld [vmem:[%s6 + $0x108] sm:$0xff]
    %v1924 = vld [vmem:[%s6 + $0x110] sm:$0xff]
    %v1925 = vld [vmem:[%s6 + $0x118] sm:$0xff]
    %v1926 = vld [vmem:[%s6 + $0x120] sm:$0xff]
    %v1927 = vld [vmem:[%s6 + $0x128] sm:$0xff]
    %v1928 = vld [vmem:[%s6 + $0x130] sm:$0xff]
    %v1929 = vld [vmem:[%s6 + $0x138] sm:$0xff]
    %v1930 = vld [vmem:[%s6 + $0x140] sm:$0xff]
    %v1931 = vld [vmem:[%s6 + $0x148] sm:$0xff]
    %v1932 = vld [vmem:[%s6 + $0x150] sm:$0xff]
    %v1933 = vld [vmem:[%s6 + $0x158] sm:$0xff]
    %v1934 = vld [vmem:[%s6 + $0x160] sm:$0xff]
    %v1935 = vld [vmem:[%s6 + $0x168] sm:$0xff]
    %v1936 = vld [vmem:[%s6 + $0x170] sm:$0xff]
    %v1937 = vld [vmem:[%s6 + $0x178] sm:$0xff]
    %v1938 = vld [vmem:[%s6 + $0x180] sm:$0xff]
    %v1939 = vld [vmem:[%s6 + $0x188] sm:$0xff]
    %v1940 = vld [vmem:[%s6 + $0x190] sm:$0xff]
    %v1941 = vld [vmem:[%s6 + $0x198] sm:$0xff]
    %v1942 = vld [vmem:[%s6 + $0x1a0] sm:$0xff]
    %v1943 = vld [vmem:[%s6 + $0x1a8] sm:$0xff]
    %v1944 = vld [vmem:[%s6 + $0x1b0] sm:$0xff]
    %v1945 = vld [vmem:[%s6 + $0x1b8] sm:$0xff]
    %v1946 = vld [vmem:[%s6 + $0x1c0] sm:$0xff]
    %v1947 = vld [vmem:[%s6 + $0x1c8] sm:$0xff]
    %v1948 = vld [vmem:[%s6 + $0x1d0] sm:$0xff]
    %v1949 = vld [vmem:[%s6 + $0x1d8] sm:$0xff]
    %v1950 = vld [vmem:[%s6 + $0x1e0] sm:$0xff]
    %v1951 = vld [vmem:[%s6 + $0x1e8] sm:$0xff]
    %v1952 = vld [vmem:[%s6 + $0x1f0] sm:$0xff]
    %v1953 = vld [vmem:[%s6 + $0x1f8] sm:$0xff]
    %v1954 = vpack.c.bf16 %v1891, %v1890
    %v1955 = vpack.c.bf16 %v1893, %v1892
    %v1956 = vpack.c.bf16 %v1895, %v1894
    %v1957 = vpack.c.bf16 %v1897, %v1896
    %v1958 = vpack.c.bf16 %v1899, %v1898
    %v1959 = vpack.c.bf16 %v1901, %v1900
    %v1960 = vpack.c.bf16 %v1903, %v1902
    %v1961 = vpack.c.bf16 %v1905, %v1904
    %v1962 = vpack.c.bf16 %v1907, %v1906
    %v1963 = vpack.c.bf16 %v1909, %v1908
    %v1964 = vpack.c.bf16 %v1911, %v1910
    %v1965 = vpack.c.bf16 %v1913, %v1912
    %v1966 = vpack.c.bf16 %v1915, %v1914
    %v1967 = vpack.c.bf16 %v1917, %v1916
    %v1968 = vpack.c.bf16 %v1919, %v1918
    %v1969 = vpack.c.bf16 %v1921, %v1920
    %v1970 = vpack.c.bf16 %v1923, %v1922
    %v1971 = vpack.c.bf16 %v1925, %v1924
    %v1972 = vpack.c.bf16 %v1927, %v1926
    %v1973 = vpack.c.bf16 %v1929, %v1928
    %v1974 = vpack.c.bf16 %v1931, %v1930
    %v1975 = vpack.c.bf16 %v1933, %v1932
    %v1976 = vpack.c.bf16 %v1935, %v1934
    %v1977 = vpack.c.bf16 %v1937, %v1936
    %v1978 = vpack.c.bf16 %v1939, %v1938
    %v1979 = vpack.c.bf16 %v1941, %v1940
    %v1980 = vpack.c.bf16 %v1943, %v1942
    %v1981 = vpack.c.bf16 %v1945, %v1944
    %v1982 = vpack.c.bf16 %v1947, %v1946
    %v1983 = vpack.c.bf16 %v1949, %v1948
    %v1984 = vpack.c.bf16 %v1951, %v1950
    %v1985 = vpack.c.bf16 %v1953, %v1952
    %v1986 = vld [vmem:[%s3] sm:$0xf]
    %v1987 = vld [vmem:[%s3 + $0x4] sm:$0xf]
    %v1988 = vld [vmem:[%s3 + $0x8] sm:$0xf]
    %v1989 = vld [vmem:[%s3 + $0xc] sm:$0xf]
    %v1990 = vld [vmem:[%s3 + $0x10] sm:$0xf]
    %v1991 = vld [vmem:[%s3 + $0x14] sm:$0xf]
    %v1992 = vld [vmem:[%s3 + $0x18] sm:$0xf]
    %v1993 = vld [vmem:[%s3 + $0x1c] sm:$0xf]
    %v1994 = vld [vmem:[%s3 + $0x20] sm:$0xf]
    %v1995 = vld [vmem:[%s3 + $0x24] sm:$0xf]
    %v1996 = vld [vmem:[%s3 + $0x28] sm:$0xf]
    %v1997 = vld [vmem:[%s3 + $0x2c] sm:$0xf]
    %v1998 = vld [vmem:[%s3 + $0x30] sm:$0xf]
    %v1999 = vld [vmem:[%s3 + $0x34] sm:$0xf]
    %v2000 = vld [vmem:[%s3 + $0x38] sm:$0xf]
    %v2001 = vld [vmem:[%s3 + $0x3c] sm:$0xf]
    %v2002 = vld [vmem:[%s4] sm:$0x1]
    %v2004 = vlaneseq
    %v2005 = vshrl.u32 %v2004, 7
    %v2006 = vsub.s32 0, %v2005
    %v2007 = vrot.slane %v2002, %v2006
    %v2025 = vunpack.c.l.b16 %v1986
    %v2026 = vunpack.c.l.b16 %v1987
    %v2027 = vunpack.c.l.b16 %v1988
    %v2028 = vunpack.c.l.b16 %v1989
    %v2029 = vunpack.c.l.b16 %v1990
    %v2030 = vunpack.c.l.b16 %v1991
    %v2031 = vunpack.c.l.b16 %v1992
    %v2032 = vunpack.c.l.b16 %v1993
    %v2033 = vunpack.c.l.b16 %v1994
    %v2034 = vunpack.c.l.b16 %v1995
    %v2035 = vunpack.c.l.b16 %v1996
    %v2036 = vunpack.c.l.b16 %v1997
    %v2037 = vunpack.c.l.b16 %v1998
    %v2038 = vunpack.c.l.b16 %v1999
    %v2039 = vunpack.c.l.b16 %v2000
    %v2040 = vunpack.c.l.b16 %v2001
    %v2041 = vpack.c.b16 %v2026, %v2025
    %v2042 = vpack.c.b16 %v2028, %v2027
    %v2043 = vpack.c.b16 %v2030, %v2029
    %v2044 = vpack.c.b16 %v2032, %v2031
    %v2045 = vpack.c.b16 %v2034, %v2033
    %v2046 = vpack.c.b16 %v2036, %v2035
    %v2047 = vpack.c.b16 %v2038, %v2037
    %v2048 = vpack.c.b16 %v2040, %v2039
    %2057 = vmatprep.subr.bf16.mxu0 0
    %2058 = vmatpush1.bf16.msra.mxu0 %v2048
    %2059 = vmatprep.subr.bf16.mxu0 0
    %2060 = vmatpush1.bf16.msra.mxu0 %v2047
    %2061 = vmatprep.subr.bf16.mxu0 0
    %2062 = vmatpush1.bf16.msra.mxu0 %v2046
    %2063 = vmatprep.subr.bf16.mxu0 0
    %2064 = vmatpush1.bf16.msra.mxu0 %v2045
    %2065 = vmatprep.subr.bf16.mxu0 0
    %2066 = vmatpush1.bf16.msra.mxu0 %v2044
    %2067 = vmatprep.subr.bf16.mxu0 0
    %2068 = vmatpush1.bf16.msra.mxu0 %v2043
    %2069 = vmatprep.subr.bf16.mxu0 0
    %2070 = vmatpush1.bf16.msra.mxu0 %v2042
    %2071 = vmatprep.subr.bf16.mxu0 0
    %2072 = vmatpush1.bf16.msra.mxu0 %v2041
    %2073 = vmatprep.subr.bf16.mxu0 0
    %2074 = vmatpush2.bf16.msra.mxu0 0
    %2075 = vmatprep.subr.bf16.mxu0 0
    %2076 = vmatpush2.bf16.msra.mxu0 0
    %2077 = vmatprep.subr.bf16.mxu0 0
    %2078 = vmatpush2.bf16.msra.mxu0 0
    %2079 = vmatprep.subr.bf16.mxu0 0
    %2080 = vmatpush2.bf16.msra.mxu0 0
    %2081 = vmatprep.subr.bf16.mxu0 0
    %2082 = vmatpush2.bf16.msra.mxu0 0
    %2083 = vmatprep.subr.bf16.mxu0 0
    %2084 = vmatpush2.bf16.msra.mxu0 0
    %2085 = vmatprep.subr.bf16.mxu0 0
    %2086 = vmatpush2.bf16.msra.mxu0 0
    %2087 = vmatprep.subr.bf16.mxu0 0
    %2088 = vmatpush2.bf16.msra.mxu0 0
    %2089 = vmatprep.mubr.bf16.mxu0 0
    %2090 = vmatmul.mubr.bf16.gmra.mxu0 %v1954
    %v2091 = vpop.f32.mrf.mxu0
    %v2092 = vadd.f32 %v2007, %v2091
    %v2093 = vpop.f32.mrf.mxu0
    %v2094 = vpop.f32.mrf.mxu0
    %v2095 = vadd.f32 %v2007, %v2094
    %v2096 = vpop.f32.mrf.mxu0
    %2097 = vmatprep.mubr.bf16.mxu0 0
    %2098 = vmatmul.mubr.bf16.gmra.mxu0 %v1955
    %v2099 = vpop.f32.mrf.mxu0
    %v2100 = vadd.f32 %v2007, %v2099
    %v2101 = vpop.f32.mrf.mxu0
    %v2102 = vpop.f32.mrf.mxu0
    %v2103 = vadd.f32 %v2007, %v2102
    %v2104 = vpop.f32.mrf.mxu0
    %2105 = vmatprep.mubr.bf16.mxu0 0
    %2106 = vmatmul.mubr.bf16.gmra.mxu0 %v1956
    %v2107 = vpop.f32.mrf.mxu0
    %v2108 = vadd.f32 %v2007, %v2107
    %v2109 = vpop.f32.mrf.mxu0
    %v2110 = vpop.f32.mrf.mxu0
    %v2111 = vadd.f32 %v2007, %v2110
    %v2112 = vpop.f32.mrf.mxu0
    %2113 = vmatprep.mubr.bf16.mxu0 0
    %2114 = vmatmul.mubr.bf16.gmra.mxu0 %v1957
    %v2115 = vpop.f32.mrf.mxu0
    %v2116 = vadd.f32 %v2007, %v2115
    %v2117 = vpop.f32.mrf.mxu0
    %v2118 = vpop.f32.mrf.mxu0
    %v2119 = vadd.f32 %v2007, %v2118
    %v2120 = vpop.f32.mrf.mxu0
    %2121 = vmatprep.mubr.bf16.mxu0 0
    %2122 = vmatmul.mubr.bf16.gmra.mxu0 %v1958
    %v2123 = vpop.f32.mrf.mxu0
    %v2124 = vadd.f32 %v2007, %v2123
    %v2125 = vpop.f32.mrf.mxu0
    %v2126 = vpop.f32.mrf.mxu0
    %v2127 = vadd.f32 %v2007, %v2126
    %v2128 = vpop.f32.mrf.mxu0
    %2129 = vmatprep.mubr.bf16.mxu0 0
    %2130 = vmatmul.mubr.bf16.gmra.mxu0 %v1959
    %v2131 = vpop.f32.mrf.mxu0
    %v2132 = vadd.f32 %v2007, %v2131
    %v2133 = vpop.f32.mrf.mxu0
    %v2134 = vpop.f32.mrf.mxu0
    %v2135 = vadd.f32 %v2007, %v2134
    %v2136 = vpop.f32.mrf.mxu0
    %2137 = vmatprep.mubr.bf16.mxu0 0
    %2138 = vmatmul.mubr.bf16.gmra.mxu0 %v1960
    %v2139 = vpop.f32.mrf.mxu0
    %v2140 = vadd.f32 %v2007, %v2139
    %v2141 = vpop.f32.mrf.mxu0
    %v2142 = vpop.f32.mrf.mxu0
    %v2143 = vadd.f32 %v2007, %v2142
    %v2144 = vpop.f32.mrf.mxu0
    %2145 = vmatprep.mubr.bf16.mxu0 0
    %2146 = vmatmul.mubr.bf16.gmra.mxu0 %v1961
    %v2147 = vpop.f32.mrf.mxu0
    %v2148 = vadd.f32 %v2007, %v2147
    %v2149 = vpop.f32.mrf.mxu0
    %v2150 = vpop.f32.mrf.mxu0
    %v2151 = vadd.f32 %v2007, %v2150
    %v2152 = vpop.f32.mrf.mxu0
    %2153 = vmatprep.mubr.bf16.mxu0 0
    %2154 = vmatmul.mubr.bf16.gmra.mxu0 %v1962
    %v2155 = vpop.f32.mrf.mxu0
    %v2156 = vadd.f32 %v2007, %v2155
    %v2157 = vpop.f32.mrf.mxu0
    %v2158 = vpop.f32.mrf.mxu0
    %v2159 = vadd.f32 %v2007, %v2158
    %v2160 = vpop.f32.mrf.mxu0
    %2161 = vmatprep.mubr.bf16.mxu0 0
    %2162 = vmatmul.mubr.bf16.gmra.mxu0 %v1963
    %v2163 = vpop.f32.mrf.mxu0
    %v2164 = vadd.f32 %v2007, %v2163
    %v2165 = vpop.f32.mrf.mxu0
    %v2166 = vpop.f32.mrf.mxu0
    %v2167 = vadd.f32 %v2007, %v2166
    %v2168 = vpop.f32.mrf.mxu0
    %2169 = vmatprep.mubr.bf16.mxu0 0
    %2170 = vmatmul.mubr.bf16.gmra.mxu0 %v1964
    %v2171 = vpop.f32.mrf.mxu0
    %v2172 = vadd.f32 %v2007, %v2171
    %v2173 = vpop.f32.mrf.mxu0
    %v2174 = vpop.f32.mrf.mxu0
    %v2175 = vadd.f32 %v2007, %v2174
    %v2176 = vpop.f32.mrf.mxu0
    %2177 = vmatprep.mubr.bf16.mxu0 0
    %2178 = vmatmul.mubr.bf16.gmra.mxu0 %v1965
    %v2179 = vpop.f32.mrf.mxu0
    %v2180 = vadd.f32 %v2007, %v2179
    %v2181 = vpop.f32.mrf.mxu0
    %v2182 = vpop.f32.mrf.mxu0
    %v2183 = vadd.f32 %v2007, %v2182
    %v2184 = vpop.f32.mrf.mxu0
    %2185 = vmatprep.mubr.bf16.mxu0 0
    %2186 = vmatmul.mubr.bf16.gmra.mxu0 %v1966
    %v2187 = vpop.f32.mrf.mxu0
    %v2188 = vadd.f32 %v2007, %v2187
    %v2189 = vpop.f32.mrf.mxu0
    %v2190 = vpop.f32.mrf.mxu0
    %v2191 = vadd.f32 %v2007, %v2190
    %v2192 = vpop.f32.mrf.mxu0
    %2193 = vmatprep.mubr.bf16.mxu0 0
    %2194 = vmatmul.mubr.bf16.gmra.mxu0 %v1967
    %v2195 = vpop.f32.mrf.mxu0
    %v2196 = vadd.f32 %v2007, %v2195
    %v2197 = vpop.f32.mrf.mxu0
    %v2198 = vpop.f32.mrf.mxu0
    %v2199 = vadd.f32 %v2007, %v2198
    %v2200 = vpop.f32.mrf.mxu0
    %2201 = vmatprep.mubr.bf16.mxu0 0
    %2202 = vmatmul.mubr.bf16.gmra.mxu0 %v1968
    %v2203 = vpop.f32.mrf.mxu0
    %v2204 = vadd.f32 %v2007, %v2203
    %v2205 = vpop.f32.mrf.mxu0
    %v2206 = vpop.f32.mrf.mxu0
    %v2207 = vadd.f32 %v2007, %v2206
    %v2208 = vpop.f32.mrf.mxu0
    %2209 = vmatprep.mubr.bf16.mxu0 0
    %2210 = vmatmul.mubr.bf16.gmra.mxu0 %v1969
    %v2211 = vpop.f32.mrf.mxu0
    %v2212 = vadd.f32 %v2007, %v2211
    %v2213 = vpop.f32.mrf.mxu0
    %v2214 = vpop.f32.mrf.mxu0
    %v2215 = vadd.f32 %v2007, %v2214
    %v2216 = vpop.f32.mrf.mxu0
    %2217 = vmatprep.mubr.bf16.mxu0 0
    %2218 = vmatmul.mubr.bf16.gmra.mxu0 %v1970
    %v2219 = vpop.f32.mrf.mxu0
    %v2220 = vadd.f32 %v2007, %v2219
    %v2221 = vpop.f32.mrf.mxu0
    %v2222 = vpop.f32.mrf.mxu0
    %v2223 = vadd.f32 %v2007, %v2222
    %v2224 = vpop.f32.mrf.mxu0
    %2225 = vmatprep.mubr.bf16.mxu0 0
    %2226 = vmatmul.mubr.bf16.gmra.mxu0 %v1971
    %v2227 = vpop.f32.mrf.mxu0
    %v2228 = vadd.f32 %v2007, %v2227
    %v2229 = vpop.f32.mrf.mxu0
    %v2230 = vpop.f32.mrf.mxu0
    %v2231 = vadd.f32 %v2007, %v2230
    %v2232 = vpop.f32.mrf.mxu0
    %2233 = vmatprep.mubr.bf16.mxu0 0
    %2234 = vmatmul.mubr.bf16.gmra.mxu0 %v1972
    %v2235 = vpop.f32.mrf.mxu0
    %v2236 = vadd.f32 %v2007, %v2235
    %v2237 = vpop.f32.mrf.mxu0
    %v2238 = vpop.f32.mrf.mxu0
    %v2239 = vadd.f32 %v2007, %v2238
    %v2240 = vpop.f32.mrf.mxu0
    %2241 = vmatprep.mubr.bf16.mxu0 0
    %2242 = vmatmul.mubr.bf16.gmra.mxu0 %v1973
    %v2243 = vpop.f32.mrf.mxu0
    %v2244 = vadd.f32 %v2007, %v2243
    %v2245 = vpop.f32.mrf.mxu0
    %v2246 = vpop.f32.mrf.mxu0
    %v2247 = vadd.f32 %v2007, %v2246
    %v2248 = vpop.f32.mrf.mxu0
    %2249 = vmatprep.mubr.bf16.mxu0 0
    %2250 = vmatmul.mubr.bf16.gmra.mxu0 %v1974
    %v2251 = vpop.f32.mrf.mxu0
    %v2252 = vadd.f32 %v2007, %v2251
    %v2253 = vpop.f32.mrf.mxu0
    %v2254 = vpop.f32.mrf.mxu0
    %v2255 = vadd.f32 %v2007, %v2254
    %v2256 = vpop.f32.mrf.mxu0
    %2257 = vmatprep.mubr.bf16.mxu0 0
    %2258 = vmatmul.mubr.bf16.gmra.mxu0 %v1975
    %v2259 = vpop.f32.mrf.mxu0
    %v2260 = vadd.f32 %v2007, %v2259
    %v2261 = vpop.f32.mrf.mxu0
    %v2262 = vpop.f32.mrf.mxu0
    %v2263 = vadd.f32 %v2007, %v2262
    %v2264 = vpop.f32.mrf.mxu0
    %2265 = vmatprep.mubr.bf16.mxu0 0
    %2266 = vmatmul.mubr.bf16.gmra.mxu0 %v1976
    %v2267 = vpop.f32.mrf.mxu0
    %v2268 = vadd.f32 %v2007, %v2267
    %v2269 = vpop.f32.mrf.mxu0
    %v2270 = vpop.f32.mrf.mxu0
    %v2271 = vadd.f32 %v2007, %v2270
    %v2272 = vpop.f32.mrf.mxu0
    %2273 = vmatprep.mubr.bf16.mxu0 0
    %2274 = vmatmul.mubr.bf16.gmra.mxu0 %v1977
    %v2275 = vpop.f32.mrf.mxu0
    %v2276 = vadd.f32 %v2007, %v2275
    %v2277 = vpop.f32.mrf.mxu0
    %v2278 = vpop.f32.mrf.mxu0
    %v2279 = vadd.f32 %v2007, %v2278
    %v2280 = vpop.f32.mrf.mxu0
    %2281 = vmatprep.mubr.bf16.mxu0 0
    %2282 = vmatmul.mubr.bf16.gmra.mxu0 %v1978
    %v2283 = vpop.f32.mrf.mxu0
    %v2284 = vadd.f32 %v2007, %v2283
    %v2285 = vpop.f32.mrf.mxu0
    %v2286 = vpop.f32.mrf.mxu0
    %v2287 = vadd.f32 %v2007, %v2286
    %v2288 = vpop.f32.mrf.mxu0
    %2289 = vmatprep.mubr.bf16.mxu0 0
    %2290 = vmatmul.mubr.bf16.gmra.mxu0 %v1979
    %v2291 = vpop.f32.mrf.mxu0
    %v2292 = vadd.f32 %v2007, %v2291
    %v2293 = vpop.f32.mrf.mxu0
    %v2294 = vpop.f32.mrf.mxu0
    %v2295 = vadd.f32 %v2007, %v2294
    %v2296 = vpop.f32.mrf.mxu0
    %2297 = vmatprep.mubr.bf16.mxu0 0
    %2298 = vmatmul.mubr.bf16.gmra.mxu0 %v1980
    %v2299 = vpop.f32.mrf.mxu0
    %v2300 = vadd.f32 %v2007, %v2299
    %v2301 = vpop.f32.mrf.mxu0
    %v2302 = vpop.f32.mrf.mxu0
    %v2303 = vadd.f32 %v2007, %v2302
    %v2304 = vpop.f32.mrf.mxu0
    %2305 = vmatprep.mubr.bf16.mxu0 0
    %2306 = vmatmul.mubr.bf16.gmra.mxu0 %v1981
    %v2307 = vpop.f32.mrf.mxu0
    %v2308 = vadd.f32 %v2007, %v2307
    %v2309 = vpop.f32.mrf.mxu0
    %v2310 = vpop.f32.mrf.mxu0
    %v2311 = vadd.f32 %v2007, %v2310
    %v2312 = vpop.f32.mrf.mxu0
    %2313 = vmatprep.mubr.bf16.mxu0 0
    %2314 = vmatmul.mubr.bf16.gmra.mxu0 %v1982
    %v2315 = vpop.f32.mrf.mxu0
    %v2316 = vadd.f32 %v2007, %v2315
    %v2317 = vpop.f32.mrf.mxu0
    %v2318 = vpop.f32.mrf.mxu0
    %v2319 = vadd.f32 %v2007, %v2318
    %v2320 = vpop.f32.mrf.mxu0
    %2321 = vmatprep.mubr.bf16.mxu0 0
    %2322 = vmatmul.mubr.bf16.gmra.mxu0 %v1983
    %v2323 = vpop.f32.mrf.mxu0
    %v2324 = vadd.f32 %v2007, %v2323
    %v2325 = vpop.f32.mrf.mxu0
    %v2326 = vpop.f32.mrf.mxu0
    %v2327 = vadd.f32 %v2007, %v2326
    %v2328 = vpop.f32.mrf.mxu0
    %2329 = vmatprep.mubr.bf16.mxu0 0
    %2330 = vmatmul.mubr.bf16.gmra.mxu0 %v1984
    %v2331 = vpop.f32.mrf.mxu0
    %v2332 = vadd.f32 %v2007, %v2331
    %v2333 = vpop.f32.mrf.mxu0
    %v2334 = vpop.f32.mrf.mxu0
    %v2335 = vadd.f32 %v2007, %v2334
    %v2336 = vpop.f32.mrf.mxu0
    %2337 = vmatprep.mubr.bf16.mxu0 0
    %2338 = vmatmul.mubr.bf16.gmra.mxu0 %v1985
    %v2339 = vpop.f32.mrf.mxu0
    %v2340 = vadd.f32 %v2007, %v2339
    %v2341 = vpop.f32.mrf.mxu0
    %v2342 = vpop.f32.mrf.mxu0
    %v2343 = vadd.f32 %v2007, %v2342
    %v2344 = vpop.f32.mrf.mxu0
    %2345 = vdwg.mxu0
    %v2346 = vand.u32 2147483647, %v2092
    %v2347 = vand.u32 2147483647, %v2095
    %v2348 = vand.u32 2147483647, %v2100
    %v2349 = vand.u32 2147483647, %v2103
    %v2350 = vand.u32 2147483647, %v2108
    %v2351 = vand.u32 2147483647, %v2111
    %v2352 = vand.u32 2147483647, %v2116
    %v2353 = vand.u32 2147483647, %v2119
    %v2354 = vand.u32 2147483647, %v2124
    %v2355 = vand.u32 2147483647, %v2127
    %v2356 = vand.u32 2147483647, %v2132
    %v2357 = vand.u32 2147483647, %v2135
    %v2358 = vand.u32 2147483647, %v2140
    %v2359 = vand.u32 2147483647, %v2143
    %v2360 = vand.u32 2147483647, %v2148
    %v2361 = vand.u32 2147483647, %v2151
    %v2362 = vand.u32 2147483647, %v2156
    %v2363 = vand.u32 2147483647, %v2159
    %v2364 = vand.u32 2147483647, %v2164
    %v2365 = vand.u32 2147483647, %v2167
    %v2366 = vand.u32 2147483647, %v2172
    %v2367 = vand.u32 2147483647, %v2175
    %v2368 = vand.u32 2147483647, %v2180
    %v2369 = vand.u32 2147483647, %v2183
    %v2370 = vand.u32 2147483647, %v2188
    %v2371 = vand.u32 2147483647, %v2191
    %v2372 = vand.u32 2147483647, %v2196
    %v2373 = vand.u32 2147483647, %v2199
    %v2374 = vand.u32 2147483647, %v2204
    %v2375 = vand.u32 2147483647, %v2207
    %v2376 = vand.u32 2147483647, %v2212
    %v2377 = vand.u32 2147483647, %v2215
    %v2378 = vand.u32 2147483647, %v2220
    %v2379 = vand.u32 2147483647, %v2223
    %v2380 = vand.u32 2147483647, %v2228
    %v2381 = vand.u32 2147483647, %v2231
    %v2382 = vand.u32 2147483647, %v2236
    %v2383 = vand.u32 2147483647, %v2239
    %v2384 = vand.u32 2147483647, %v2244
    %v2385 = vand.u32 2147483647, %v2247
    %v2386 = vand.u32 2147483647, %v2252
    %v2387 = vand.u32 2147483647, %v2255
    %v2388 = vand.u32 2147483647, %v2260
    %v2389 = vand.u32 2147483647, %v2263
    %v2390 = vand.u32 2147483647, %v2268
    %v2391 = vand.u32 2147483647, %v2271
    %v2392 = vand.u32 2147483647, %v2276
    %v2393 = vand.u32 2147483647, %v2279
    %v2394 = vand.u32 2147483647, %v2284
    %v2395 = vand.u32 2147483647, %v2287
    %v2396 = vand.u32 2147483647, %v2292
    %v2397 = vand.u32 2147483647, %v2295
    %v2398 = vand.u32 2147483647, %v2300
    %v2399 = vand.u32 2147483647, %v2303
    %v2400 = vand.u32 2147483647, %v2308
    %v2401 = vand.u32 2147483647, %v2311
    %v2402 = vand.u32 2147483647, %v2316
    %v2403 = vand.u32 2147483647, %v2319
    %v2404 = vand.u32 2147483647, %v2324
    %v2405 = vand.u32 2147483647, %v2327
    %v2406 = vand.u32 2147483647, %v2332
    %v2407 = vand.u32 2147483647, %v2335
    %v2408 = vand.u32 2147483647, %v2340
    %v2409 = vand.u32 2147483647, %v2343
    %2410 = vadd.xlane.f32.xlu0 %v2346
    %v2411 = vpop.xlane.xlu0 %2410
    %2412 = vadd.xlane.f32.xlu0 %v2347
    %v2413 = vpop.xlane.xlu0 %2412
    %2414 = vadd.xlane.f32.xlu0 %v2348
    %v2415 = vpop.xlane.xlu0 %2414
    %2416 = vadd.xlane.f32.xlu0 %v2349
    %v2417 = vpop.xlane.xlu0 %2416
    %2418 = vadd.xlane.f32.xlu0 %v2350
    %v2419 = vpop.xlane.xlu0 %2418
    %2420 = vadd.xlane.f32.xlu0 %v2351
    %v2421 = vpop.xlane.xlu0 %2420
    %2422 = vadd.xlane.f32.xlu0 %v2352
    %v2423 = vpop.xlane.xlu0 %2422
    %2424 = vadd.xlane.f32.xlu0 %v2353
    %v2425 = vpop.xlane.xlu0 %2424
    %2426 = vadd.xlane.f32.xlu0 %v2354
    %v2427 = vpop.xlane.xlu0 %2426
    %2428 = vadd.xlane.f32.xlu0 %v2355
    %v2429 = vpop.xlane.xlu0 %2428
    %2430 = vadd.xlane.f32.xlu0 %v2356
    %v2431 = vpop.xlane.xlu0 %2430
    %2432 = vadd.xlane.f32.xlu0 %v2357
    %v2433 = vpop.xlane.xlu0 %2432
    %2434 = vadd.xlane.f32.xlu0 %v2358
    %v2435 = vpop.xlane.xlu0 %2434
    %2436 = vadd.xlane.f32.xlu0 %v2359
    %v2437 = vpop.xlane.xlu0 %2436
    %2438 = vadd.xlane.f32.xlu0 %v2360
    %v2439 = vpop.xlane.xlu0 %2438
    %2440 = vadd.xlane.f32.xlu0 %v2361
    %v2441 = vpop.xlane.xlu0 %2440
    %2442 = vadd.xlane.f32.xlu0 %v2362
    %v2443 = vpop.xlane.xlu0 %2442
    %2444 = vadd.xlane.f32.xlu0 %v2363
    %v2445 = vpop.xlane.xlu0 %2444
    %2446 = vadd.xlane.f32.xlu0 %v2364
    %v2447 = vpop.xlane.xlu0 %2446
    %2448 = vadd.xlane.f32.xlu0 %v2365
    %v2449 = vpop.xlane.xlu0 %2448
    %2450 = vadd.xlane.f32.xlu0 %v2366
    %v2451 = vpop.xlane.xlu0 %2450
    %2452 = vadd.xlane.f32.xlu0 %v2367
    %v2453 = vpop.xlane.xlu0 %2452
    %2454 = vadd.xlane.f32.xlu0 %v2368
    %v2455 = vpop.xlane.xlu0 %2454
    %2456 = vadd.xlane.f32.xlu0 %v2369
    %v2457 = vpop.xlane.xlu0 %2456
    %2458 = vadd.xlane.f32.xlu0 %v2370
    %v2459 = vpop.xlane.xlu0 %2458
    %2460 = vadd.xlane.f32.xlu0 %v2371
    %v2461 = vpop.xlane.xlu0 %2460
    %2462 = vadd.xlane.f32.xlu0 %v2372
    %v2463 = vpop.xlane.xlu0 %2462
    %2464 = vadd.xlane.f32.xlu0 %v2373
    %v2465 = vpop.xlane.xlu0 %2464
    %2466 = vadd.xlane.f32.xlu0 %v2374
    %v2467 = vpop.xlane.xlu0 %2466
    %2468 = vadd.xlane.f32.xlu0 %v2375
    %v2469 = vpop.xlane.xlu0 %2468
    %2470 = vadd.xlane.f32.xlu0 %v2376
    %v2471 = vpop.xlane.xlu0 %2470
    %2472 = vadd.xlane.f32.xlu0 %v2377
    %v2473 = vpop.xlane.xlu0 %2472
    %2474 = vadd.xlane.f32.xlu0 %v2378
    %v2475 = vpop.xlane.xlu0 %2474
    %2476 = vadd.xlane.f32.xlu0 %v2379
    %v2477 = vpop.xlane.xlu0 %2476
    %2478 = vadd.xlane.f32.xlu0 %v2380
    %v2479 = vpop.xlane.xlu0 %2478
    %2480 = vadd.xlane.f32.xlu0 %v2381
    %v2481 = vpop.xlane.xlu0 %2480
    %2482 = vadd.xlane.f32.xlu0 %v2382
    %v2483 = vpop.xlane.xlu0 %2482
    %2484 = vadd.xlane.f32.xlu0 %v2383
    %v2485 = vpop.xlane.xlu0 %2484
    %2486 = vadd.xlane.f32.xlu0 %v2384
    %v2487 = vpop.xlane.xlu0 %2486
    %2488 = vadd.xlane.f32.xlu0 %v2385
    %v2489 = vpop.xlane.xlu0 %2488
    %2490 = vadd.xlane.f32.xlu0 %v2386
    %v2491 = vpop.xlane.xlu0 %2490
    %2492 = vadd.xlane.f32.xlu0 %v2387
    %v2493 = vpop.xlane.xlu0 %2492
    %2494 = vadd.xlane.f32.xlu0 %v2388
    %v2495 = vpop.xlane.xlu0 %2494
    %2496 = vadd.xlane.f32.xlu0 %v2389
    %v2497 = vpop.xlane.xlu0 %2496
    %2498 = vadd.xlane.f32.xlu0 %v2390
    %v2499 = vpop.xlane.xlu0 %2498
    %2500 = vadd.xlane.f32.xlu0 %v2391
    %v2501 = vpop.xlane.xlu0 %2500
    %2502 = vadd.xlane.f32.xlu0 %v2392
    %v2503 = vpop.xlane.xlu0 %2502
    %2504 = vadd.xlane.f32.xlu0 %v2393
    %v2505 = vpop.xlane.xlu0 %2504
    %2506 = vadd.xlane.f32.xlu0 %v2394
    %v2507 = vpop.xlane.xlu0 %2506
    %2508 = vadd.xlane.f32.xlu0 %v2395
    %v2509 = vpop.xlane.xlu0 %2508
    %2510 = vadd.xlane.f32.xlu0 %v2396
    %v2511 = vpop.xlane.xlu0 %2510
    %2512 = vadd.xlane.f32.xlu0 %v2397
    %v2513 = vpop.xlane.xlu0 %2512
    %2514 = vadd.xlane.f32.xlu0 %v2398
    %v2515 = vpop.xlane.xlu0 %2514
    %2516 = vadd.xlane.f32.xlu0 %v2399
    %v2517 = vpop.xlane.xlu0 %2516
    %2518 = vadd.xlane.f32.xlu0 %v2400
    %v2519 = vpop.xlane.xlu0 %2518
    %2520 = vadd.xlane.f32.xlu0 %v2401
    %v2521 = vpop.xlane.xlu0 %2520
    %2522 = vadd.xlane.f32.xlu0 %v2402
    %v2523 = vpop.xlane.xlu0 %2522
    %2524 = vadd.xlane.f32.xlu0 %v2403
    %v2525 = vpop.xlane.xlu0 %2524
    %2526 = vadd.xlane.f32.xlu0 %v2404
    %v2527 = vpop.xlane.xlu0 %2526
    %2528 = vadd.xlane.f32.xlu0 %v2405
    %v2529 = vpop.xlane.xlu0 %2528
    %2530 = vadd.xlane.f32.xlu0 %v2406
    %v2531 = vpop.xlane.xlu0 %2530
    %2532 = vadd.xlane.f32.xlu0 %v2407
    %v2533 = vpop.xlane.xlu0 %2532
    %2534 = vadd.xlane.f32.xlu0 %v2408
    %v2535 = vpop.xlane.xlu0 %2534
    %2536 = vadd.xlane.f32.xlu0 %v2409
    %v2537 = vpop.xlane.xlu0 %2536
    %v2538 = vmax.f32 %v2411, 1e-12
    %v2539 = vmax.f32 %v2413, 1e-12
    %v2540 = vmax.f32 %v2415, 1e-12
    %v2541 = vmax.f32 %v2417, 1e-12
    %v2542 = vmax.f32 %v2419, 1e-12
    %v2543 = vmax.f32 %v2421, 1e-12
    %v2544 = vmax.f32 %v2423, 1e-12
    %v2545 = vmax.f32 %v2425, 1e-12
    %v2546 = vmax.f32 %v2427, 1e-12
    %v2547 = vmax.f32 %v2429, 1e-12
    %v2548 = vmax.f32 %v2431, 1e-12
    %v2549 = vmax.f32 %v2433, 1e-12
    %v2550 = vmax.f32 %v2435, 1e-12
    %v2551 = vmax.f32 %v2437, 1e-12
    %v2552 = vmax.f32 %v2439, 1e-12
    %v2553 = vmax.f32 %v2441, 1e-12
    %v2554 = vmax.f32 %v2443, 1e-12
    %v2555 = vmax.f32 %v2445, 1e-12
    %v2556 = vmax.f32 %v2447, 1e-12
    %v2557 = vmax.f32 %v2449, 1e-12
    %v2558 = vmax.f32 %v2451, 1e-12
    %v2559 = vmax.f32 %v2453, 1e-12
    %v2560 = vmax.f32 %v2455, 1e-12
    %v2561 = vmax.f32 %v2457, 1e-12
    %v2562 = vmax.f32 %v2459, 1e-12
    %v2563 = vmax.f32 %v2461, 1e-12
    %v2564 = vmax.f32 %v2463, 1e-12
    %v2565 = vmax.f32 %v2465, 1e-12
    %v2566 = vmax.f32 %v2467, 1e-12
    %v2567 = vmax.f32 %v2469, 1e-12
    %v2568 = vmax.f32 %v2471, 1e-12
    %v2569 = vmax.f32 %v2473, 1e-12
    %v2570 = vmax.f32 %v2475, 1e-12
    %v2571 = vmax.f32 %v2477, 1e-12
    %v2572 = vmax.f32 %v2479, 1e-12
    %v2573 = vmax.f32 %v2481, 1e-12
    %v2574 = vmax.f32 %v2483, 1e-12
    %v2575 = vmax.f32 %v2485, 1e-12
    %v2576 = vmax.f32 %v2487, 1e-12
    %v2577 = vmax.f32 %v2489, 1e-12
    %v2578 = vmax.f32 %v2491, 1e-12
    %v2579 = vmax.f32 %v2493, 1e-12
    %v2580 = vmax.f32 %v2495, 1e-12
    %v2581 = vmax.f32 %v2497, 1e-12
    %v2582 = vmax.f32 %v2499, 1e-12
    %v2583 = vmax.f32 %v2501, 1e-12
    %v2584 = vmax.f32 %v2503, 1e-12
    %v2585 = vmax.f32 %v2505, 1e-12
    %v2586 = vmax.f32 %v2507, 1e-12
    %v2587 = vmax.f32 %v2509, 1e-12
    %v2588 = vmax.f32 %v2511, 1e-12
    %v2589 = vmax.f32 %v2513, 1e-12
    %v2590 = vmax.f32 %v2515, 1e-12
    %v2591 = vmax.f32 %v2517, 1e-12
    %v2592 = vmax.f32 %v2519, 1e-12
    %v2593 = vmax.f32 %v2521, 1e-12
    %v2594 = vmax.f32 %v2523, 1e-12
    %v2595 = vmax.f32 %v2525, 1e-12
    %v2596 = vmax.f32 %v2527, 1e-12
    %v2597 = vmax.f32 %v2529, 1e-12
    %v2598 = vmax.f32 %v2531, 1e-12
    %v2599 = vmax.f32 %v2533, 1e-12
    %v2600 = vmax.f32 %v2535, 1e-12
    %v2601 = vmax.f32 %v2537, 1e-12
    %v2602 = vrcp.pop %v2538
    %v2603 = vrcp.pop %v2539
    %v2604 = vrcp.pop %v2540
    %v2605 = vrcp.pop %v2541
    %v2606 = vrcp.pop %v2542
    %v2607 = vrcp.pop %v2543
    %v2608 = vrcp.pop %v2544
    %v2609 = vrcp.pop %v2545
    %v2610 = vrcp.pop %v2546
    %v2611 = vrcp.pop %v2547
    %v2612 = vrcp.pop %v2548
    %v2613 = vrcp.pop %v2549
    %v2614 = vrcp.pop %v2550
    %v2615 = vrcp.pop %v2551
    %v2616 = vrcp.pop %v2552
    %v2617 = vrcp.pop %v2553
    %v2618 = vrcp.pop %v2554
    %v2619 = vrcp.pop %v2555
    %v2620 = vrcp.pop %v2556
    %v2621 = vrcp.pop %v2557
    %v2622 = vrcp.pop %v2558
    %v2623 = vrcp.pop %v2559
    %v2624 = vrcp.pop %v2560
    %v2625 = vrcp.pop %v2561
    %v2626 = vrcp.pop %v2562
    %v2627 = vrcp.pop %v2563
    %v2628 = vrcp.pop %v2564
    %v2629 = vrcp.pop %v2565
    %v2630 = vrcp.pop %v2566
    %v2631 = vrcp.pop %v2567
    %v2632 = vrcp.pop %v2568
    %v2633 = vrcp.pop %v2569
    %v2634 = vrcp.pop %v2570
    %v2635 = vrcp.pop %v2571
    %v2636 = vrcp.pop %v2572
    %v2637 = vrcp.pop %v2573
    %v2638 = vrcp.pop %v2574
    %v2639 = vrcp.pop %v2575
    %v2640 = vrcp.pop %v2576
    %v2641 = vrcp.pop %v2577
    %v2642 = vrcp.pop %v2578
    %v2643 = vrcp.pop %v2579
    %v2644 = vrcp.pop %v2580
    %v2645 = vrcp.pop %v2581
    %v2646 = vrcp.pop %v2582
    %v2647 = vrcp.pop %v2583
    %v2648 = vrcp.pop %v2584
    %v2649 = vrcp.pop %v2585
    %v2650 = vrcp.pop %v2586
    %v2651 = vrcp.pop %v2587
    %v2652 = vrcp.pop %v2588
    %v2653 = vrcp.pop %v2589
    %v2654 = vrcp.pop %v2590
    %v2655 = vrcp.pop %v2591
    %v2656 = vrcp.pop %v2592
    %v2657 = vrcp.pop %v2593
    %v2658 = vrcp.pop %v2594
    %v2659 = vrcp.pop %v2595
    %v2660 = vrcp.pop %v2596
    %v2661 = vrcp.pop %v2597
    %v2662 = vrcp.pop %v2598
    %v2663 = vrcp.pop %v2599
    %v2664 = vrcp.pop %v2600
    %v2665 = vrcp.pop %v2601
    %v2666 = vmul.f32 %v2092, %v2602
    %v2667 = vmul.f32 %v2095, %v2603
    %v2668 = vmul.f32 %v2100, %v2604
    %v2669 = vmul.f32 %v2103, %v2605
    %v2670 = vmul.f32 %v2108, %v2606
    %v2671 = vmul.f32 %v2111, %v2607
    %v2672 = vmul.f32 %v2116, %v2608
    %v2673 = vmul.f32 %v2119, %v2609
    %v2674 = vmul.f32 %v2124, %v2610
    %v2675 = vmul.f32 %v2127, %v2611
    %v2676 = vmul.f32 %v2132, %v2612
    %v2677 = vmul.f32 %v2135, %v2613
    %v2678 = vmul.f32 %v2140, %v2614
    %v2679 = vmul.f32 %v2143, %v2615
    %v2680 = vmul.f32 %v2148, %v2616
    %v2681 = vmul.f32 %v2151, %v2617
    %v2682 = vmul.f32 %v2156, %v2618
    %v2683 = vmul.f32 %v2159, %v2619
    %v2684 = vmul.f32 %v2164, %v2620
    %v2685 = vmul.f32 %v2167, %v2621
    %v2686 = vmul.f32 %v2172, %v2622
    %v2687 = vmul.f32 %v2175, %v2623
    %v2688 = vmul.f32 %v2180, %v2624
    %v2689 = vmul.f32 %v2183, %v2625
    %v2690 = vmul.f32 %v2188, %v2626
    %v2691 = vmul.f32 %v2191, %v2627
    %v2692 = vmul.f32 %v2196, %v2628
    %v2693 = vmul.f32 %v2199, %v2629
    %v2694 = vmul.f32 %v2204, %v2630
    %v2695 = vmul.f32 %v2207, %v2631
    %v2696 = vmul.f32 %v2212, %v2632
    %v2697 = vmul.f32 %v2215, %v2633
    %v2698 = vmul.f32 %v2220, %v2634
    %v2699 = vmul.f32 %v2223, %v2635
    %v2700 = vmul.f32 %v2228, %v2636
    %v2701 = vmul.f32 %v2231, %v2637
    %v2702 = vmul.f32 %v2236, %v2638
    %v2703 = vmul.f32 %v2239, %v2639
    %v2704 = vmul.f32 %v2244, %v2640
    %v2705 = vmul.f32 %v2247, %v2641
    %v2706 = vmul.f32 %v2252, %v2642
    %v2707 = vmul.f32 %v2255, %v2643
    %v2708 = vmul.f32 %v2260, %v2644
    %v2709 = vmul.f32 %v2263, %v2645
    %v2710 = vmul.f32 %v2268, %v2646
    %v2711 = vmul.f32 %v2271, %v2647
    %v2712 = vmul.f32 %v2276, %v2648
    %v2713 = vmul.f32 %v2279, %v2649
    %v2714 = vmul.f32 %v2284, %v2650
    %v2715 = vmul.f32 %v2287, %v2651
    %v2716 = vmul.f32 %v2292, %v2652
    %v2717 = vmul.f32 %v2295, %v2653
    %v2718 = vmul.f32 %v2300, %v2654
    %v2719 = vmul.f32 %v2303, %v2655
    %v2720 = vmul.f32 %v2308, %v2656
    %v2721 = vmul.f32 %v2311, %v2657
    %v2722 = vmul.f32 %v2316, %v2658
    %v2723 = vmul.f32 %v2319, %v2659
    %v2724 = vmul.f32 %v2324, %v2660
    %v2725 = vmul.f32 %v2327, %v2661
    %v2726 = vmul.f32 %v2332, %v2662
    %v2727 = vmul.f32 %v2335, %v2663
    %v2728 = vmul.f32 %v2340, %v2664
    %v2729 = vmul.f32 %v2343, %v2665
    %v2730 = vand.u32 2147483647, %v2666
    %v2731 = vand.u32 2147483647, %v2667
    %v2732 = vand.u32 2147483647, %v2668
    %v2733 = vand.u32 2147483647, %v2669
    %v2734 = vand.u32 2147483647, %v2670
    %v2735 = vand.u32 2147483647, %v2671
    %v2736 = vand.u32 2147483647, %v2672
    %v2737 = vand.u32 2147483647, %v2673
    %v2738 = vand.u32 2147483647, %v2674
    %v2739 = vand.u32 2147483647, %v2675
    %v2740 = vand.u32 2147483647, %v2676
    %v2741 = vand.u32 2147483647, %v2677
    %v2742 = vand.u32 2147483647, %v2678
    %v2743 = vand.u32 2147483647, %v2679
    %v2744 = vand.u32 2147483647, %v2680
    %v2745 = vand.u32 2147483647, %v2681
    %v2746 = vand.u32 2147483647, %v2682
    %v2747 = vand.u32 2147483647, %v2683
    %v2748 = vand.u32 2147483647, %v2684
    %v2749 = vand.u32 2147483647, %v2685
    %v2750 = vand.u32 2147483647, %v2686
    %v2751 = vand.u32 2147483647, %v2687
    %v2752 = vand.u32 2147483647, %v2688
    %v2753 = vand.u32 2147483647, %v2689
    %v2754 = vand.u32 2147483647, %v2690
    %v2755 = vand.u32 2147483647, %v2691
    %v2756 = vand.u32 2147483647, %v2692
    %v2757 = vand.u32 2147483647, %v2693
    %v2758 = vand.u32 2147483647, %v2694
    %v2759 = vand.u32 2147483647, %v2695
    %v2760 = vand.u32 2147483647, %v2696
    %v2761 = vand.u32 2147483647, %v2697
    %v2762 = vand.u32 2147483647, %v2698
    %v2763 = vand.u32 2147483647, %v2699
    %v2764 = vand.u32 2147483647, %v2700
    %v2765 = vand.u32 2147483647, %v2701
    %v2766 = vand.u32 2147483647, %v2702
    %v2767 = vand.u32 2147483647, %v2703
    %v2768 = vand.u32 2147483647, %v2704
    %v2769 = vand.u32 2147483647, %v2705
    %v2770 = vand.u32 2147483647, %v2706
    %v2771 = vand.u32 2147483647, %v2707
    %v2772 = vand.u32 2147483647, %v2708
    %v2773 = vand.u32 2147483647, %v2709
    %v2774 = vand.u32 2147483647, %v2710
    %v2775 = vand.u32 2147483647, %v2711
    %v2776 = vand.u32 2147483647, %v2712
    %v2777 = vand.u32 2147483647, %v2713
    %v2778 = vand.u32 2147483647, %v2714
    %v2779 = vand.u32 2147483647, %v2715
    %v2780 = vand.u32 2147483647, %v2716
    %v2781 = vand.u32 2147483647, %v2717
    %v2782 = vand.u32 2147483647, %v2718
    %v2783 = vand.u32 2147483647, %v2719
    %v2784 = vand.u32 2147483647, %v2720
    %v2785 = vand.u32 2147483647, %v2721
    %v2786 = vand.u32 2147483647, %v2722
    %v2787 = vand.u32 2147483647, %v2723
    %v2788 = vand.u32 2147483647, %v2724
    %v2789 = vand.u32 2147483647, %v2725
    %v2790 = vand.u32 2147483647, %v2726
    %v2791 = vand.u32 2147483647, %v2727
    %v2792 = vand.u32 2147483647, %v2728
    %v2793 = vand.u32 2147483647, %v2729
    %vm2794 = vcmp.eq.f32.partialorder %v2730, inf
    %vm2795 = vcmp.eq.f32.partialorder %v2731, inf
    %vm2796 = vcmp.eq.f32.partialorder %v2732, inf
    %vm2797 = vcmp.eq.f32.partialorder %v2733, inf
    %vm2798 = vcmp.eq.f32.partialorder %v2734, inf
    %vm2799 = vcmp.eq.f32.partialorder %v2735, inf
    %vm2800 = vcmp.eq.f32.partialorder %v2736, inf
    %vm2801 = vcmp.eq.f32.partialorder %v2737, inf
    %vm2802 = vcmp.eq.f32.partialorder %v2738, inf
    %vm2803 = vcmp.eq.f32.partialorder %v2739, inf
    %vm2804 = vcmp.eq.f32.partialorder %v2740, inf
    %vm2805 = vcmp.eq.f32.partialorder %v2741, inf
    %vm2806 = vcmp.eq.f32.partialorder %v2742, inf
    %vm2807 = vcmp.eq.f32.partialorder %v2743, inf
    %vm2808 = vcmp.eq.f32.partialorder %v2744, inf
    %vm2809 = vcmp.eq.f32.partialorder %v2745, inf
    %vm2810 = vcmp.eq.f32.partialorder %v2746, inf
    %vm2811 = vcmp.eq.f32.partialorder %v2747, inf
    %vm2812 = vcmp.eq.f32.partialorder %v2748, inf
    %vm2813 = vcmp.eq.f32.partialorder %v2749, inf
    %vm2814 = vcmp.eq.f32.partialorder %v2750, inf
    %vm2815 = vcmp.eq.f32.partialorder %v2751, inf
    %vm2816 = vcmp.eq.f32.partialorder %v2752, inf
    %vm2817 = vcmp.eq.f32.partialorder %v2753, inf
    %vm2818 = vcmp.eq.f32.partialorder %v2754, inf
    %vm2819 = vcmp.eq.f32.partialorder %v2755, inf
    %vm2820 = vcmp.eq.f32.partialorder %v2756, inf
    %vm2821 = vcmp.eq.f32.partialorder %v2757, inf
    %vm2822 = vcmp.eq.f32.partialorder %v2758, inf
    %vm2823 = vcmp.eq.f32.partialorder %v2759, inf
    %vm2824 = vcmp.eq.f32.partialorder %v2760, inf
    %vm2825 = vcmp.eq.f32.partialorder %v2761, inf
    %vm2826 = vcmp.eq.f32.partialorder %v2762, inf
    %vm2827 = vcmp.eq.f32.partialorder %v2763, inf
    %vm2828 = vcmp.eq.f32.partialorder %v2764, inf
    %vm2829 = vcmp.eq.f32.partialorder %v2765, inf
    %vm2830 = vcmp.eq.f32.partialorder %v2766, inf
    %vm2831 = vcmp.eq.f32.partialorder %v2767, inf
    %vm2832 = vcmp.eq.f32.partialorder %v2768, inf
    %vm2833 = vcmp.eq.f32.partialorder %v2769, inf
    %vm2834 = vcmp.eq.f32.partialorder %v2770, inf
    %vm2835 = vcmp.eq.f32.partialorder %v2771, inf
    %vm2836 = vcmp.eq.f32.partialorder %v2772, inf
    %vm2837 = vcmp.eq.f32.partialorder %v2773, inf
    %vm2838 = vcmp.eq.f32.partialorder %v2774, inf
    %vm2839 = vcmp.eq.f32.partialorder %v2775, inf
    %vm2840 = vcmp.eq.f32.partialorder %v2776, inf
    %vm2841 = vcmp.eq.f32.partialorder %v2777, inf
    %vm2842 = vcmp.eq.f32.partialorder %v2778, inf
    %vm2843 = vcmp.eq.f32.partialorder %v2779, inf
    %vm2844 = vcmp.eq.f32.partialorder %v2780, inf
    %vm2845 = vcmp.eq.f32.partialorder %v2781, inf
    %vm2846 = vcmp.eq.f32.partialorder %v2782, inf
    %vm2847 = vcmp.eq.f32.partialorder %v2783, inf
    %vm2848 = vcmp.eq.f32.partialorder %v2784, inf
    %vm2849 = vcmp.eq.f32.partialorder %v2785, inf
    %vm2850 = vcmp.eq.f32.partialorder %v2786, inf
    %vm2851 = vcmp.eq.f32.partialorder %v2787, inf
    %vm2852 = vcmp.eq.f32.partialorder %v2788, inf
    %vm2853 = vcmp.eq.f32.partialorder %v2789, inf
    %vm2854 = vcmp.eq.f32.partialorder %v2790, inf
    %vm2855 = vcmp.eq.f32.partialorder %v2791, inf
    %vm2856 = vcmp.eq.f32.partialorder %v2792, inf
    %vm2857 = vcmp.eq.f32.partialorder %v2793, inf
    %v2858 = vsel %vm2794, 0.0, %v2666
    %v2859 = vsel %vm2795, 0.0, %v2667
    %v2860 = vsel %vm2796, 0.0, %v2668
    %v2861 = vsel %vm2797, 0.0, %v2669
    %v2862 = vsel %vm2798, 0.0, %v2670
    %v2863 = vsel %vm2799, 0.0, %v2671
    %v2864 = vsel %vm2800, 0.0, %v2672
    %v2865 = vsel %vm2801, 0.0, %v2673
    %v2866 = vsel %vm2802, 0.0, %v2674
    %v2867 = vsel %vm2803, 0.0, %v2675
    %v2868 = vsel %vm2804, 0.0, %v2676
    %v2869 = vsel %vm2805, 0.0, %v2677
    %v2870 = vsel %vm2806, 0.0, %v2678
    %v2871 = vsel %vm2807, 0.0, %v2679
    %v2872 = vsel %vm2808, 0.0, %v2680
    %v2873 = vsel %vm2809, 0.0, %v2681
    %v2874 = vsel %vm2810, 0.0, %v2682
    %v2875 = vsel %vm2811, 0.0, %v2683
    %v2876 = vsel %vm2812, 0.0, %v2684
    %v2877 = vsel %vm2813, 0.0, %v2685
    %v2878 = vsel %vm2814, 0.0, %v2686
    %v2879 = vsel %vm2815, 0.0, %v2687
    %v2880 = vsel %vm2816, 0.0, %v2688
    %v2881 = vsel %vm2817, 0.0, %v2689
    %v2882 = vsel %vm2818, 0.0, %v2690
    %v2883 = vsel %vm2819, 0.0, %v2691
    %v2884 = vsel %vm2820, 0.0, %v2692
    %v2885 = vsel %vm2821, 0.0, %v2693
    %v2886 = vsel %vm2822, 0.0, %v2694
    %v2887 = vsel %vm2823, 0.0, %v2695
    %v2888 = vsel %vm2824, 0.0, %v2696
    %v2889 = vsel %vm2825, 0.0, %v2697
    %v2890 = vsel %vm2826, 0.0, %v2698
    %v2891 = vsel %vm2827, 0.0, %v2699
    %v2892 = vsel %vm2828, 0.0, %v2700
    %v2893 = vsel %vm2829, 0.0, %v2701
    %v2894 = vsel %vm2830, 0.0, %v2702
    %v2895 = vsel %vm2831, 0.0, %v2703
    %v2896 = vsel %vm2832, 0.0, %v2704
    %v2897 = vsel %vm2833, 0.0, %v2705
    %v2898 = vsel %vm2834, 0.0, %v2706
    %v2899 = vsel %vm2835, 0.0, %v2707
    %v2900 = vsel %vm2836, 0.0, %v2708
    %v2901 = vsel %vm2837, 0.0, %v2709
    %v2902 = vsel %vm2838, 0.0, %v2710
    %v2903 = vsel %vm2839, 0.0, %v2711
    %v2904 = vsel %vm2840, 0.0, %v2712
    %v2905 = vsel %vm2841, 0.0, %v2713
    %v2906 = vsel %vm2842, 0.0, %v2714
    %v2907 = vsel %vm2843, 0.0, %v2715
    %v2908 = vsel %vm2844, 0.0, %v2716
    %v2909 = vsel %vm2845, 0.0, %v2717
    %v2910 = vsel %vm2846, 0.0, %v2718
    %v2911 = vsel %vm2847, 0.0, %v2719
    %v2912 = vsel %vm2848, 0.0, %v2720
    %v2913 = vsel %vm2849, 0.0, %v2721
    %v2914 = vsel %vm2850, 0.0, %v2722
    %v2915 = vsel %vm2851, 0.0, %v2723
    %v2916 = vsel %vm2852, 0.0, %v2724
    %v2917 = vsel %vm2853, 0.0, %v2725
    %v2918 = vsel %vm2854, 0.0, %v2726
    %v2919 = vsel %vm2855, 0.0, %v2727
    %v2920 = vsel %vm2856, 0.0, %v2728
    %v2921 = vsel %vm2857, 0.0, %v2729
    %v2922 = vmax.f32 %v2858, 0.0
    %v2923 = vmax.f32 %v2859, 0.0
    %v2924 = vmax.f32 %v2860, 0.0
    %v2925 = vmax.f32 %v2861, 0.0
    %v2926 = vmax.f32 %v2862, 0.0
    %v2927 = vmax.f32 %v2863, 0.0
    %v2928 = vmax.f32 %v2864, 0.0
    %v2929 = vmax.f32 %v2865, 0.0
    %v2930 = vmax.f32 %v2866, 0.0
    %v2931 = vmax.f32 %v2867, 0.0
    %v2932 = vmax.f32 %v2868, 0.0
    %v2933 = vmax.f32 %v2869, 0.0
    %v2934 = vmax.f32 %v2870, 0.0
    %v2935 = vmax.f32 %v2871, 0.0
    %v2936 = vmax.f32 %v2872, 0.0
    %v2937 = vmax.f32 %v2873, 0.0
    %v2938 = vmax.f32 %v2874, 0.0
    %v2939 = vmax.f32 %v2875, 0.0
    %v2940 = vmax.f32 %v2876, 0.0
    %v2941 = vmax.f32 %v2877, 0.0
    %v2942 = vmax.f32 %v2878, 0.0
    %v2943 = vmax.f32 %v2879, 0.0
    %v2944 = vmax.f32 %v2880, 0.0
    %v2945 = vmax.f32 %v2881, 0.0
    %v2946 = vmax.f32 %v2882, 0.0
    %v2947 = vmax.f32 %v2883, 0.0
    %v2948 = vmax.f32 %v2884, 0.0
    %v2949 = vmax.f32 %v2885, 0.0
    %v2950 = vmax.f32 %v2886, 0.0
    %v2951 = vmax.f32 %v2887, 0.0
    %v2952 = vmax.f32 %v2888, 0.0
    %v2953 = vmax.f32 %v2889, 0.0
    %v2954 = vmax.f32 %v2890, 0.0
    %v2955 = vmax.f32 %v2891, 0.0
    %v2956 = vmax.f32 %v2892, 0.0
    %v2957 = vmax.f32 %v2893, 0.0
    %v2958 = vmax.f32 %v2894, 0.0
    %v2959 = vmax.f32 %v2895, 0.0
    %v2960 = vmax.f32 %v2896, 0.0
    %v2961 = vmax.f32 %v2897, 0.0
    %v2962 = vmax.f32 %v2898, 0.0
    %v2963 = vmax.f32 %v2899, 0.0
    %v2964 = vmax.f32 %v2900, 0.0
    %v2965 = vmax.f32 %v2901, 0.0
    %v2966 = vmax.f32 %v2902, 0.0
    %v2967 = vmax.f32 %v2903, 0.0
    %v2968 = vmax.f32 %v2904, 0.0
    %v2969 = vmax.f32 %v2905, 0.0
    %v2970 = vmax.f32 %v2906, 0.0
    %v2971 = vmax.f32 %v2907, 0.0
    %v2972 = vmax.f32 %v2908, 0.0
    %v2973 = vmax.f32 %v2909, 0.0
    %v2974 = vmax.f32 %v2910, 0.0
    %v2975 = vmax.f32 %v2911, 0.0
    %v2976 = vmax.f32 %v2912, 0.0
    %v2977 = vmax.f32 %v2913, 0.0
    %v2978 = vmax.f32 %v2914, 0.0
    %v2979 = vmax.f32 %v2915, 0.0
    %v2980 = vmax.f32 %v2916, 0.0
    %v2981 = vmax.f32 %v2917, 0.0
    %v2982 = vmax.f32 %v2918, 0.0
    %v2983 = vmax.f32 %v2919, 0.0
    %v2984 = vmax.f32 %v2920, 0.0
    %v2985 = vmax.f32 %v2921, 0.0
    %v2986 = vld [vmem:[%s2] sm:$0xff]
    %v2987 = vld [vmem:[%s2 + $0x8] sm:$0xff]
    %v2988 = vld [vmem:[%s2 + $0x10] sm:$0xff]
    %v2989 = vld [vmem:[%s2 + $0x18] sm:$0xff]
    %v2990 = vld [vmem:[%s2 + $0x20] sm:$0xff]
    %v2991 = vld [vmem:[%s2 + $0x28] sm:$0xff]
    %v2992 = vld [vmem:[%s2 + $0x30] sm:$0xff]
    %v2993 = vld [vmem:[%s2 + $0x38] sm:$0xff]
    %v2994 = vld [vmem:[%s2 + $0x40] sm:$0xff]
    %v2995 = vld [vmem:[%s2 + $0x48] sm:$0xff]
    %v2996 = vld [vmem:[%s2 + $0x50] sm:$0xff]
    %v2997 = vld [vmem:[%s2 + $0x58] sm:$0xff]
    %v2998 = vld [vmem:[%s2 + $0x60] sm:$0xff]
    %v2999 = vld [vmem:[%s2 + $0x68] sm:$0xff]
    %v3000 = vld [vmem:[%s2 + $0x70] sm:$0xff]
    %v3001 = vld [vmem:[%s2 + $0x78] sm:$0xff]
    %v3002 = vld [vmem:[%s2 + $0x80] sm:$0xff]
    %v3003 = vld [vmem:[%s2 + $0x88] sm:$0xff]
    %v3004 = vld [vmem:[%s2 + $0x90] sm:$0xff]
    %v3005 = vld [vmem:[%s2 + $0x98] sm:$0xff]
    %v3006 = vld [vmem:[%s2 + $0xa0] sm:$0xff]
    %v3007 = vld [vmem:[%s2 + $0xa8] sm:$0xff]
    %v3008 = vld [vmem:[%s2 + $0xb0] sm:$0xff]
    %v3009 = vld [vmem:[%s2 + $0xb8] sm:$0xff]
    %v3010 = vld [vmem:[%s2 + $0xc0] sm:$0xff]
    %v3011 = vld [vmem:[%s2 + $0xc8] sm:$0xff]
    %v3012 = vld [vmem:[%s2 + $0xd0] sm:$0xff]
    %v3013 = vld [vmem:[%s2 + $0xd8] sm:$0xff]
    %v3014 = vld [vmem:[%s2 + $0xe0] sm:$0xff]
    %v3015 = vld [vmem:[%s2 + $0xe8] sm:$0xff]
    %v3016 = vld [vmem:[%s2 + $0xf0] sm:$0xff]
    %v3017 = vld [vmem:[%s2 + $0xf8] sm:$0xff]
    %v3018 = vld [vmem:[%s2 + $0x100] sm:$0xff]
    %v3019 = vld [vmem:[%s2 + $0x108] sm:$0xff]
    %v3020 = vld [vmem:[%s2 + $0x110] sm:$0xff]
    %v3021 = vld [vmem:[%s2 + $0x118] sm:$0xff]
    %v3022 = vld [vmem:[%s2 + $0x120] sm:$0xff]
    %v3023 = vld [vmem:[%s2 + $0x128] sm:$0xff]
    %v3024 = vld [vmem:[%s2 + $0x130] sm:$0xff]
    %v3025 = vld [vmem:[%s2 + $0x138] sm:$0xff]
    %v3026 = vld [vmem:[%s2 + $0x140] sm:$0xff]
    %v3027 = vld [vmem:[%s2 + $0x148] sm:$0xff]
    %v3028 = vld [vmem:[%s2 + $0x150] sm:$0xff]
    %v3029 = vld [vmem:[%s2 + $0x158] sm:$0xff]
    %v3030 = vld [vmem:[%s2 + $0x160] sm:$0xff]
    %v3031 = vld [vmem:[%s2 + $0x168] sm:$0xff]
    %v3032 = vld [vmem:[%s2 + $0x170] sm:$0xff]
    %v3033 = vld [vmem:[%s2 + $0x178] sm:$0xff]
    %v3034 = vld [vmem:[%s2 + $0x180] sm:$0xff]
    %v3035 = vld [vmem:[%s2 + $0x188] sm:$0xff]
    %v3036 = vld [vmem:[%s2 + $0x190] sm:$0xff]
    %v3037 = vld [vmem:[%s2 + $0x198] sm:$0xff]
    %v3038 = vld [vmem:[%s2 + $0x1a0] sm:$0xff]
    %v3039 = vld [vmem:[%s2 + $0x1a8] sm:$0xff]
    %v3040 = vld [vmem:[%s2 + $0x1b0] sm:$0xff]
    %v3041 = vld [vmem:[%s2 + $0x1b8] sm:$0xff]
    %v3042 = vld [vmem:[%s2 + $0x1c0] sm:$0xff]
    %v3043 = vld [vmem:[%s2 + $0x1c8] sm:$0xff]
    %v3044 = vld [vmem:[%s2 + $0x1d0] sm:$0xff]
    %v3045 = vld [vmem:[%s2 + $0x1d8] sm:$0xff]
    %v3046 = vld [vmem:[%s2 + $0x1e0] sm:$0xff]
    %v3047 = vld [vmem:[%s2 + $0x1e8] sm:$0xff]
    %v3048 = vld [vmem:[%s2 + $0x1f0] sm:$0xff]
    %v3049 = vld [vmem:[%s2 + $0x1f8] sm:$0xff]
    %s3050 = sld [smem:[#allocation2]]
    %v3051 = vstv %s3050
    %v3052 = vmul.f32 %v2922, %v3051
    %v3053 = vmul.f32 %v2923, %v3051
    %v3054 = vmul.f32 %v2924, %v3051
    %v3055 = vmul.f32 %v2925, %v3051
    %v3056 = vmul.f32 %v2926, %v3051
    %v3057 = vmul.f32 %v2927, %v3051
    %v3058 = vmul.f32 %v2928, %v3051
    %v3059 = vmul.f32 %v2929, %v3051
    %v3060 = vmul.f32 %v2930, %v3051
    %v3061 = vmul.f32 %v2931, %v3051
    %v3062 = vmul.f32 %v2932, %v3051
    %v3063 = vmul.f32 %v2933, %v3051
    %v3064 = vmul.f32 %v2934, %v3051
    %v3065 = vmul.f32 %v2935, %v3051
    %v3066 = vmul.f32 %v2936, %v3051
    %v3067 = vmul.f32 %v2937, %v3051
    %v3068 = vmul.f32 %v2938, %v3051
    %v3069 = vmul.f32 %v2939, %v3051
    %v3070 = vmul.f32 %v2940, %v3051
    %v3071 = vmul.f32 %v2941, %v3051
    %v3072 = vmul.f32 %v2942, %v3051
    %v3073 = vmul.f32 %v2943, %v3051
    %v3074 = vmul.f32 %v2944, %v3051
    %v3075 = vmul.f32 %v2945, %v3051
    %v3076 = vmul.f32 %v2946, %v3051
    %v3077 = vmul.f32 %v2947, %v3051
    %v3078 = vmul.f32 %v2948, %v3051
    %v3079 = vmul.f32 %v2949, %v3051
    %v3080 = vmul.f32 %v2950, %v3051
    %v3081 = vmul.f32 %v2951, %v3051
    %v3082 = vmul.f32 %v2952, %v3051
    %v3083 = vmul.f32 %v2953, %v3051
    %v3084 = vmul.f32 %v2954, %v3051
    %v3085 = vmul.f32 %v2955, %v3051
    %v3086 = vmul.f32 %v2956, %v3051
    %v3087 = vmul.f32 %v2957, %v3051
    %v3088 = vmul.f32 %v2958, %v3051
    %v3089 = vmul.f32 %v2959, %v3051
    %v3090 = vmul.f32 %v2960, %v3051
    %v3091 = vmul.f32 %v2961, %v3051
    %v3092 = vmul.f32 %v2962, %v3051
    %v3093 = vmul.f32 %v2963, %v3051
    %v3094 = vmul.f32 %v2964, %v3051
    %v3095 = vmul.f32 %v2965, %v3051
    %v3096 = vmul.f32 %v2966, %v3051
    %v3097 = vmul.f32 %v2967, %v3051
    %v3098 = vmul.f32 %v2968, %v3051
    %v3099 = vmul.f32 %v2969, %v3051
    %v3100 = vmul.f32 %v2970, %v3051
    %v3101 = vmul.f32 %v2971, %v3051
    %v3102 = vmul.f32 %v2972, %v3051
    %v3103 = vmul.f32 %v2973, %v3051
    %v3104 = vmul.f32 %v2974, %v3051
    %v3105 = vmul.f32 %v2975, %v3051
    %v3106 = vmul.f32 %v2976, %v3051
    %v3107 = vmul.f32 %v2977, %v3051
    %v3108 = vmul.f32 %v2978, %v3051
    %v3109 = vmul.f32 %v2979, %v3051
    %v3110 = vmul.f32 %v2980, %v3051
    %v3111 = vmul.f32 %v2981, %v3051
    %v3112 = vmul.f32 %v2982, %v3051
    %v3113 = vmul.f32 %v2983, %v3051
    %v3114 = vmul.f32 %v2984, %v3051
    %v3115 = vmul.f32 %v2985, %v3051
    %v3116 = vadd.f32 %v2986, %v3052
    %v3117 = vadd.f32 %v2987, %v3053
    %v3118 = vadd.f32 %v2988, %v3054
    %v3119 = vadd.f32 %v2989, %v3055
    %v3120 = vadd.f32 %v2990, %v3056
    %v3121 = vadd.f32 %v2991, %v3057
    %v3122 = vadd.f32 %v2992, %v3058
    %v3123 = vadd.f32 %v2993, %v3059
    %v3124 = vadd.f32 %v2994, %v3060
    %v3125 = vadd.f32 %v2995, %v3061
    %v3126 = vadd.f32 %v2996, %v3062
    %v3127 = vadd.f32 %v2997, %v3063
    %v3128 = vadd.f32 %v2998, %v3064
    %v3129 = vadd.f32 %v2999, %v3065
    %v3130 = vadd.f32 %v3000, %v3066
    %v3131 = vadd.f32 %v3001, %v3067
    %v3132 = vadd.f32 %v3002, %v3068
    %v3133 = vadd.f32 %v3003, %v3069
    %v3134 = vadd.f32 %v3004, %v3070
    %v3135 = vadd.f32 %v3005, %v3071
    %v3136 = vadd.f32 %v3006, %v3072
    %v3137 = vadd.f32 %v3007, %v3073
    %v3138 = vadd.f32 %v3008, %v3074
    %v3139 = vadd.f32 %v3009, %v3075
    %v3140 = vadd.f32 %v3010, %v3076
    %v3141 = vadd.f32 %v3011, %v3077
    %v3142 = vadd.f32 %v3012, %v3078
    %v3143 = vadd.f32 %v3013, %v3079
    %v3144 = vadd.f32 %v3014, %v3080
    %v3145 = vadd.f32 %v3015, %v3081
    %v3146 = vadd.f32 %v3016, %v3082
    %v3147 = vadd.f32 %v3017, %v3083
    %v3148 = vadd.f32 %v3018, %v3084
    %v3149 = vadd.f32 %v3019, %v3085
    %v3150 = vadd.f32 %v3020, %v3086
    %v3151 = vadd.f32 %v3021, %v3087
    %v3152 = vadd.f32 %v3022, %v3088
    %v3153 = vadd.f32 %v3023, %v3089
    %v3154 = vadd.f32 %v3024, %v3090
    %v3155 = vadd.f32 %v3025, %v3091
    %v3156 = vadd.f32 %v3026, %v3092
    %v3157 = vadd.f32 %v3027, %v3093
    %v3158 = vadd.f32 %v3028, %v3094
    %v3159 = vadd.f32 %v3029, %v3095
    %v3160 = vadd.f32 %v3030, %v3096
    %v3161 = vadd.f32 %v3031, %v3097
    %v3162 = vadd.f32 %v3032, %v3098
    %v3163 = vadd.f32 %v3033, %v3099
    %v3164 = vadd.f32 %v3034, %v3100
    %v3165 = vadd.f32 %v3035, %v3101
    %v3166 = vadd.f32 %v3036, %v3102
    %v3167 = vadd.f32 %v3037, %v3103
    %v3168 = vadd.f32 %v3038, %v3104
    %v3169 = vadd.f32 %v3039, %v3105
    %v3170 = vadd.f32 %v3040, %v3106
    %v3171 = vadd.f32 %v3041, %v3107
    %v3172 = vadd.f32 %v3042, %v3108
    %v3173 = vadd.f32 %v3043, %v3109
    %v3174 = vadd.f32 %v3044, %v3110
    %v3175 = vadd.f32 %v3045, %v3111
    %v3176 = vadd.f32 %v3046, %v3112
    %v3177 = vadd.f32 %v3047, %v3113
    %v3178 = vadd.f32 %v3048, %v3114
    %v3179 = vadd.f32 %v3049, %v3115
    %3180 = vst [vmem:[%s6] sm:$0xff] %v3116
    %3181 = vst [vmem:[%s6 + $0x8] sm:$0xff] %v3117
    %3182 = vst [vmem:[%s6 + $0x10] sm:$0xff] %v3118
    %3183 = vst [vmem:[%s6 + $0x18] sm:$0xff] %v3119
    %3184 = vst [vmem:[%s6 + $0x20] sm:$0xff] %v3120
    %3185 = vst [vmem:[%s6 + $0x28] sm:$0xff] %v3121
    %3186 = vst [vmem:[%s6 + $0x30] sm:$0xff] %v3122
    %3187 = vst [vmem:[%s6 + $0x38] sm:$0xff] %v3123
    %3188 = vst [vmem:[%s6 + $0x40] sm:$0xff] %v3124
    %3189 = vst [vmem:[%s6 + $0x48] sm:$0xff] %v3125
    %3190 = vst [vmem:[%s6 + $0x50] sm:$0xff] %v3126
    %3191 = vst [vmem:[%s6 + $0x58] sm:$0xff] %v3127
    %3192 = vst [vmem:[%s6 + $0x60] sm:$0xff] %v3128
    %3193 = vst [vmem:[%s6 + $0x68] sm:$0xff] %v3129
    %3194 = vst [vmem:[%s6 + $0x70] sm:$0xff] %v3130
    %3195 = vst [vmem:[%s6 + $0x78] sm:$0xff] %v3131
    %3196 = vst [vmem:[%s6 + $0x80] sm:$0xff] %v3132
    %3197 = vst [vmem:[%s6 + $0x88] sm:$0xff] %v3133
    %3198 = vst [vmem:[%s6 + $0x90] sm:$0xff] %v3134
    %3199 = vst [vmem:[%s6 + $0x98] sm:$0xff] %v3135
    %3200 = vst [vmem:[%s6 + $0xa0] sm:$0xff] %v3136
    %3201 = vst [vmem:[%s6 + $0xa8] sm:$0xff] %v3137
    %3202 = vst [vmem:[%s6 + $0xb0] sm:$0xff] %v3138
    %3203 = vst [vmem:[%s6 + $0xb8] sm:$0xff] %v3139
    %3204 = vst [vmem:[%s6 + $0xc0] sm:$0xff] %v3140
    %3205 = vst [vmem:[%s6 + $0xc8] sm:$0xff] %v3141
    %3206 = vst [vmem:[%s6 + $0xd0] sm:$0xff] %v3142
    %3207 = vst [vmem:[%s6 + $0xd8] sm:$0xff] %v3143
    %3208 = vst [vmem:[%s6 + $0xe0] sm:$0xff] %v3144
    %3209 = vst [vmem:[%s6 + $0xe8] sm:$0xff] %v3145
    %3210 = vst [vmem:[%s6 + $0xf0] sm:$0xff] %v3146
    %3211 = vst [vmem:[%s6 + $0xf8] sm:$0xff] %v3147
    %3212 = vst [vmem:[%s6 + $0x100] sm:$0xff] %v3148
    %3213 = vst [vmem:[%s6 + $0x108] sm:$0xff] %v3149
    %3214 = vst [vmem:[%s6 + $0x110] sm:$0xff] %v3150
    %3215 = vst [vmem:[%s6 + $0x118] sm:$0xff] %v3151
    %3216 = vst [vmem:[%s6 + $0x120] sm:$0xff] %v3152
    %3217 = vst [vmem:[%s6 + $0x128] sm:$0xff] %v3153
    %3218 = vst [vmem:[%s6 + $0x130] sm:$0xff] %v3154
    %3219 = vst [vmem:[%s6 + $0x138] sm:$0xff] %v3155
    %3220 = vst [vmem:[%s6 + $0x140] sm:$0xff] %v3156
    %3221 = vst [vmem:[%s6 + $0x148] sm:$0xff] %v3157
    %3222 = vst [vmem:[%s6 + $0x150] sm:$0xff] %v3158
    %3223 = vst [vmem:[%s6 + $0x158] sm:$0xff] %v3159
    %3224 = vst [vmem:[%s6 + $0x160] sm:$0xff] %v3160
    %3225 = vst [vmem:[%s6 + $0x168] sm:$0xff] %v3161
    %3226 = vst [vmem:[%s6 + $0x170] sm:$0xff] %v3162
    %3227 = vst [vmem:[%s6 + $0x178] sm:$0xff] %v3163
    %3228 = vst [vmem:[%s6 + $0x180] sm:$0xff] %v3164
    %3229 = vst [vmem:[%s6 + $0x188] sm:$0xff] %v3165
    %3230 = vst [vmem:[%s6 + $0x190] sm:$0xff] %v3166
    %3231 = vst [vmem:[%s6 + $0x198] sm:$0xff] %v3167
    %3232 = vst [vmem:[%s6 + $0x1a0] sm:$0xff] %v3168
    %3233 = vst [vmem:[%s6 + $0x1a8] sm:$0xff] %v3169
    %3234 = vst [vmem:[%s6 + $0x1b0] sm:$0xff] %v3170
    %3235 = vst [vmem:[%s6 + $0x1b8] sm:$0xff] %v3171
    %3236 = vst [vmem:[%s6 + $0x1c0] sm:$0xff] %v3172
    %3237 = vst [vmem:[%s6 + $0x1c8] sm:$0xff] %v3173
    %3238 = vst [vmem:[%s6 + $0x1d0] sm:$0xff] %v3174
    %3239 = vst [vmem:[%s6 + $0x1d8] sm:$0xff] %v3175
    %3240 = vst [vmem:[%s6 + $0x1e0] sm:$0xff] %v3176
    %3241 = vst [vmem:[%s6 + $0x1e8] sm:$0xff] %v3177
    %3242 = vst [vmem:[%s6 + $0x1f0] sm:$0xff] %v3178
    %3243 = vst [vmem:[%s6 + $0x1f8] sm:$0xff] %v3179
  $region33: #{resblock_forward.1} parent=0 // pred_fallthru
    _
  // Predicated region
  $region34: #{resblock_forward.1} parent=0 // pred_check
    _
  $region35: #{resblock_forward.1} parent=0 // pred_check_branch
    %3245 = sbr.rel (0) target = $region37
  $region36: #{resblock_forward.1} parent=0 // pred_region
    _
  $region37: #{resblock_forward.1} parent=0 // pred_fallthru
    _
  // Predicated region
  $region38: #{resblock_forward.1} parent=0 // pred_check
    _
  $region39: #{resblock_forward.1} parent=0 // pred_check_branch
    %3247 = sbr.rel (0) target = $region41
  $region40: #{resblock_forward.1} parent=0 // pred_region
    _
  $region41: #{resblock_forward.1} parent=0 // pred_fallthru
    _

</llo_original>
